<compile_context>
chip_gen: v7x
topology: tpu7x:2x2x1
jax: 0.10.0
libtpu: 0.0.40
codegen_flags: <defaults>
</compile_context>

<pallas_src>
import functools

import numpy as np
import jax
import jax.numpy as jnp
from jax import lax
from jax.experimental import pallas as pl
from jax.experimental.pallas import tpu as pltpu


# --------------------------- Fused SEBasicBlock kernel -----------------------
def se_block_kernel(x_ref, w1_ref, s1_ref, b1_ref, w2_ref, s2_ref, b2_ref,
                    sew1_ref, sew2_ref, o_ref, xpad_ref, *, D, H, W, C, bb):
    # x_ref  : (bb, D, H, W*C) f32     input / residual (lane-dense)
    # w*_ref : (9, W*C, W*C)  bf16     banded conv weights (kw + w-padding folded)
    # s/b    : (1, W*C)       f32      BN scale/bias tiled over w
    # sew1   : (Ch, W*C) f32  fc1^T, W-replicated, 1/(D*H*W*W) folded in
    # sew2   : (Ch, W*C) f32  fc2, W-replicated
    # o_ref  : (bb, D, H, W*C) f32
    # xpad_ref: VMEM (bb, D+3, H+3, W*C) bf16 scratch; data interior at
    #           [2:2+D, 2:2+H] (offset 2 keeps bf16 packed stores pair-aligned),
    #           everything else stays zero (d/h zero padding).
    DH, WC = D * H, W * C
    M = bb * DH
    PAD = 2  # interior offset (pack-aligned for bf16)

    def conv_bn(w_ref, s_ref, b_ref, relu):
        acc = jnp.zeros((M, WC), jnp.float32)
        for kh in range(3):
            # One sublane-shifted staging load per kh (3 per conv, bf16).
            stage = xpad_ref[:, :, PAD - 1 + kh:PAD - 1 + kh + H, :]  # (bb,D+3,H,WC)
            for kd in range(3):
                # Free outer-dim slice + layout-free flatten (H == sublane tile).
                slab = stage[:, PAD - 1 + kd:PAD - 1 + kd + D].reshape(M, WC)
                acc = acc + jnp.dot(slab, w_ref[kd * 3 + kh],
                                    preferred_element_type=jnp.float32)
        out = acc * s_ref[...] + b_ref[...]          # f32 epilogue
        if relu:
            out = jnp.maximum(out, 0.0)
        return out

    # ---- conv1 + bn1 + relu ----
    xpad_ref[...] = jnp.zeros((bb, D + 3, H + 3, WC), jnp.bfloat16)
    xpad_ref[:, PAD:PAD + D, PAD:PAD + H, :] = x_ref[...].astype(jnp.bfloat16)
    out1 = conv_bn(w1_ref, s1_ref, b1_ref, relu=True)

    # ---- conv2 + bn2 (halos of the scratch are still zero) ----
    xpad_ref[:, PAD:PAD + D, PAD:PAD + H, :] = (
        out1.reshape(bb, D, H, WC).astype(jnp.bfloat16))
    out2 = conv_bn(w2_ref, s2_ref, b2_ref, relu=False)
    out2_3d = out2.reshape(bb, DH, WC)                         # (bb, D*H, W*C)

    # ---- SE: global avg pool -> FC -> ReLU -> FC -> sigmoid ----
    rs = jnp.sum(out2_3d, axis=1)                              # (bb, W*C)
    sh = (W // 2) * C
    while sh >= C:                                             # lane roll-tree
        rs = rs + pltpu.roll(rs, shift=sh, axis=1)
        sh //= 2
    # now rs[b, j] = sum over (d,h,w) of channel (j % C)
    Ch = sew1_ref.shape[0]
    hs = [jnp.sum(rs * sew1_ref[r:r + 1, :], axis=1, keepdims=True)
          for r in range(Ch)]                                  # fc1 (norm folded)
    h = jnp.concatenate(hs, axis=1) if Ch > 1 else hs[0]       # (bb, Ch)
    h = jnp.maximum(h, 0.0)
    y_acc = jnp.zeros((bb, WC), jnp.float32)
    for r in range(Ch):                                        # fc2, W-replicated
        y_acc = y_acc + h[:, r:r + 1] * sew2_ref[r:r + 1, :]
    y_dense = jax.nn.sigmoid(y_acc)                            # (bb, W*C)

    # ---- channel scale + residual add + relu (lane-dense, f32) ----
    res = x_ref[...].reshape(bb, DH, WC)
    out = jnp.maximum(out2_3d * y_dense.reshape(bb, 1, WC) + res, 0.0)
    o_ref[...] = out.reshape(bb, D, H, WC).astype(o_ref.dtype)


def se_basic_block_forward(x, params, block_batch=None):
    """x: (B, D, H, W, C) f32 (NDHWC). Returns same shape."""
    B, D, H, W, C = x.shape
    WC = W * C
    Ch = params["se_w1t"].shape[0]
    assert W >= 1 and (W & (W - 1)) == 0, "W must be a power of two"
    if block_batch is None:
        block_batch = 4 if B % 4 == 0 else (2 if B % 2 == 0 else 1)
    bb = block_batch
    assert B % bb == 0

    x4 = x.reshape(B, D, H, WC)                    # lane-dense view (same bytes)
    kernel = functools.partial(se_block_kernel, D=D, H=H, W=W, C=C, bb=bb)

    flops = 2 * B * 2 * 9 * (D * H) * WC * WC      # 2 convs x 9 taps x 2*M*K*N
    bytes_accessed = (2 * x4.size * 4              # input + output (f32)
                      + 2 * 9 * WC * WC * 2        # two banded conv weights (bf16)
                      + 4 * WC * 4 + 2 * Ch * WC * 4)

    out = pl.pallas_call(
        kernel,
        out_shape=jax.ShapeDtypeStruct((B, D, H, WC), jnp.float32),
        grid=(B // bb,),
        in_specs=[
            pl.BlockSpec((bb, D, H, WC), lambda i: (i, 0, 0, 0)),
            pl.BlockSpec((9, WC, WC), lambda i: (0, 0, 0)),
            pl.BlockSpec((1, WC), lambda i: (0, 0)),
            pl.BlockSpec((1, WC), lambda i: (0, 0)),
            pl.BlockSpec((9, WC, WC), lambda i: (0, 0, 0)),
            pl.BlockSpec((1, WC), lambda i: (0, 0)),
            pl.BlockSpec((1, WC), lambda i: (0, 0)),
            pl.BlockSpec((Ch, WC), lambda i: (0, 0)),
            pl.BlockSpec((Ch, WC), lambda i: (0, 0)),
        ],
        out_specs=pl.BlockSpec((bb, D, H, WC), lambda i: (i, 0, 0, 0)),
        scratch_shapes=[pltpu.VMEM((bb, D + 3, H + 3, WC), jnp.bfloat16)],
        compiler_params=pltpu.CompilerParams(
            dimension_semantics=("parallel",)),
        cost_estimate=pl.CostEstimate(flops=flops, transcendentals=B * C,
                                      bytes_accessed=bytes_accessed),
    )(x4, params["w1b"], params["s1t"], params["b1t"],
      params["w2b"], params["s2t"], params["b2t"],
      params["se_w1t"], params["se_w2t"])
    return out.reshape(B, D, H, W, C)


# --------------------------- Parameter preparation ---------------------------
def _banded_conv_weight(w_dhwio, W, dtype=jnp.bfloat16):
    """(3,3,3,Cin,Cout) DHWIO -> (9, W*Cin, W*Cout) banded matrices (kw folded).

    For tap (kd,kh): A[v*Cin+ci, wi*Cout+co] = W[kd,kh,kw,ci,co] with
    v = wi + kw - 1.  Taps that would read the zero w-padding (v<0 or v>=W)
    are dropped, so the slab needs NO w halo column and K == N == W*C
    (exactly one lane tile)."""
    w = np.asarray(w_dhwio, np.float32)
    _, _, _, Cin, Cout = w.shape
    A = np.zeros((9, W * Cin, W * Cout), np.float32)
    for kd in range(3):
        for kh in range(3):
            k = kd * 3 + kh
            for wi in range(W):
                for kw in range(3):
                    v = wi + kw - 1
                    if 0 <= v < W:
                        A[k, v * Cin:(v + 1) * Cin,
                          wi * Cout:(wi + 1) * Cout] = w[kd, kh, kw]
    return jnp.asarray(A, dtype)


def prepare_params(w1, s1, b1, w2, s2, b2, se_w1, se_w2, *, D, H, W):
    assert W >= 1 and (W & (W - 1)) == 0, "W must be a power of two"
    tile = lambda v: jnp.tile(v, W)[None, :].astype(jnp.float32)   # (C,)->(1,W*C)
    # SE fc1: transposed, W-replicated, 1/(D*H*W) mean and the extra W from
    # the lane-replicated pooled vector folded in.
    w1t = np.tile(np.asarray(se_w1, np.float32).T, (1, W)) / float(D * H * W * W)
    w2t = np.tile(np.asarray(se_w2, np.float32), (1, W))           # (Ch, W*C)
    return {
        "w1b": _banded_conv_weight(w1, W),
        "w2b": _banded_conv_weight(w2, W),
        "s1t": tile(s1), "b1t": tile(b1),
        "s2t": tile(s2), "b2t": tile(b2),
        "se_w1t": jnp.asarray(w1t), "se_w2t": jnp.asarray(w2t),
    }


# ------------------------------ Reference (plain JAX) ------------------------
def ref_forward(x, p):
    """Reference forward.  Conv inputs/weights are quantized to bf16 to match
    the MXU-native compute dtype used by the kernel (f32 accumulation); the
    BN affine, SE branch and residual stay f32, exactly like the kernel."""
    dn = ("NDHWC", "DHWIO", "NDHWC")
    q = lambda a: a.astype(jnp.bfloat16)
    out = lax.conv_general_dilated(q(x), q(p["w1"]), (1, 1, 1), "SAME",
                                   dimension_numbers=dn,
                                   preferred_element_type=jnp.float32)
    out = jnp.maximum(out * p["s1"] + p["b1"], 0.0)
    out = lax.conv_general_dilated(q(out), q(p["w2"]), (1, 1, 1), "SAME",
                                   dimension_numbers=dn,
                                   preferred_element_type=jnp.float32)
    out = out * p["s2"] + p["b2"]
    pool = jnp.mean(out, axis=(1, 2, 3))                       # (B, C)
    h = jnp.maximum(pool @ p["se_w1"], 0.0)
    y = jax.nn.sigmoid(h @ p["se_w2"])                         # (B, C)
    out = out * y[:, None, None, None, :]
    return jnp.maximum(out + x, 0.0)


# ----------------------------------- Main ------------------------------------
if __name__ == "__main__":
    B, C, D, H, W = 2, 16, 8, 8, 8        # inplanes = planes = 16, stride = 1
    reduction = 16
    Ch = max(C // reduction, 1)           # = 1
    eps = 1e-5

    key = jax.random.PRNGKey(0)
    ks = jax.random.split(key, 13)

    x = jax.random.normal(ks[0], (B, D, H, W, C), jnp.float32)

    def make_bn(kg, kb, km, kv):
        gamma = 0.5 + jax.random.uniform(kg, (C,), jnp.float32)
        beta = 0.1 * jax.random.normal(kb, (C,), jnp.float32)
        rmean = 0.1 * jax.random.normal(km, (C,), jnp.float32)
        rvar = 0.5 + jax.random.uniform(kv, (C,), jnp.float32)
        scale = gamma / jnp.sqrt(rvar + eps)      # BN folded (eval-mode stats)
        bias = beta - rmean * scale
        return scale, bias

    s1, b1 = make_bn(ks[1], ks[2], ks[3], ks[4])
    s2, b2 = make_bn(ks[5], ks[6], ks[7], ks[8])

    w1 = 0.1 * jax.random.normal(ks[9], (3, 3, 3, C, C), jnp.float32)   # DHWIO
    w2 = 0.1 * jax.random.normal(ks[10], (3, 3, 3, C, C), jnp.float32)
    se_w1 = 0.2 * jax.random.normal(ks[11], (C, Ch), jnp.float32)
    se_w2 = 0.2 * jax.random.normal(ks[12], (Ch, C), jnp.float32)

    params = prepare_params(w1, s1, b1, w2, s2, b2, se_w1, se_w2, D=D, H=H, W=W)
    raw = {"w1": w1, "w2": w2, "s1": s1, "b1": b1, "s2": s2, "b2": b2,
           "se_w1": se_w1, "se_w2": se_w2}

    out = jax.block_until_ready(se_basic_block_forward(x, params))
    ref = jax.block_until_ready(ref_forward(x, raw))

    # bf16 MXU compute vs. an independently lowered bf16 reference: tolerance
    # covers accumulation-order noise plus the one-ulp double-rounding of the
    # inter-conv activation; a layout/band bug would be orders of magnitude off.
    err = float(jnp.max(jnp.abs(out - ref)))
    if not jnp.allclose(out, ref, atol=1e-2, rtol=1e-2):
        raise AssertionError(f"mismatch: max abs err {err}")
    print("KERNEL_OK")
</pallas_src>

<mosaic_0001>
module attributes {stable_mosaic.version = 11 : i64} {
  func.func @se_block_kernel(%arg0: i32, %arg1: memref<2x8x8x128xf32, #tpu.memory_space<vmem>>, %arg2: memref<9x128x128xbf16, #tpu.memory_space<vmem>>, %arg3: memref<1x128xf32, #tpu.memory_space<vmem>>, %arg4: memref<1x128xf32, #tpu.memory_space<vmem>>, %arg5: memref<9x128x128xbf16, #tpu.memory_space<vmem>>, %arg6: memref<1x128xf32, #tpu.memory_space<vmem>>, %arg7: memref<1x128xf32, #tpu.memory_space<vmem>>, %arg8: memref<1x128xf32, #tpu.memory_space<vmem>>, %arg9: memref<1x128xf32, #tpu.memory_space<vmem>>, %arg10: memref<2x8x8x128xf32, #tpu.memory_space<vmem>>, %arg11: memref<2x11x11x128xbf16, #tpu.memory_space<vmem>>) attributes {dimension_semantics = [#tpu.dimension_semantics<parallel>], iteration_bounds = array<i64: 1>, scalar_prefetch = 0 : i64, scratch_operands = 1 : i64, tpu.core_type = #tpu.core_type<tc>, window_params = [{transform_indices = @transform_0, window_bounds = array<i64: 2, 8, 8, 128>}, {pipeline_mode = #tpu.pipeline_mode<synchronous>, transform_indices = @transform_1, window_bounds = array<i64: 9, 128, 128>}, {pipeline_mode = #tpu.pipeline_mode<synchronous>, transform_indices = @transform_2, window_bounds = array<i64: 1, 128>}, {pipeline_mode = #tpu.pipeline_mode<synchronous>, transform_indices = @transform_3, window_bounds = array<i64: 1, 128>}, {pipeline_mode = #tpu.pipeline_mode<synchronous>, transform_indices = @transform_4, window_bounds = array<i64: 9, 128, 128>}, {pipeline_mode = #tpu.pipeline_mode<synchronous>, transform_indices = @transform_5, window_bounds = array<i64: 1, 128>}, {pipeline_mode = #tpu.pipeline_mode<synchronous>, transform_indices = @transform_6, window_bounds = array<i64: 1, 128>}, {pipeline_mode = #tpu.pipeline_mode<synchronous>, transform_indices = @transform_7, window_bounds = array<i64: 1, 128>}, {pipeline_mode = #tpu.pipeline_mode<synchronous>, transform_indices = @transform_8, window_bounds = array<i64: 1, 128>}, {transform_indices = @transform_9, window_bounds = array<i64: 2, 8, 8, 128>}]} {
    %cst = arith.constant 0.000000e+00 : bf16
    %0 = vector.broadcast %cst : bf16 to vector<2x11x11x128xbf16>
    %c0 = arith.constant 0 : index
    %c0_0 = arith.constant 0 : index
    %c0_1 = arith.constant 0 : index
    %c0_2 = arith.constant 0 : index
    %1 = vector.load %arg11[%c0, %c0_0, %c0_1, %c0_2] : memref<2x11x11x128xbf16, #tpu.memory_space<vmem>>, vector<2x11x11x128xbf16>
    tpu.vector_store %arg11[%c0, %c0_0, %c0_1, %c0_2], %0 {strides = array<i32>} : memref<2x11x11x128xbf16, #tpu.memory_space<vmem>>, vector<2x11x11x128xbf16>,
    %c0_3 = arith.constant 0 : index
    %c0_4 = arith.constant 0 : index
    %c0_5 = arith.constant 0 : index
    %c0_6 = arith.constant 0 : index
    %2 = vector.load %arg1[%c0_3, %c0_4, %c0_5, %c0_6] : memref<2x8x8x128xf32, #tpu.memory_space<vmem>>, vector<2x8x8x128xf32>
    %3 = arith.truncf %2 : vector<2x8x8x128xf32> to vector<2x8x8x128xbf16>
    %c0_7 = arith.constant 0 : index
    %c2 = arith.constant 2 : index
    %c2_8 = arith.constant 2 : index
    %c0_9 = arith.constant 0 : index
    %4 = vector.load %arg11[%c0_7, %c2, %c2_8, %c0_9] : memref<2x11x11x128xbf16, #tpu.memory_space<vmem>>, vector<2x8x8x128xbf16>
    tpu.vector_store %arg11[%c0_7, %c2, %c2_8, %c0_9], %3 {strides = array<i32>} : memref<2x11x11x128xbf16, #tpu.memory_space<vmem>>, vector<2x8x8x128xbf16>,
    %cst_10 = arith.constant 0.000000e+00 : f32
    %5 = vector.broadcast %cst_10 : f32 to vector<128x128xf32>
    %c0_11 = arith.constant 0 : index
    %c0_12 = arith.constant 0 : index
    %c1 = arith.constant 1 : index
    %c0_13 = arith.constant 0 : index
    %6 = vector.load %arg11[%c0_11, %c0_12, %c1, %c0_13] : memref<2x11x11x128xbf16, #tpu.memory_space<vmem>>, vector<2x11x8x128xbf16>
    %7 = vector.extract_strided_slice %6 {offsets = [0, 1, 0, 0], sizes = [2, 8, 8, 128], strides = [1, 1, 1, 1]} : vector<2x11x8x128xbf16> to vector<2x8x8x128xbf16>
    %8 = vector.shape_cast %7 : vector<2x8x8x128xbf16> to vector<128x128xbf16>
    %c0_14 = arith.constant 0 : index
    %c0_15 = arith.constant 0 : index
    %c0_16 = arith.constant 0 : index
    %9 = vector.load %arg2[%c0_14, %c0_15, %c0_16] : memref<9x128x128xbf16, #tpu.memory_space<vmem>>, vector<1x128x128xbf16>
    %10 = vector.shape_cast %9 : vector<1x128x128xbf16> to vector<128x128xbf16>
    %cst_17 = arith.constant dense<0.000000e+00> : vector<128x128xf32>
    %11 = tpu.matmul %8, %10, %cst_17 {dimension_numbers = #tpu.dot_dimension_numbers<[1], [0], [0], [1], [0, 0, 1, 1], [], []>} : vector<128x128xbf16>, vector<128x128xbf16>, vector<128x128xf32> -> vector<128x128xf32>
    %12 = arith.addf %5, %11 : vector<128x128xf32>
    %13 = vector.extract_strided_slice %6 {offsets = [0, 2, 0, 0], sizes = [2, 8, 8, 128], strides = [1, 1, 1, 1]} : vector<2x11x8x128xbf16> to vector<2x8x8x128xbf16>
    %14 = vector.shape_cast %13 : vector<2x8x8x128xbf16> to vector<128x128xbf16>
    %c3 = arith.constant 3 : index
    %c0_18 = arith.constant 0 : index
    %c0_19 = arith.constant 0 : index
    %15 = vector.load %arg2[%c3, %c0_18, %c0_19] : memref<9x128x128xbf16, #tpu.memory_space<vmem>>, vector<1x128x128xbf16>
    %16 = vector.shape_cast %15 : vector<1x128x128xbf16> to vector<128x128xbf16>
    %cst_20 = arith.constant dense<0.000000e+00> : vector<128x128xf32>
    %17 = tpu.matmul %14, %16, %cst_20 {dimension_numbers = #tpu.dot_dimension_numbers<[1], [0], [0], [1], [0, 0, 1, 1], [], []>} : vector<128x128xbf16>, vector<128x128xbf16>, vector<128x128xf32> -> vector<128x128xf32>
    %18 = arith.addf %12, %17 : vector<128x128xf32>
    %19 = vector.extract_strided_slice %6 {offsets = [0, 3, 0, 0], sizes = [2, 8, 8, 128], strides = [1, 1, 1, 1]} : vector<2x11x8x128xbf16> to vector<2x8x8x128xbf16>
    %20 = vector.shape_cast %19 : vector<2x8x8x128xbf16> to vector<128x128xbf16>
    %c6 = arith.constant 6 : index
    %c0_21 = arith.constant 0 : index
    %c0_22 = arith.constant 0 : index
    %21 = vector.load %arg2[%c6, %c0_21, %c0_22] : memref<9x128x128xbf16, #tpu.memory_space<vmem>>, vector<1x128x128xbf16>
    %22 = vector.shape_cast %21 : vector<1x128x128xbf16> to vector<128x128xbf16>
    %cst_23 = arith.constant dense<0.000000e+00> : vector<128x128xf32>
    %23 = tpu.matmul %20, %22, %cst_23 {dimension_numbers = #tpu.dot_dimension_numbers<[1], [0], [0], [1], [0, 0, 1, 1], [], []>} : vector<128x128xbf16>, vector<128x128xbf16>, vector<128x128xf32> -> vector<128x128xf32>
    %24 = arith.addf %18, %23 : vector<128x128xf32>
    %c0_24 = arith.constant 0 : index
    %c0_25 = arith.constant 0 : index
    %c2_26 = arith.constant 2 : index
    %c0_27 = arith.constant 0 : index
    %25 = vector.load %arg11[%c0_24, %c0_25, %c2_26, %c0_27] : memref<2x11x11x128xbf16, #tpu.memory_space<vmem>>, vector<2x11x8x128xbf16>
    %26 = vector.extract_strided_slice %25 {offsets = [0, 1, 0, 0], sizes = [2, 8, 8, 128], strides = [1, 1, 1, 1]} : vector<2x11x8x128xbf16> to vector<2x8x8x128xbf16>
    %27 = vector.shape_cast %26 : vector<2x8x8x128xbf16> to vector<128x128xbf16>
    %c1_28 = arith.constant 1 : index
    %c0_29 = arith.constant 0 : index
    %c0_30 = arith.constant 0 : index
    %28 = vector.load %arg2[%c1_28, %c0_29, %c0_30] : memref<9x128x128xbf16, #tpu.memory_space<vmem>>, vector<1x128x128xbf16>
    %29 = vector.shape_cast %28 : vector<1x128x128xbf16> to vector<128x128xbf16>
    %cst_31 = arith.constant dense<0.000000e+00> : vector<128x128xf32>
    %30 = tpu.matmul %27, %29, %cst_31 {dimension_numbers = #tpu.dot_dimension_numbers<[1], [0], [0], [1], [0, 0, 1, 1], [], []>} : vector<128x128xbf16>, vector<128x128xbf16>, vector<128x128xf32> -> vector<128x128xf32>
    %31 = arith.addf %24, %30 : vector<128x128xf32>
    %32 = vector.extract_strided_slice %25 {offsets = [0, 2, 0, 0], sizes = [2, 8, 8, 128], strides = [1, 1, 1, 1]} : vector<2x11x8x128xbf16> to vector<2x8x8x128xbf16>
    %33 = vector.shape_cast %32 : vector<2x8x8x128xbf16> to vector<128x128xbf16>
    %c4 = arith.constant 4 : index
    %c0_32 = arith.constant 0 : index
    %c0_33 = arith.constant 0 : index
    %34 = vector.load %arg2[%c4, %c0_32, %c0_33] : memref<9x128x128xbf16, #tpu.memory_space<vmem>>, vector<1x128x128xbf16>
    %35 = vector.shape_cast %34 : vector<1x128x128xbf16> to vector<128x128xbf16>
    %cst_34 = arith.constant dense<0.000000e+00> : vector<128x128xf32>
    %36 = tpu.matmul %33, %35, %cst_34 {dimension_numbers = #tpu.dot_dimension_numbers<[1], [0], [0], [1], [0, 0, 1, 1], [], []>} : vector<128x128xbf16>, vector<128x128xbf16>, vector<128x128xf32> -> vector<128x128xf32>
    %37 = arith.addf %31, %36 : vector<128x128xf32>
    %38 = vector.extract_strided_slice %25 {offsets = [0, 3, 0, 0], sizes = [2, 8, 8, 128], strides = [1, 1, 1, 1]} : vector<2x11x8x128xbf16> to vector<2x8x8x128xbf16>
    %39 = vector.shape_cast %38 : vector<2x8x8x128xbf16> to vector<128x128xbf16>
    %c7 = arith.constant 7 : index
    %c0_35 = arith.constant 0 : index
    %c0_36 = arith.constant 0 : index
    %40 = vector.load %arg2[%c7, %c0_35, %c0_36] : memref<9x128x128xbf16, #tpu.memory_space<vmem>>, vector<1x128x128xbf16>
    %41 = vector.shape_cast %40 : vector<1x128x128xbf16> to vector<128x128xbf16>
    %cst_37 = arith.constant dense<0.000000e+00> : vector<128x128xf32>
    %42 = tpu.matmul %39, %41, %cst_37 {dimension_numbers = #tpu.dot_dimension_numbers<[1], [0], [0], [1], [0, 0, 1, 1], [], []>} : vector<128x128xbf16>, vector<128x128xbf16>, vector<128x128xf32> -> vector<128x128xf32>
    %43 = arith.addf %37, %42 : vector<128x128xf32>
    %c0_38 = arith.constant 0 : index
    %c0_39 = arith.constant 0 : index
    %c3_40 = arith.constant 3 : index
    %c0_41 = arith.constant 0 : index
    %44 = vector.load %arg11[%c0_38, %c0_39, %c3_40, %c0_41] : memref<2x11x11x128xbf16, #tpu.memory_space<vmem>>, vector<2x11x8x128xbf16>
    %45 = vector.extract_strided_slice %44 {offsets = [0, 1, 0, 0], sizes = [2, 8, 8, 128], strides = [1, 1, 1, 1]} : vector<2x11x8x128xbf16> to vector<2x8x8x128xbf16>
    %46 = vector.shape_cast %45 : vector<2x8x8x128xbf16> to vector<128x128xbf16>
    %c2_42 = arith.constant 2 : index
    %c0_43 = arith.constant 0 : index
    %c0_44 = arith.constant 0 : index
    %47 = vector.load %arg2[%c2_42, %c0_43, %c0_44] : memref<9x128x128xbf16, #tpu.memory_space<vmem>>, vector<1x128x128xbf16>
    %48 = vector.shape_cast %47 : vector<1x128x128xbf16> to vector<128x128xbf16>
    %cst_45 = arith.constant dense<0.000000e+00> : vector<128x128xf32>
    %49 = tpu.matmul %46, %48, %cst_45 {dimension_numbers = #tpu.dot_dimension_numbers<[1], [0], [0], [1], [0, 0, 1, 1], [], []>} : vector<128x128xbf16>, vector<128x128xbf16>, vector<128x128xf32> -> vector<128x128xf32>
    %50 = arith.addf %43, %49 : vector<128x128xf32>
    %51 = vector.extract_strided_slice %44 {offsets = [0, 2, 0, 0], sizes = [2, 8, 8, 128], strides = [1, 1, 1, 1]} : vector<2x11x8x128xbf16> to vector<2x8x8x128xbf16>
    %52 = vector.shape_cast %51 : vector<2x8x8x128xbf16> to vector<128x128xbf16>
    %c5 = arith.constant 5 : index
    %c0_46 = arith.constant 0 : index
    %c0_47 = arith.constant 0 : index
    %53 = vector.load %arg2[%c5, %c0_46, %c0_47] : memref<9x128x128xbf16, #tpu.memory_space<vmem>>, vector<1x128x128xbf16>
    %54 = vector.shape_cast %53 : vector<1x128x128xbf16> to vector<128x128xbf16>
    %cst_48 = arith.constant dense<0.000000e+00> : vector<128x128xf32>
    %55 = tpu.matmul %52, %54, %cst_48 {dimension_numbers = #tpu.dot_dimension_numbers<[1], [0], [0], [1], [0, 0, 1, 1], [], []>} : vector<128x128xbf16>, vector<128x128xbf16>, vector<128x128xf32> -> vector<128x128xf32>
    %56 = arith.addf %50, %55 : vector<128x128xf32>
    %57 = vector.extract_strided_slice %44 {offsets = [0, 3, 0, 0], sizes = [2, 8, 8, 128], strides = [1, 1, 1, 1]} : vector<2x11x8x128xbf16> to vector<2x8x8x128xbf16>
    %58 = vector.shape_cast %57 : vector<2x8x8x128xbf16> to vector<128x128xbf16>
    %c8 = arith.constant 8 : index
    %c0_49 = arith.constant 0 : index
    %c0_50 = arith.constant 0 : index
    %59 = vector.load %arg2[%c8, %c0_49, %c0_50] : memref<9x128x128xbf16, #tpu.memory_space<vmem>>, vector<1x128x128xbf16>
    %60 = vector.shape_cast %59 : vector<1x128x128xbf16> to vector<128x128xbf16>
    %cst_51 = arith.constant dense<0.000000e+00> : vector<128x128xf32>
    %61 = tpu.matmul %58, %60, %cst_51 {dimension_numbers = #tpu.dot_dimension_numbers<[1], [0], [0], [1], [0, 0, 1, 1], [], []>} : vector<128x128xbf16>, vector<128x128xbf16>, vector<128x128xf32> -> vector<128x128xf32>
    %62 = arith.addf %56, %61 : vector<128x128xf32>
    %c0_52 = arith.constant 0 : index
    %c0_53 = arith.constant 0 : index
    %63 = vector.load %arg3[%c0_52, %c0_53] : memref<1x128xf32, #tpu.memory_space<vmem>>, vector<1x128xf32>
    %64 = vector.broadcast %63 : vector<1x128xf32> to vector<128x128xf32>
    %65 = arith.mulf %62, %64 : vector<128x128xf32>
    %c0_54 = arith.constant 0 : index
    %c0_55 = arith.constant 0 : index
    %66 = vector.load %arg4[%c0_54, %c0_55] : memref<1x128xf32, #tpu.memory_space<vmem>>, vector<1x128xf32>
    %67 = vector.broadcast %66 : vector<1x128xf32> to vector<128x128xf32>
    %68 = arith.addf %65, %67 : vector<128x128xf32>
    %cst_56 = arith.constant 0.000000e+00 : f32
    %69 = vector.broadcast %cst_56 : f32 to vector<128x128xf32>
    %70 = arith.maximumf %68, %69 : vector<128x128xf32>
    %71 = vector.shape_cast %70 : vector<128x128xf32> to vector<2x8x8x128xf32>
    %72 = arith.truncf %71 : vector<2x8x8x128xf32> to vector<2x8x8x128xbf16>
    %c0_57 = arith.constant 0 : index
    %c2_58 = arith.constant 2 : index
    %c2_59 = arith.constant 2 : index
    %c0_60 = arith.constant 0 : index
    %73 = vector.load %arg11[%c0_57, %c2_58, %c2_59, %c0_60] : memref<2x11x11x128xbf16, #tpu.memory_space<vmem>>, vector<2x8x8x128xbf16>
    tpu.vector_store %arg11[%c0_57, %c2_58, %c2_59, %c0_60], %72 {strides = array<i32>} : memref<2x11x11x128xbf16, #tpu.memory_space<vmem>>, vector<2x8x8x128xbf16>,
    %cst_61 = arith.constant 0.000000e+00 : f32
    %74 = vector.broadcast %cst_61 : f32 to vector<128x128xf32>
    %c0_62 = arith.constant 0 : index
    %c0_63 = arith.constant 0 : index
    %c1_64 = arith.constant 1 : index
    %c0_65 = arith.constant 0 : index
    %75 = vector.load %arg11[%c0_62, %c0_63, %c1_64, %c0_65] : memref<2x11x11x128xbf16, #tpu.memory_space<vmem>>, vector<2x11x8x128xbf16>
    %76 = vector.extract_strided_slice %75 {offsets = [0, 1, 0, 0], sizes = [2, 8, 8, 128], strides = [1, 1, 1, 1]} : vector<2x11x8x128xbf16> to vector<2x8x8x128xbf16>
    %77 = vector.shape_cast %76 : vector<2x8x8x128xbf16> to vector<128x128xbf16>
    %c0_66 = arith.constant 0 : index
    %c0_67 = arith.constant 0 : index
    %c0_68 = arith.constant 0 : index
    %78 = vector.load %arg5[%c0_66, %c0_67, %c0_68] : memref<9x128x128xbf16, #tpu.memory_space<vmem>>, vector<1x128x128xbf16>
    %79 = vector.shape_cast %78 : vector<1x128x128xbf16> to vector<128x128xbf16>
    %cst_69 = arith.constant dense<0.000000e+00> : vector<128x128xf32>
    %80 = tpu.matmul %77, %79, %cst_69 {dimension_numbers = #tpu.dot_dimension_numbers<[1], [0], [0], [1], [0, 0, 1, 1], [], []>} : vector<128x128xbf16>, vector<128x128xbf16>, vector<128x128xf32> -> vector<128x128xf32>
    %81 = arith.addf %74, %80 : vector<128x128xf32>
    %82 = vector.extract_strided_slice %75 {offsets = [0, 2, 0, 0], sizes = [2, 8, 8, 128], strides = [1, 1, 1, 1]} : vector<2x11x8x128xbf16> to vector<2x8x8x128xbf16>
    %83 = vector.shape_cast %82 : vector<2x8x8x128xbf16> to vector<128x128xbf16>
    %c3_70 = arith.constant 3 : index
    %c0_71 = arith.constant 0 : index
    %c0_72 = arith.constant 0 : index
    %84 = vector.load %arg5[%c3_70, %c0_71, %c0_72] : memref<9x128x128xbf16, #tpu.memory_space<vmem>>, vector<1x128x128xbf16>
    %85 = vector.shape_cast %84 : vector<1x128x128xbf16> to vector<128x128xbf16>
    %cst_73 = arith.constant dense<0.000000e+00> : vector<128x128xf32>
    %86 = tpu.matmul %83, %85, %cst_73 {dimension_numbers = #tpu.dot_dimension_numbers<[1], [0], [0], [1], [0, 0, 1, 1], [], []>} : vector<128x128xbf16>, vector<128x128xbf16>, vector<128x128xf32> -> vector<128x128xf32>
    %87 = arith.addf %81, %86 : vector<128x128xf32>
    %88 = vector.extract_strided_slice %75 {offsets = [0, 3, 0, 0], sizes = [2, 8, 8, 128], strides = [1, 1, 1, 1]} : vector<2x11x8x128xbf16> to vector<2x8x8x128xbf16>
    %89 = vector.shape_cast %88 : vector<2x8x8x128xbf16> to vector<128x128xbf16>
    %c6_74 = arith.constant 6 : index
    %c0_75 = arith.constant 0 : index
    %c0_76 = arith.constant 0 : index
    %90 = vector.load %arg5[%c6_74, %c0_75, %c0_76] : memref<9x128x128xbf16, #tpu.memory_space<vmem>>, vector<1x128x128xbf16>
    %91 = vector.shape_cast %90 : vector<1x128x128xbf16> to vector<128x128xbf16>
    %cst_77 = arith.constant dense<0.000000e+00> : vector<128x128xf32>
    %92 = tpu.matmul %89, %91, %cst_77 {dimension_numbers = #tpu.dot_dimension_numbers<[1], [0], [0], [1], [0, 0, 1, 1], [], []>} : vector<128x128xbf16>, vector<128x128xbf16>, vector<128x128xf32> -> vector<128x128xf32>
    %93 = arith.addf %87, %92 : vector<128x128xf32>
    %c0_78 = arith.constant 0 : index
    %c0_79 = arith.constant 0 : index
    %c2_80 = arith.constant 2 : index
    %c0_81 = arith.constant 0 : index
    %94 = vector.load %arg11[%c0_78, %c0_79, %c2_80, %c0_81] : memref<2x11x11x128xbf16, #tpu.memory_space<vmem>>, vector<2x11x8x128xbf16>
    %95 = vector.extract_strided_slice %94 {offsets = [0, 1, 0, 0], sizes = [2, 8, 8, 128], strides = [1, 1, 1, 1]} : vector<2x11x8x128xbf16> to vector<2x8x8x128xbf16>
    %96 = vector.shape_cast %95 : vector<2x8x8x128xbf16> to vector<128x128xbf16>
    %c1_82 = arith.constant 1 : index
    %c0_83 = arith.constant 0 : index
    %c0_84 = arith.constant 0 : index
    %97 = vector.load %arg5[%c1_82, %c0_83, %c0_84] : memref<9x128x128xbf16, #tpu.memory_space<vmem>>, vector<1x128x128xbf16>
    %98 = vector.shape_cast %97 : vector<1x128x128xbf16> to vector<128x128xbf16>
    %cst_85 = arith.constant dense<0.000000e+00> : vector<128x128xf32>
    %99 = tpu.matmul %96, %98, %cst_85 {dimension_numbers = #tpu.dot_dimension_numbers<[1], [0], [0], [1], [0, 0, 1, 1], [], []>} : vector<128x128xbf16>, vector<128x128xbf16>, vector<128x128xf32> -> vector<128x128xf32>
    %100 = arith.addf %93, %99 : vector<128x128xf32>
    %101 = vector.extract_strided_slice %94 {offsets = [0, 2, 0, 0], sizes = [2, 8, 8, 128], strides = [1, 1, 1, 1]} : vector<2x11x8x128xbf16> to vector<2x8x8x128xbf16>
    %102 = vector.shape_cast %101 : vector<2x8x8x128xbf16> to vector<128x128xbf16>
    %c4_86 = arith.constant 4 : index
    %c0_87 = arith.constant 0 : index
    %c0_88 = arith.constant 0 : index
    %103 = vector.load %arg5[%c4_86, %c0_87, %c0_88] : memref<9x128x128xbf16, #tpu.memory_space<vmem>>, vector<1x128x128xbf16>
    %104 = vector.shape_cast %103 : vector<1x128x128xbf16> to vector<128x128xbf16>
    %cst_89 = arith.constant dense<0.000000e+00> : vector<128x128xf32>
    %105 = tpu.matmul %102, %104, %cst_89 {dimension_numbers = #tpu.dot_dimension_numbers<[1], [0], [0], [1], [0, 0, 1, 1], [], []>} : vector<128x128xbf16>, vector<128x128xbf16>, vector<128x128xf32> -> vector<128x128xf32>
    %106 = arith.addf %100, %105 : vector<128x128xf32>
    %107 = vector.extract_strided_slice %94 {offsets = [0, 3, 0, 0], sizes = [2, 8, 8, 128], strides = [1, 1, 1, 1]} : vector<2x11x8x128xbf16> to vector<2x8x8x128xbf16>
    %108 = vector.shape_cast %107 : vector<2x8x8x128xbf16> to vector<128x128xbf16>
    %c7_90 = arith.constant 7 : index
    %c0_91 = arith.constant 0 : index
    %c0_92 = arith.constant 0 : index
    %109 = vector.load %arg5[%c7_90, %c0_91, %c0_92] : memref<9x128x128xbf16, #tpu.memory_space<vmem>>, vector<1x128x128xbf16>
    %110 = vector.shape_cast %109 : vector<1x128x128xbf16> to vector<128x128xbf16>
    %cst_93 = arith.constant dense<0.000000e+00> : vector<128x128xf32>
    %111 = tpu.matmul %108, %110, %cst_93 {dimension_numbers = #tpu.dot_dimension_numbers<[1], [0], [0], [1], [0, 0, 1, 1], [], []>} : vector<128x128xbf16>, vector<128x128xbf16>, vector<128x128xf32> -> vector<128x128xf32>
    %112 = arith.addf %106, %111 : vector<128x128xf32>
    %c0_94 = arith.constant 0 : index
    %c0_95 = arith.constant 0 : index
    %c3_96 = arith.constant 3 : index
    %c0_97 = arith.constant 0 : index
    %113 = vector.load %arg11[%c0_94, %c0_95, %c3_96, %c0_97] : memref<2x11x11x128xbf16, #tpu.memory_space<vmem>>, vector<2x11x8x128xbf16>
    %114 = vector.extract_strided_slice %113 {offsets = [0, 1, 0, 0], sizes = [2, 8, 8, 128], strides = [1, 1, 1, 1]} : vector<2x11x8x128xbf16> to vector<2x8x8x128xbf16>
    %115 = vector.shape_cast %114 : vector<2x8x8x128xbf16> to vector<128x128xbf16>
    %c2_98 = arith.constant 2 : index
    %c0_99 = arith.constant 0 : index
    %c0_100 = arith.constant 0 : index
    %116 = vector.load %arg5[%c2_98, %c0_99, %c0_100] : memref<9x128x128xbf16, #tpu.memory_space<vmem>>, vector<1x128x128xbf16>
    %117 = vector.shape_cast %116 : vector<1x128x128xbf16> to vector<128x128xbf16>
    %cst_101 = arith.constant dense<0.000000e+00> : vector<128x128xf32>
    %118 = tpu.matmul %115, %117, %cst_101 {dimension_numbers = #tpu.dot_dimension_numbers<[1], [0], [0], [1], [0, 0, 1, 1], [], []>} : vector<128x128xbf16>, vector<128x128xbf16>, vector<128x128xf32> -> vector<128x128xf32>
    %119 = arith.addf %112, %118 : vector<128x128xf32>
    %120 = vector.extract_strided_slice %113 {offsets = [0, 2, 0, 0], sizes = [2, 8, 8, 128], strides = [1, 1, 1, 1]} : vector<2x11x8x128xbf16> to vector<2x8x8x128xbf16>
    %121 = vector.shape_cast %120 : vector<2x8x8x128xbf16> to vector<128x128xbf16>
    %c5_102 = arith.constant 5 : index
    %c0_103 = arith.constant 0 : index
    %c0_104 = arith.constant 0 : index
    %122 = vector.load %arg5[%c5_102, %c0_103, %c0_104] : memref<9x128x128xbf16, #tpu.memory_space<vmem>>, vector<1x128x128xbf16>
    %123 = vector.shape_cast %122 : vector<1x128x128xbf16> to vector<128x128xbf16>
    %cst_105 = arith.constant dense<0.000000e+00> : vector<128x128xf32>
    %124 = tpu.matmul %121, %123, %cst_105 {dimension_numbers = #tpu.dot_dimension_numbers<[1], [0], [0], [1], [0, 0, 1, 1], [], []>} : vector<128x128xbf16>, vector<128x128xbf16>, vector<128x128xf32> -> vector<128x128xf32>
    %125 = arith.addf %119, %124 : vector<128x128xf32>
    %126 = vector.extract_strided_slice %113 {offsets = [0, 3, 0, 0], sizes = [2, 8, 8, 128], strides = [1, 1, 1, 1]} : vector<2x11x8x128xbf16> to vector<2x8x8x128xbf16>
    %127 = vector.shape_cast %126 : vector<2x8x8x128xbf16> to vector<128x128xbf16>
    %c8_106 = arith.constant 8 : index
    %c0_107 = arith.constant 0 : index
    %c0_108 = arith.constant 0 : index
    %128 = vector.load %arg5[%c8_106, %c0_107, %c0_108] : memref<9x128x128xbf16, #tpu.memory_space<vmem>>, vector<1x128x128xbf16>
    %129 = vector.shape_cast %128 : vector<1x128x128xbf16> to vector<128x128xbf16>
    %cst_109 = arith.constant dense<0.000000e+00> : vector<128x128xf32>
    %130 = tpu.matmul %127, %129, %cst_109 {dimension_numbers = #tpu.dot_dimension_numbers<[1], [0], [0], [1], [0, 0, 1, 1], [], []>} : vector<128x128xbf16>, vector<128x128xbf16>, vector<128x128xf32> -> vector<128x128xf32>
    %131 = arith.addf %125, %130 : vector<128x128xf32>
    %c0_110 = arith.constant 0 : index
    %c0_111 = arith.constant 0 : index
    %132 = vector.load %arg6[%c0_110, %c0_111] : memref<1x128xf32, #tpu.memory_space<vmem>>, vector<1x128xf32>
    %133 = vector.broadcast %132 : vector<1x128xf32> to vector<128x128xf32>
    %134 = arith.mulf %131, %133 : vector<128x128xf32>
    %c0_112 = arith.constant 0 : index
    %c0_113 = arith.constant 0 : index
    %135 = vector.load %arg7[%c0_112, %c0_113] : memref<1x128xf32, #tpu.memory_space<vmem>>, vector<1x128xf32>
    %136 = vector.broadcast %135 : vector<1x128xf32> to vector<128x128xf32>
    %137 = arith.addf %134, %136 : vector<128x128xf32>
    %138 = vector.shape_cast %137 : vector<128x128xf32> to vector<2x64x128xf32>
    %cst_114 = arith.constant dense<0.000000e+00> : vector<2x128xf32>
    %139 = vector.multi_reduction <add>, %138, %cst_114 [1] : vector<2x64x128xf32> to vector<2x128xf32>
    %c64_i32 = arith.constant 64 : i32
    %140 = tpu.dynamic_rotate %139 by %c64_i32 dim 1 : vector<2x128xf32>, i32 -> vector<2x128xf32>
    %141 = arith.addf %139, %140 : vector<2x128xf32>
    %c32_i32 = arith.constant 32 : i32
    %142 = tpu.dynamic_rotate %141 by %c32_i32 dim 1 : vector<2x128xf32>, i32 -> vector<2x128xf32>
    %143 = arith.addf %141, %142 : vector<2x128xf32>
    %c16_i32 = arith.constant 16 : i32
    %144 = tpu.dynamic_rotate %143 by %c16_i32 dim 1 : vector<2x128xf32>, i32 -> vector<2x128xf32>
    %145 = arith.addf %143, %144 : vector<2x128xf32>
    %c0_115 = arith.constant 0 : index
    %c0_116 = arith.constant 0 : index
    %146 = vector.load %arg8[%c0_115, %c0_116] : memref<1x128xf32, #tpu.memory_space<vmem>>, vector<1x128xf32>
    %147 = vector.broadcast %146 : vector<1x128xf32> to vector<2x128xf32>
    %148 = arith.mulf %145, %147 : vector<2x128xf32>
    %cst_117 = arith.constant dense<0.000000e+00> : vector<2xf32>
    %149 = vector.multi_reduction <add>, %148, %cst_117 [1] : vector<2x128xf32> to vector<2xf32>
    %150 = vector.shape_cast %149 : vector<2xf32> to vector<2x1xf32>
    %cst_118 = arith.constant 0.000000e+00 : f32
    %151 = vector.broadcast %cst_118 : f32 to vector<2x1xf32>
    %152 = arith.maximumf %150, %151 : vector<2x1xf32>
    %cst_119 = arith.constant 0.000000e+00 : f32
    %153 = vector.broadcast %cst_119 : f32 to vector<2x128xf32>
    %c0_120 = arith.constant 0 : index
    %c0_121 = arith.constant 0 : index
    %154 = vector.load %arg9[%c0_120, %c0_121] : memref<1x128xf32, #tpu.memory_space<vmem>>, vector<1x128xf32>
    %155 = vector.broadcast %152 : vector<2x1xf32> to vector<2x128xf32>
    %156 = vector.broadcast %154 : vector<1x128xf32> to vector<2x128xf32>
    %157 = arith.mulf %155, %156 : vector<2x128xf32>
    %158 = arith.addf %153, %157 : vector<2x128xf32>
    %159 = arith.negf %158 : vector<2x128xf32>
    %160 = math.exp %159 : vector<2x128xf32>
    %cst_122 = arith.constant 1.000000e+00 : f32
    %161 = vector.broadcast %cst_122 : f32 to vector<2x128xf32>
    %162 = arith.addf %161, %160 : vector<2x128xf32>
    %163 = arith.divf %161, %162 : vector<2x128xf32>
    %c0_123 = arith.constant 0 : index
    %c0_124 = arith.constant 0 : index
    %c0_125 = arith.constant 0 : index
    %c0_126 = arith.constant 0 : index
    %164 = vector.load %arg1[%c0_123, %c0_124, %c0_125, %c0_126] : memref<2x8x8x128xf32, #tpu.memory_space<vmem>>, vector<2x8x8x128xf32>
    %165 = vector.shape_cast %164 : vector<2x8x8x128xf32> to vector<2x64x128xf32>
    %166 = vector.shape_cast %163 : vector<2x128xf32> to vector<2x1x128xf32>
    %167 = vector.broadcast %166 : vector<2x1x128xf32> to vector<2x64x128xf32>
    %168 = arith.mulf %138, %167 : vector<2x64x128xf32>
    %169 = arith.addf %168, %165 : vector<2x64x128xf32>
    %cst_127 = arith.constant 0.000000e+00 : f32
    %170 = vector.broadcast %cst_127 : f32 to vector<2x64x128xf32>
    %171 = arith.maximumf %169, %170 : vector<2x64x128xf32>
    %172 = vector.shape_cast %171 : vector<2x64x128xf32> to vector<2x8x8x128xf32>
    %c0_128 = arith.constant 0 : index
    %c0_129 = arith.constant 0 : index
    %c0_130 = arith.constant 0 : index
    %c0_131 = arith.constant 0 : index
    %173 = vector.load %arg10[%c0_128, %c0_129, %c0_130, %c0_131] : memref<2x8x8x128xf32, #tpu.memory_space<vmem>>, vector<2x8x8x128xf32>
    tpu.vector_store %arg10[%c0_128, %c0_129, %c0_130, %c0_131], %172 {strides = array<i32>} : memref<2x8x8x128xf32, #tpu.memory_space<vmem>>, vector<2x8x8x128xf32>,
    return
  }
  func.func @transform_0(%arg0: i32) -> (i32, i32, i32, i32) {
    %c0_i32 = arith.constant 0 : i32
    %c0_i32_0 = arith.constant 0 : i32
    %c0_i32_1 = arith.constant 0 : i32
    %c0_i32_2 = arith.constant 0 : i32
    return %arg0, %c0_i32, %c0_i32_0, %c0_i32_1 : i32, i32, i32, i32
  }
  func.func @transform_1(%arg0: i32) -> (i32, i32, i32) {
    %c0_i32 = arith.constant 0 : i32
    %c0_i32_0 = arith.constant 0 : i32
    %c0_i32_1 = arith.constant 0 : i32
    %c0_i32_2 = arith.constant 0 : i32
    return %c0_i32, %c0_i32_0, %c0_i32_1 : i32, i32, i32
  }
  func.func @transform_2(%arg0: i32) -> (i32, i32) {
    %c0_i32 = arith.constant 0 : i32
    %c0_i32_0 = arith.constant 0 : i32
    %c0_i32_1 = arith.constant 0 : i32
    return %c0_i32, %c0_i32_0 : i32, i32
  }
  func.func @transform_3(%arg0: i32) -> (i32, i32) {
    %c0_i32 = arith.constant 0 : i32
    %c0_i32_0 = arith.constant 0 : i32
    %c0_i32_1 = arith.constant 0 : i32
    return %c0_i32, %c0_i32_0 : i32, i32
  }
  func.func @transform_4(%arg0: i32) -> (i32, i32, i32) {
    %c0_i32 = arith.constant 0 : i32
    %c0_i32_0 = arith.constant 0 : i32
    %c0_i32_1 = arith.constant 0 : i32
    %c0_i32_2 = arith.constant 0 : i32
    return %c0_i32, %c0_i32_0, %c0_i32_1 : i32, i32, i32
  }
  func.func @transform_5(%arg0: i32) -> (i32, i32) {
    %c0_i32 = arith.constant 0 : i32
    %c0_i32_0 = arith.constant 0 : i32
    %c0_i32_1 = arith.constant 0 : i32
    return %c0_i32, %c0_i32_0 : i32, i32
  }
  func.func @transform_6(%arg0: i32) -> (i32, i32) {
    %c0_i32 = arith.constant 0 : i32
    %c0_i32_0 = arith.constant 0 : i32
    %c0_i32_1 = arith.constant 0 : i32
    return %c0_i32, %c0_i32_0 : i32, i32
  }
  func.func @transform_7(%arg0: i32) -> (i32, i32) {
    %c0_i32 = arith.constant 0 : i32
    %c0_i32_0 = arith.constant 0 : i32
    %c0_i32_1 = arith.constant 0 : i32
    return %c0_i32, %c0_i32_0 : i32, i32
  }
  func.func @transform_8(%arg0: i32) -> (i32, i32) {
    %c0_i32 = arith.constant 0 : i32
    %c0_i32_0 = arith.constant 0 : i32
    %c0_i32_1 = arith.constant 0 : i32
    return %c0_i32, %c0_i32_0 : i32, i32
  }
  func.func @transform_9(%arg0: i32) -> (i32, i32, i32, i32) {
    %c0_i32 = arith.constant 0 : i32
    %c0_i32_0 = arith.constant 0 : i32
    %c0_i32_1 = arith.constant 0 : i32
    %c0_i32_2 = arith.constant 0 : i32
    return %arg0, %c0_i32, %c0_i32_0, %c0_i32_1 : i32, i32, i32, i32
  }
}

</mosaic_0001>

<llo_original>
// kernel: tpu_custom_call.1
$region0: #{tpu_custom_call.1}
  #allocation0 [shape = 'u32[]', space=smem, size = 0x4, offset = 0x4, fixed_abs, tag = 'smem constant byte address 0x4 - core index']
  #allocation1 [shape = 'u32[144,128]{1,0:T(1,128)}', space=vmem, size = 0x12000, scoped, tag = 'internal scratch']
  #allocation2 [shape = 'bf16[2,11,11,128]{3,2,1,0:T(8,128)(2,1)}', space=vmem, size = 0x16000, scoped, tag = 'scratch operand']
  %s0 = inlined_call_operand.hbm [shape: f32[2,8,8,128], index: 0, kind: input, shape index: {}]
  %s1 = inlined_call_operand.hbm [shape: bf16[9,128,128], index: 1, kind: input, shape index: {}]
  %s2 = inlined_call_operand.vmem [shape: f32[1,128], index: 2, kind: input, shape index: {}]
  %s3 = inlined_call_operand.vmem [shape: f32[1,128], index: 3, kind: input, shape index: {}]
  %s4 = inlined_call_operand.hbm [shape: bf16[9,128,128], index: 4, kind: input, shape index: {}]
  %s5 = inlined_call_operand.vmem [shape: f32[1,128], index: 5, kind: input, shape index: {}]
  %s6 = inlined_call_operand.vmem [shape: f32[1,128], index: 6, kind: input, shape index: {}]
  %s7 = inlined_call_operand.vmem [shape: f32[1,128], index: 7, kind: input, shape index: {}]
  %s8 = inlined_call_operand.vmem [shape: f32[1,128], index: 8, kind: input, shape index: {}]
  %s9 = inlined_call_operand.hbm [shape: f32[2,8,8,128], index: 9, kind: output, shape index: {}]
  %s10 = sld [smem:[#allocation0]]
  $region58: #{tpu_custom_call.1} parent=0
    _
  %s12 = ssub.s32 1, %s10
  %s13 = scalar_select 0, %s12, %s10
  $region1: #{tpu_custom_call.1} parent=0
    #allocation3 [shape = 'u8[65536]{0}', space=vmem, size = 0x10000, scoped, tag = 'input window, operand 0, single buffered']
    #allocation4 [shape = 's32[1]{0}', space=sflag, size = 0x4, scoped, tag = 'scoped memory for tpu_custom_call.1']
    #allocation5 [shape = 's32[1]{0}', space=sflag, size = 0x4, scoped, tag = 'scoped memory for tpu_custom_call.1']
    #allocation6 [shape = 'u8[294912]{0}', space=vmem, size = 0x48000, scoped, tag = 'input window, operand 1, single buffered']
    #allocation7 [shape = 's32[1]{0}', space=sflag, size = 0x4, scoped, tag = 'scoped memory for tpu_custom_call.1']
    #allocation8 [shape = 'u8[294912]{0}', space=vmem, size = 0x48000, scoped, tag = 'input window, operand 4, single buffered']
    #allocation9 [shape = 'u8[65536]{0}', space=vmem, size = 0x10000, scoped, tag = 'output window, operand 0, single buffered']
    %14 = vsyncpa [#allocation4], 0
    %15 = vsyncpa [#allocation7], 0
    %16 = vsyncpa [#allocation5], 0
    // Predicated region
    $region2: #{tpu_custom_call.1} parent=1 // pred_check
      _
    $region3: #{tpu_custom_call.1} parent=1 // pred_check_branch
      %18 = sbr.rel (0) target = $region5
    $region4: #{tpu_custom_call.1} parent=1 // pred_region
      %s20 = ssub.s32 2048, 2048
      %21 = vsyncadd [#allocation4], %s20
      %s22 = sshll.u32 [#allocation3], 4
      %s23 = int_to_ptr.vmem [resolvable:$true] %s22
      %28 = dma.hbm_to_vmem [thread:$0]  %s0, 2048, %s23, [#allocation4], 128, 128, 8
    $region5: #{tpu_custom_call.1} parent=1 // pred_fallthru
      _
    // Predicated region
    $region6: #{tpu_custom_call.1} parent=1 // pred_check
      _
    $region7: #{tpu_custom_call.1} parent=1 // pred_check_branch
      %30 = sbr.rel (0) target = $region9
    $region8: #{tpu_custom_call.1} parent=1 // pred_region
      %s32 = ssub.s32 9216, 9216
      %33 = vsyncadd [#allocation7], %s32
      %s34 = sshll.u32 [#allocation6], 4
      %s35 = int_to_ptr.vmem [resolvable:$true] %s34
      %40 = dma.hbm_to_vmem [thread:$0]  %s1, 9216, %s35, [#allocation7], 64, 64, 4
    $region9: #{tpu_custom_call.1} parent=1 // pred_fallthru
      _
    // Predicated region
    $region10: #{tpu_custom_call.1} parent=1 // pred_check
      _
    $region11: #{tpu_custom_call.1} parent=1 // pred_check_branch
      %42 = sbr.rel (0) target = $region13
    $region12: #{tpu_custom_call.1} parent=1 // pred_region
      _
    $region13: #{tpu_custom_call.1} parent=1 // pred_fallthru
      _
    // Predicated region
    $region14: #{tpu_custom_call.1} parent=1 // pred_check
      _
    $region15: #{tpu_custom_call.1} parent=1 // pred_check_branch
      %44 = sbr.rel (0) target = $region17
    $region16: #{tpu_custom_call.1} parent=1 // pred_region
      _
    $region17: #{tpu_custom_call.1} parent=1 // pred_fallthru
      _
    // Predicated region
    $region18: #{tpu_custom_call.1} parent=1 // pred_check
      _
    $region19: #{tpu_custom_call.1} parent=1 // pred_check_branch
      %46 = sbr.rel (0) target = $region21
    $region20: #{tpu_custom_call.1} parent=1 // pred_region
      %s48 = ssub.s32 9216, 9216
      %49 = vsyncadd [#allocation7], %s48
      %s50 = sshll.u32 [#allocation8], 4
      %s51 = int_to_ptr.vmem [resolvable:$true] %s50
      %56 = dma.hbm_to_vmem [thread:$0]  %s4, 9216, %s51, [#allocation7], 64, 64, 4
    $region21: #{tpu_custom_call.1} parent=1 // pred_fallthru
      _
    // Predicated region
    $region22: #{tpu_custom_call.1} parent=1 // pred_check
      _
    $region23: #{tpu_custom_call.1} parent=1 // pred_check_branch
      %58 = sbr.rel (0) target = $region25
    $region24: #{tpu_custom_call.1} parent=1 // pred_region
      _
    $region25: #{tpu_custom_call.1} parent=1 // pred_fallthru
      _
    // Predicated region
    $region26: #{tpu_custom_call.1} parent=1 // pred_check
      _
    $region27: #{tpu_custom_call.1} parent=1 // pred_check_branch
      %60 = sbr.rel (0) target = $region29
    $region28: #{tpu_custom_call.1} parent=1 // pred_region
      _
    $region29: #{tpu_custom_call.1} parent=1 // pred_fallthru
      _
    // Predicated region
    $region30: #{tpu_custom_call.1} parent=1 // pred_check
      _
    $region31: #{tpu_custom_call.1} parent=1 // pred_check_branch
      %62 = sbr.rel (0) target = $region33
    $region32: #{tpu_custom_call.1} parent=1 // pred_region
      _
    $region33: #{tpu_custom_call.1} parent=1 // pred_fallthru
      _
    // Predicated region
    $region34: #{tpu_custom_call.1} parent=1 // pred_check
      _
    $region35: #{tpu_custom_call.1} parent=1 // pred_check_branch
      %64 = sbr.rel (0) target = $region37
    $region36: #{tpu_custom_call.1} parent=1 // pred_region
      _
    $region37: #{tpu_custom_call.1} parent=1 // pred_fallthru
      _
    // Predicated region
    $region38: #{tpu_custom_call.1} parent=1 // pred_check
      _
    $region39: #{tpu_custom_call.1} parent=1 // pred_check_branch
      %66 = sbr.rel (0) target = $region41
    $region40: #{tpu_custom_call.1} parent=1 // pred_region
      %67 = dma.done [#allocation4], 2048
    $region41: #{tpu_custom_call.1} parent=1 // pred_fallthru
      _
    // Predicated region
    $region42: #{tpu_custom_call.1} parent=1 // pred_check
      _
    $region43: #{tpu_custom_call.1} parent=1 // pred_check_branch
      %69 = sbr.rel (0) target = $region45
    $region44: #{tpu_custom_call.1} parent=1 // pred_region
      %70 = dma.done [#allocation7], 9216
    $region45: #{tpu_custom_call.1} parent=1 // pred_fallthru
      _
    // Predicated region
    $region46: #{tpu_custom_call.1} parent=1 // pred_check
      _
    $region47: #{tpu_custom_call.1} parent=1 // pred_check_branch
      %72 = sbr.rel (0) target = $region49
    $region48: #{tpu_custom_call.1} parent=1 // pred_region
      %73 = dma.done [#allocation7], 9216
    $region49: #{tpu_custom_call.1} parent=1 // pred_fallthru
      _
    %75 = vst [vmem:[#allocation2] sm:$0xf] 0
    %vm76 = vcmask 1041408
    %vm77 = vsmask.f32 1280
    %vm78 = vmand %vm76, %vm77
    %v79 = vld [vmem:[#allocation2 + $0x4] sm:$0x3]
    %v80 = vsel %vm78, 0, %v79
    %81 = vst [vmem:[#allocation2 + $0x4] sm:$0x3] %v80
    %82 = vst [vmem:[#allocation2 + $0x8] sm:$0xf] 0
    %v83 = vld [vmem:[#allocation2 + $0xc] sm:$0x3]
    %v84 = vsel %vm78, 0, %v83
    %85 = vst [vmem:[#allocation2 + $0xc] sm:$0x3] %v84
    %86 = vst [vmem:[#allocation2 + $0x10] sm:$0xf] 0
    %v87 = vld [vmem:[#allocation2 + $0x14] sm:$0x3]
    %v88 = vsel %vm78, 0, %v87
    %89 = vst [vmem:[#allocation2 + $0x14] sm:$0x3] %v88
    %90 = vst [vmem:[#allocation2 + $0x18] sm:$0xf] 0
    %v91 = vld [vmem:[#allocation2 + $0x1c] sm:$0x3]
    %v92 = vsel %vm78, 0, %v91
    %93 = vst [vmem:[#allocation2 + $0x1c] sm:$0x3] %v92
    %94 = vst [vmem:[#allocation2 + $0x20] sm:$0xf] 0
    %v95 = vld [vmem:[#allocation2 + $0x24] sm:$0x3]
    %v96 = vsel %vm78, 0, %v95
    %97 = vst [vmem:[#allocation2 + $0x24] sm:$0x3] %v96
    %98 = vst [vmem:[#allocation2 + $0x28] sm:$0xf] 0
    %v99 = vld [vmem:[#allocation2 + $0x2c] sm:$0x3]
    %v100 = vsel %vm78, 0, %v99
    %101 = vst [vmem:[#allocation2 + $0x2c] sm:$0x3] %v100
    %102 = vst [vmem:[#allocation2 + $0x30] sm:$0xf] 0
    %v103 = vld [vmem:[#allocation2 + $0x34] sm:$0x3]
    %v104 = vsel %vm78, 0, %v103
    %105 = vst [vmem:[#allocation2 + $0x34] sm:$0x3] %v104
    %106 = vst [vmem:[#allocation2 + $0x38] sm:$0xf] 0
    %v107 = vld [vmem:[#allocation2 + $0x3c] sm:$0x3]
    %v108 = vsel %vm78, 0, %v107
    %109 = vst [vmem:[#allocation2 + $0x3c] sm:$0x3] %v108
    %110 = vst [vmem:[#allocation2 + $0x40] sm:$0xf] 0
    %v111 = vld [vmem:[#allocation2 + $0x44] sm:$0x3]
    %v112 = vsel %vm78, 0, %v111
    %113 = vst [vmem:[#allocation2 + $0x44] sm:$0x3] %v112
    %114 = vst [vmem:[#allocation2 + $0x48] sm:$0xf] 0
    %v115 = vld [vmem:[#allocation2 + $0x4c] sm:$0x3]
    %v116 = vsel %vm78, 0, %v115
    %117 = vst [vmem:[#allocation2 + $0x4c] sm:$0x3] %v116
    %118 = vst [vmem:[#allocation2 + $0x50] sm:$0xf] 0
    %v119 = vld [vmem:[#allocation2 + $0x54] sm:$0x3]
    %v120 = vsel %vm78, 0, %v119
    %121 = vst [vmem:[#allocation2 + $0x54] sm:$0x3] %v120
    %122 = vst [vmem:[#allocation2 + $0x58] sm:$0xf] 0
    %v123 = vld [vmem:[#allocation2 + $0x5c] sm:$0x3]
    %v124 = vsel %vm78, 0, %v123
    %125 = vst [vmem:[#allocation2 + $0x5c] sm:$0x3] %v124
    %126 = vst [vmem:[#allocation2 + $0x60] sm:$0xf] 0
    %v127 = vld [vmem:[#allocation2 + $0x64] sm:$0x3]
    %v128 = vsel %vm78, 0, %v127
    %129 = vst [vmem:[#allocation2 + $0x64] sm:$0x3] %v128
    %130 = vst [vmem:[#allocation2 + $0x68] sm:$0xf] 0
    %v131 = vld [vmem:[#allocation2 + $0x6c] sm:$0x3]
    %v132 = vsel %vm78, 0, %v131
    %133 = vst [vmem:[#allocation2 + $0x6c] sm:$0x3] %v132
    %134 = vst [vmem:[#allocation2 + $0x70] sm:$0xf] 0
    %v135 = vld [vmem:[#allocation2 + $0x74] sm:$0x3]
    %v136 = vsel %vm78, 0, %v135
    %137 = vst [vmem:[#allocation2 + $0x74] sm:$0x3] %v136
    %138 = vst [vmem:[#allocation2 + $0x78] sm:$0xf] 0
    %v139 = vld [vmem:[#allocation2 + $0x7c] sm:$0x3]
    %v140 = vsel %vm78, 0, %v139
    %141 = vst [vmem:[#allocation2 + $0x7c] sm:$0x3] %v140
    %142 = vst [vmem:[#allocation2 + $0x80] sm:$0xf] 0
    %v143 = vld [vmem:[#allocation2 + $0x84] sm:$0x3]
    %v144 = vsel %vm78, 0, %v143
    %145 = vst [vmem:[#allocation2 + $0x84] sm:$0x3] %v144
    %146 = vst [vmem:[#allocation2 + $0x88] sm:$0xf] 0
    %v147 = vld [vmem:[#allocation2 + $0x8c] sm:$0x3]
    %v148 = vsel %vm78, 0, %v147
    %149 = vst [vmem:[#allocation2 + $0x8c] sm:$0x3] %v148
    %150 = vst [vmem:[#allocation2 + $0x90] sm:$0xf] 0
    %v151 = vld [vmem:[#allocation2 + $0x94] sm:$0x3]
    %v152 = vsel %vm78, 0, %v151
    %153 = vst [vmem:[#allocation2 + $0x94] sm:$0x3] %v152
    %154 = vst [vmem:[#allocation2 + $0x98] sm:$0xf] 0
    %v155 = vld [vmem:[#allocation2 + $0x9c] sm:$0x3]
    %v156 = vsel %vm78, 0, %v155
    %157 = vst [vmem:[#allocation2 + $0x9c] sm:$0x3] %v156
    %158 = vst [vmem:[#allocation2 + $0xa0] sm:$0xf] 0
    %v159 = vld [vmem:[#allocation2 + $0xa4] sm:$0x3]
    %v160 = vsel %vm78, 0, %v159
    %161 = vst [vmem:[#allocation2 + $0xa4] sm:$0x3] %v160
    %162 = vst [vmem:[#allocation2 + $0xa8] sm:$0xf] 0
    %v163 = vld [vmem:[#allocation2 + $0xac] sm:$0x3]
    %v164 = vsel %vm78, 0, %v163
    %165 = vst [vmem:[#allocation2 + $0xac] sm:$0x3] %v164
    %v166 = vld [vmem:[#allocation3] sm:$0xff]
    %v167 = vld [vmem:[#allocation3 + $0x8] sm:$0xff]
    %v168 = vld [vmem:[#allocation3 + $0x10] sm:$0xff]
    %v169 = vld [vmem:[#allocation3 + $0x18] sm:$0xff]
    %v170 = vld [vmem:[#allocation3 + $0x20] sm:$0xff]
    %v171 = vld [vmem:[#allocation3 + $0x28] sm:$0xff]
    %v172 = vld [vmem:[#allocation3 + $0x30] sm:$0xff]
    %v173 = vld [vmem:[#allocation3 + $0x38] sm:$0xff]
    %v174 = vld [vmem:[#allocation3 + $0x40] sm:$0xff]
    %v175 = vld [vmem:[#allocation3 + $0x48] sm:$0xff]
    %v176 = vld [vmem:[#allocation3 + $0x50] sm:$0xff]
    %v177 = vld [vmem:[#allocation3 + $0x58] sm:$0xff]
    %v178 = vld [vmem:[#allocation3 + $0x60] sm:$0xff]
    %v179 = vld [vmem:[#allocation3 + $0x68] sm:$0xff]
    %v180 = vld [vmem:[#allocation3 + $0x70] sm:$0xff]
    %v181 = vld [vmem:[#allocation3 + $0x78] sm:$0xff]
    %v182 = vpack.c.bf16 %v166, %v166
    %v183 = vpack.c.bf16 %v167, %v167
    %v184 = vpack.c.bf16 %v168, %v168
    %v185 = vpack.c.bf16 %v169, %v169
    %v186 = vpack.c.bf16 %v170, %v170
    %v187 = vpack.c.bf16 %v171, %v171
    %v188 = vpack.c.bf16 %v172, %v172
    %v189 = vpack.c.bf16 %v173, %v173
    %v190 = vpack.c.bf16 %v174, %v174
    %v191 = vpack.c.bf16 %v175, %v175
    %v192 = vpack.c.bf16 %v176, %v176
    %v193 = vpack.c.bf16 %v177, %v177
    %v194 = vpack.c.bf16 %v178, %v178
    %v195 = vpack.c.bf16 %v179, %v179
    %v196 = vpack.c.bf16 %v180, %v180
    %v197 = vpack.c.bf16 %v181, %v181
    %v214 = vunpack.c.l.b16 %v182
    %v215 = vunpack.c.l.b16 %v183
    %v216 = vunpack.c.l.b16 %v184
    %v217 = vunpack.c.l.b16 %v185
    %v218 = vunpack.c.l.b16 %v186
    %v219 = vunpack.c.l.b16 %v187
    %v220 = vunpack.c.l.b16 %v188
    %v221 = vunpack.c.l.b16 %v189
    %v222 = vunpack.c.l.b16 %v190
    %v223 = vunpack.c.l.b16 %v191
    %v224 = vunpack.c.l.b16 %v192
    %v225 = vunpack.c.l.b16 %v193
    %v226 = vunpack.c.l.b16 %v194
    %v227 = vunpack.c.l.b16 %v195
    %v228 = vunpack.c.l.b16 %v196
    %v229 = vunpack.c.l.b16 %v197
    %v230 = vpack.c.b16 %v214, %v214
    %v231 = vpack.c.b16 %v215, %v215
    %v232 = vpack.c.b16 %v216, %v216
    %v233 = vpack.c.b16 %v217, %v217
    %v234 = vpack.c.b16 %v218, %v218
    %v235 = vpack.c.b16 %v219, %v219
    %v236 = vpack.c.b16 %v220, %v220
    %v237 = vpack.c.b16 %v221, %v221
    %v238 = vpack.c.b16 %v222, %v222
    %v239 = vpack.c.b16 %v223, %v223
    %v240 = vpack.c.b16 %v224, %v224
    %v241 = vpack.c.b16 %v225, %v225
    %v242 = vpack.c.b16 %v226, %v226
    %v243 = vpack.c.b16 %v227, %v227
    %v244 = vpack.c.b16 %v228, %v228
    %v245 = vpack.c.b16 %v229, %v229
    %v246 = vrot.slane %v230, 7
    %v247 = vrot.slane %v246, 4
    %v248 = vrot.slane %v231, 7
    %v249 = vrot.slane %v248, 4
    %v250 = vrot.slane %v232, 7
    %v251 = vrot.slane %v250, 4
    %v252 = vrot.slane %v233, 7
    %v253 = vrot.slane %v252, 4
    %v254 = vrot.slane %v234, 7
    %v255 = vrot.slane %v254, 4
    %v256 = vrot.slane %v235, 7
    %v257 = vrot.slane %v256, 4
    %v258 = vrot.slane %v236, 7
    %v259 = vrot.slane %v258, 4
    %v260 = vrot.slane %v237, 7
    %v261 = vrot.slane %v260, 4
    %v262 = vrot.slane %v238, 7
    %v263 = vrot.slane %v262, 4
    %v264 = vrot.slane %v239, 7
    %v265 = vrot.slane %v264, 4
    %v266 = vrot.slane %v240, 7
    %v267 = vrot.slane %v266, 4
    %v268 = vrot.slane %v241, 7
    %v269 = vrot.slane %v268, 4
    %v270 = vrot.slane %v242, 7
    %v271 = vrot.slane %v270, 4
    %v272 = vrot.slane %v243, 7
    %v273 = vrot.slane %v272, 4
    %v274 = vrot.slane %v244, 7
    %v275 = vrot.slane %v274, 4
    %v276 = vrot.slane %v245, 7
    %v277 = vrot.slane %v276, 4
    %s310 = scalar_lea.vmem [#allocation2], 16
    %311 = vst [vmem:[%s310] sm:$0xe] %v246
    %312 = vst [vmem:[%s310 + $0x4] sm:$0x1] %v247
    %313 = vst [vmem:[%s310 + $0x8] sm:$0xe] %v248
    %314 = vst [vmem:[%s310 + $0xc] sm:$0x1] %v249
    %315 = vst [vmem:[%s310 + $0x10] sm:$0xe] %v250
    %316 = vst [vmem:[%s310 + $0x14] sm:$0x1] %v251
    %317 = vst [vmem:[%s310 + $0x18] sm:$0xe] %v252
    %318 = vst [vmem:[%s310 + $0x1c] sm:$0x1] %v253
    %319 = vst [vmem:[%s310 + $0x20] sm:$0xe] %v254
    %320 = vst [vmem:[%s310 + $0x24] sm:$0x1] %v255
    %321 = vst [vmem:[%s310 + $0x28] sm:$0xe] %v256
    %322 = vst [vmem:[%s310 + $0x2c] sm:$0x1] %v257
    %323 = vst [vmem:[%s310 + $0x30] sm:$0xe] %v258
    %324 = vst [vmem:[%s310 + $0x34] sm:$0x1] %v259
    %325 = vst [vmem:[%s310 + $0x38] sm:$0xe] %v260
    %326 = vst [vmem:[%s310 + $0x3c] sm:$0x1] %v261
    %327 = vst [vmem:[%s310 + $0x58] sm:$0xe] %v262
    %328 = vst [vmem:[%s310 + $0x5c] sm:$0x1] %v263
    %329 = vst [vmem:[%s310 + $0x60] sm:$0xe] %v264
    %330 = vst [vmem:[%s310 + $0x64] sm:$0x1] %v265
    %331 = vst [vmem:[%s310 + $0x68] sm:$0xe] %v266
    %332 = vst [vmem:[%s310 + $0x6c] sm:$0x1] %v267
    %333 = vst [vmem:[%s310 + $0x70] sm:$0xe] %v268
    %334 = vst [vmem:[%s310 + $0x74] sm:$0x1] %v269
    %335 = vst [vmem:[%s310 + $0x78] sm:$0xe] %v270
    %336 = vst [vmem:[%s310 + $0x7c] sm:$0x1] %v271
    %337 = vst [vmem:[%s310 + $0x80] sm:$0xe] %v272
    %338 = vst [vmem:[%s310 + $0x84] sm:$0x1] %v273
    %339 = vst [vmem:[%s310 + $0x88] sm:$0xe] %v274
    %340 = vst [vmem:[%s310 + $0x8c] sm:$0x1] %v275
    %341 = vst [vmem:[%s310 + $0x90] sm:$0xe] %v276
    %342 = vst [vmem:[%s310 + $0x94] sm:$0x1] %v277
    %v343 = vld [vmem:[#allocation2 + $0x8] sm:$0xf]
    %v344 = vld [vmem:[#allocation2 + $0xc] sm:$0x1]
    %v345 = vld [vmem:[#allocation2 + $0x10] sm:$0xf]
    %v346 = vld [vmem:[#allocation2 + $0x14] sm:$0x1]
    %v347 = vld [vmem:[#allocation2 + $0x18] sm:$0xf]
    %v348 = vld [vmem:[#allocation2 + $0x1c] sm:$0x1]
    %v349 = vld [vmem:[#allocation2 + $0x20] sm:$0xf]
    %v350 = vld [vmem:[#allocation2 + $0x24] sm:$0x1]
    %v351 = vld [vmem:[#allocation2 + $0x28] sm:$0xf]
    %v352 = vld [vmem:[#allocation2 + $0x2c] sm:$0x1]
    %v353 = vld [vmem:[#allocation2 + $0x30] sm:$0xf]
    %v354 = vld [vmem:[#allocation2 + $0x34] sm:$0x1]
    %v355 = vld [vmem:[#allocation2 + $0x38] sm:$0xf]
    %v356 = vld [vmem:[#allocation2 + $0x3c] sm:$0x1]
    %v357 = vld [vmem:[#allocation2 + $0x40] sm:$0xf]
    %v358 = vld [vmem:[#allocation2 + $0x44] sm:$0x1]
    %v359 = vld [vmem:[#allocation2 + $0x48] sm:$0xf]
    %v360 = vld [vmem:[#allocation2 + $0x4c] sm:$0x1]
    %v361 = vld [vmem:[#allocation2 + $0x50] sm:$0xf]
    %v362 = vld [vmem:[#allocation2 + $0x54] sm:$0x1]
    %v363 = vld [vmem:[#allocation2 + $0x60] sm:$0xf]
    %v364 = vld [vmem:[#allocation2 + $0x64] sm:$0x1]
    %v365 = vld [vmem:[#allocation2 + $0x68] sm:$0xf]
    %v366 = vld [vmem:[#allocation2 + $0x6c] sm:$0x1]
    %v367 = vld [vmem:[#allocation2 + $0x70] sm:$0xf]
    %v368 = vld [vmem:[#allocation2 + $0x74] sm:$0x1]
    %v369 = vld [vmem:[#allocation2 + $0x78] sm:$0xf]
    %v370 = vld [vmem:[#allocation2 + $0x7c] sm:$0x1]
    %v371 = vld [vmem:[#allocation2 + $0x80] sm:$0xf]
    %v372 = vld [vmem:[#allocation2 + $0x84] sm:$0x1]
    %v373 = vld [vmem:[#allocation2 + $0x88] sm:$0xf]
    %v374 = vld [vmem:[#allocation2 + $0x8c] sm:$0x1]
    %v375 = vld [vmem:[#allocation2 + $0x90] sm:$0xf]
    %v376 = vld [vmem:[#allocation2 + $0x94] sm:$0x1]
    %v377 = vld [vmem:[#allocation2 + $0x98] sm:$0xf]
    %v378 = vld [vmem:[#allocation2 + $0x9c] sm:$0x1]
    %v379 = vld [vmem:[#allocation2 + $0xa0] sm:$0xf]
    %v380 = vld [vmem:[#allocation2 + $0xa4] sm:$0x1]
    %v381 = vld [vmem:[#allocation2 + $0xa8] sm:$0xf]
    %v382 = vld [vmem:[#allocation2 + $0xac] sm:$0x1]
    %vm383 = vsmask.f32 3328
    %vm384 = vsmask.f32 7440
    %vm385 = vmor %vm383, %vm384
    %v387 = vshrl.u32 %v343, 16
    %v389 = vrot.slane %v387, 4
    %v390 = vshll.u32 %v343, 16
    %v392 = vrot.slane %v390, 5
    %v393 = vor.u32 %v389, %v392
    %v394 = vrot.slane %v393, 4
    %v396 = vshll.u32 %v344, 16
    %v398 = vrot.slane %v396, 5
    %v399 = vsel %vm385, %v394, %v398
    %v401 = vshrl.u32 %v345, 16
    %v403 = vrot.slane %v401, 4
    %v404 = vshll.u32 %v345, 16
    %v406 = vrot.slane %v404, 5
    %v407 = vor.u32 %v403, %v406
    %v408 = vrot.slane %v407, 4
    %v410 = vshll.u32 %v346, 16
    %v412 = vrot.slane %v410, 5
    %v413 = vsel %vm385, %v408, %v412
    %v415 = vshrl.u32 %v347, 16
    %v417 = vrot.slane %v415, 4
    %v418 = vshll.u32 %v347, 16
    %v420 = vrot.slane %v418, 5
    %v421 = vor.u32 %v417, %v420
    %v422 = vrot.slane %v421, 4
    %v424 = vshll.u32 %v348, 16
    %v426 = vrot.slane %v424, 5
    %v427 = vsel %vm385, %v422, %v426
    %v429 = vshrl.u32 %v349, 16
    %v431 = vrot.slane %v429, 4
    %v432 = vshll.u32 %v349, 16
    %v434 = vrot.slane %v432, 5
    %v435 = vor.u32 %v431, %v434
    %v436 = vrot.slane %v435, 4
    %v438 = vshll.u32 %v350, 16
    %v440 = vrot.slane %v438, 5
    %v441 = vsel %vm385, %v436, %v440
    %v443 = vshrl.u32 %v351, 16
    %v445 = vrot.slane %v443, 4
    %v446 = vshll.u32 %v351, 16
    %v448 = vrot.slane %v446, 5
    %v449 = vor.u32 %v445, %v448
    %v450 = vrot.slane %v449, 4
    %v452 = vshll.u32 %v352, 16
    %v454 = vrot.slane %v452, 5
    %v455 = vsel %vm385, %v450, %v454
    %v457 = vshrl.u32 %v353, 16
    %v459 = vrot.slane %v457, 4
    %v460 = vshll.u32 %v353, 16
    %v462 = vrot.slane %v460, 5
    %v463 = vor.u32 %v459, %v462
    %v464 = vrot.slane %v463, 4
    %v466 = vshll.u32 %v354, 16
    %v468 = vrot.slane %v466, 5
    %v469 = vsel %vm385, %v464, %v468
    %v471 = vshrl.u32 %v355, 16
    %v473 = vrot.slane %v471, 4
    %v474 = vshll.u32 %v355, 16
    %v476 = vrot.slane %v474, 5
    %v477 = vor.u32 %v473, %v476
    %v478 = vrot.slane %v477, 4
    %v480 = vshll.u32 %v356, 16
    %v482 = vrot.slane %v480, 5
    %v483 = vsel %vm385, %v478, %v482
    %v485 = vshrl.u32 %v357, 16
    %v487 = vrot.slane %v485, 4
    %v488 = vshll.u32 %v357, 16
    %v490 = vrot.slane %v488, 5
    %v491 = vor.u32 %v487, %v490
    %v492 = vrot.slane %v491, 4
    %v494 = vshll.u32 %v358, 16
    %v496 = vrot.slane %v494, 5
    %v497 = vsel %vm385, %v492, %v496
    %v499 = vshrl.u32 %v363, 16
    %v501 = vrot.slane %v499, 4
    %v502 = vshll.u32 %v363, 16
    %v504 = vrot.slane %v502, 5
    %v505 = vor.u32 %v501, %v504
    %v506 = vrot.slane %v505, 4
    %v508 = vshll.u32 %v364, 16
    %v510 = vrot.slane %v508, 5
    %v511 = vsel %vm385, %v506, %v510
    %v513 = vshrl.u32 %v365, 16
    %v515 = vrot.slane %v513, 4
    %v516 = vshll.u32 %v365, 16
    %v518 = vrot.slane %v516, 5
    %v519 = vor.u32 %v515, %v518
    %v520 = vrot.slane %v519, 4
    %v522 = vshll.u32 %v366, 16
    %v524 = vrot.slane %v522, 5
    %v525 = vsel %vm385, %v520, %v524
    %v527 = vshrl.u32 %v367, 16
    %v529 = vrot.slane %v527, 4
    %v530 = vshll.u32 %v367, 16
    %v532 = vrot.slane %v530, 5
    %v533 = vor.u32 %v529, %v532
    %v534 = vrot.slane %v533, 4
    %v536 = vshll.u32 %v368, 16
    %v538 = vrot.slane %v536, 5
    %v539 = vsel %vm385, %v534, %v538
    %v541 = vshrl.u32 %v369, 16
    %v543 = vrot.slane %v541, 4
    %v544 = vshll.u32 %v369, 16
    %v546 = vrot.slane %v544, 5
    %v547 = vor.u32 %v543, %v546
    %v548 = vrot.slane %v547, 4
    %v550 = vshll.u32 %v370, 16
    %v552 = vrot.slane %v550, 5
    %v553 = vsel %vm385, %v548, %v552
    %v555 = vshrl.u32 %v371, 16
    %v557 = vrot.slane %v555, 4
    %v558 = vshll.u32 %v371, 16
    %v560 = vrot.slane %v558, 5
    %v561 = vor.u32 %v557, %v560
    %v562 = vrot.slane %v561, 4
    %v564 = vshll.u32 %v372, 16
    %v566 = vrot.slane %v564, 5
    %v567 = vsel %vm385, %v562, %v566
    %v569 = vshrl.u32 %v373, 16
    %v571 = vrot.slane %v569, 4
    %v572 = vshll.u32 %v373, 16
    %v574 = vrot.slane %v572, 5
    %v575 = vor.u32 %v571, %v574
    %v576 = vrot.slane %v575, 4
    %v578 = vshll.u32 %v374, 16
    %v580 = vrot.slane %v578, 5
    %v581 = vsel %vm385, %v576, %v580
    %v583 = vshrl.u32 %v375, 16
    %v585 = vrot.slane %v583, 4
    %v586 = vshll.u32 %v375, 16
    %v588 = vrot.slane %v586, 5
    %v589 = vor.u32 %v585, %v588
    %v590 = vrot.slane %v589, 4
    %v592 = vshll.u32 %v376, 16
    %v594 = vrot.slane %v592, 5
    %v595 = vsel %vm385, %v590, %v594
    %v597 = vshrl.u32 %v377, 16
    %v599 = vrot.slane %v597, 4
    %v600 = vshll.u32 %v377, 16
    %v602 = vrot.slane %v600, 5
    %v603 = vor.u32 %v599, %v602
    %v604 = vrot.slane %v603, 4
    %v606 = vshll.u32 %v378, 16
    %v608 = vrot.slane %v606, 5
    %v609 = vsel %vm385, %v604, %v608
    %v610 = vld [vmem:[#allocation6] sm:$0xf]
    %v611 = vld [vmem:[#allocation6 + $0x4] sm:$0xf]
    %v612 = vld [vmem:[#allocation6 + $0x8] sm:$0xf]
    %v613 = vld [vmem:[#allocation6 + $0xc] sm:$0xf]
    %v614 = vld [vmem:[#allocation6 + $0x10] sm:$0xf]
    %v615 = vld [vmem:[#allocation6 + $0x14] sm:$0xf]
    %v616 = vld [vmem:[#allocation6 + $0x18] sm:$0xf]
    %v617 = vld [vmem:[#allocation6 + $0x1c] sm:$0xf]
    %v618 = vld [vmem:[#allocation6 + $0x20] sm:$0xf]
    %v619 = vld [vmem:[#allocation6 + $0x24] sm:$0xf]
    %v620 = vld [vmem:[#allocation6 + $0x28] sm:$0xf]
    %v621 = vld [vmem:[#allocation6 + $0x2c] sm:$0xf]
    %v622 = vld [vmem:[#allocation6 + $0x30] sm:$0xf]
    %v623 = vld [vmem:[#allocation6 + $0x34] sm:$0xf]
    %v624 = vld [vmem:[#allocation6 + $0x38] sm:$0xf]
    %v625 = vld [vmem:[#allocation6 + $0x3c] sm:$0xf]
    %v627 = vshrl.u32 %v359, 16
    %v629 = vrot.slane %v627, 4
    %v630 = vshll.u32 %v359, 16
    %v632 = vrot.slane %v630, 5
    %v633 = vor.u32 %v629, %v632
    %v634 = vrot.slane %v633, 4
    %v636 = vshll.u32 %v360, 16
    %v638 = vrot.slane %v636, 5
    %v639 = vsel %vm385, %v634, %v638
    %v641 = vshrl.u32 %v379, 16
    %v643 = vrot.slane %v641, 4
    %v644 = vshll.u32 %v379, 16
    %v646 = vrot.slane %v644, 5
    %v647 = vor.u32 %v643, %v646
    %v648 = vrot.slane %v647, 4
    %v650 = vshll.u32 %v380, 16
    %v652 = vrot.slane %v650, 5
    %v653 = vsel %vm385, %v648, %v652
    %s654 = scalar_lea.vmem [#allocation6], 192
    %v655 = vld [vmem:[%s654] sm:$0xf]
    %v656 = vld [vmem:[%s654 + $0x4] sm:$0xf]
    %v657 = vld [vmem:[%s654 + $0x8] sm:$0xf]
    %v658 = vld [vmem:[%s654 + $0xc] sm:$0xf]
    %v659 = vld [vmem:[%s654 + $0x10] sm:$0xf]
    %v660 = vld [vmem:[%s654 + $0x14] sm:$0xf]
    %v661 = vld [vmem:[%s654 + $0x18] sm:$0xf]
    %v662 = vld [vmem:[%s654 + $0x1c] sm:$0xf]
    %v663 = vld [vmem:[%s654 + $0x20] sm:$0xf]
    %v664 = vld [vmem:[%s654 + $0x24] sm:$0xf]
    %v665 = vld [vmem:[%s654 + $0x28] sm:$0xf]
    %v666 = vld [vmem:[%s654 + $0x2c] sm:$0xf]
    %v667 = vld [vmem:[%s654 + $0x30] sm:$0xf]
    %v668 = vld [vmem:[%s654 + $0x34] sm:$0xf]
    %v669 = vld [vmem:[%s654 + $0x38] sm:$0xf]
    %v670 = vld [vmem:[%s654 + $0x3c] sm:$0xf]
    %v671 = vunpack.c.l.b16 %v413
    %v672 = vunpack.c.l.b16 %v427
    %v673 = vunpack.c.l.b16 %v441
    %v674 = vunpack.c.l.b16 %v455
    %v675 = vunpack.c.l.b16 %v469
    %v676 = vunpack.c.l.b16 %v483
    %v677 = vunpack.c.l.b16 %v497
    %v678 = vunpack.c.l.b16 %v639
    %v679 = vunpack.c.l.b16 %v525
    %v680 = vunpack.c.l.b16 %v539
    %v681 = vunpack.c.l.b16 %v553
    %v682 = vunpack.c.l.b16 %v567
    %v683 = vunpack.c.l.b16 %v581
    %v684 = vunpack.c.l.b16 %v595
    %v685 = vunpack.c.l.b16 %v609
    %v686 = vunpack.c.l.b16 %v653
    %v687 = vpack.c.b16 %v672, %v671
    %v688 = vpack.c.b16 %v674, %v673
    %v689 = vpack.c.b16 %v676, %v675
    %v690 = vpack.c.b16 %v678, %v677
    %v691 = vpack.c.b16 %v680, %v679
    %v692 = vpack.c.b16 %v682, %v681
    %v693 = vpack.c.b16 %v684, %v683
    %v694 = vpack.c.b16 %v686, %v685
    %v719 = vunpack.c.l.b16 %v655
    %v720 = vunpack.c.l.b16 %v656
    %v721 = vunpack.c.l.b16 %v657
    %v722 = vunpack.c.l.b16 %v658
    %v723 = vunpack.c.l.b16 %v659
    %v724 = vunpack.c.l.b16 %v660
    %v725 = vunpack.c.l.b16 %v661
    %v726 = vunpack.c.l.b16 %v662
    %v727 = vunpack.c.l.b16 %v663
    %v728 = vunpack.c.l.b16 %v664
    %v729 = vunpack.c.l.b16 %v665
    %v730 = vunpack.c.l.b16 %v666
    %v731 = vunpack.c.l.b16 %v667
    %v732 = vunpack.c.l.b16 %v668
    %v733 = vunpack.c.l.b16 %v669
    %v734 = vunpack.c.l.b16 %v670
    %v735 = vpack.c.b16 %v720, %v719
    %v736 = vpack.c.b16 %v722, %v721
    %v737 = vpack.c.b16 %v724, %v723
    %v738 = vpack.c.b16 %v726, %v725
    %v739 = vpack.c.b16 %v728, %v727
    %v740 = vpack.c.b16 %v730, %v729
    %v741 = vpack.c.b16 %v732, %v731
    %v742 = vpack.c.b16 %v734, %v733
    %751 = vmatprep.subr.bf16.mxu0 0
    %752 = vmatpush1.bf16.msra.mxu0 %v735
    %753 = vmatprep.subr.bf16.mxu0 0
    %754 = vmatpush1.bf16.msra.mxu0 %v736
    %755 = vmatprep.subr.bf16.mxu0 0
    %756 = vmatpush1.bf16.msra.mxu0 %v737
    %757 = vmatprep.subr.bf16.mxu0 0
    %758 = vmatpush1.bf16.msra.mxu0 %v738
    %759 = vmatprep.subr.bf16.mxu0 0
    %760 = vmatpush1.bf16.msra.mxu0 %v739
    %761 = vmatprep.subr.bf16.mxu0 0
    %762 = vmatpush1.bf16.msra.mxu0 %v740
    %763 = vmatprep.subr.bf16.mxu0 0
    %764 = vmatpush1.bf16.msra.mxu0 %v741
    %765 = vmatprep.subr.bf16.mxu0 0
    %766 = vmatpush1.bf16.msra.mxu0 %v742
    %767 = vmatprep.subr.bf16.mxu0 0
    %768 = vmatpush1.bf16.msra.mxu0 0
    %769 = vmatprep.subr.bf16.mxu0 0
    %770 = vmatpush1.bf16.msra.mxu0 0
    %771 = vmatprep.subr.bf16.mxu0 0
    %772 = vmatpush1.bf16.msra.mxu0 0
    %773 = vmatprep.subr.bf16.mxu0 0
    %774 = vmatpush1.bf16.msra.mxu0 0
    %775 = vmatprep.subr.bf16.mxu0 0
    %776 = vmatpush1.bf16.msra.mxu0 0
    %777 = vmatprep.subr.bf16.mxu0 0
    %778 = vmatpush1.bf16.msra.mxu0 0
    %779 = vmatprep.subr.bf16.mxu0 0
    %780 = vmatpush1.bf16.msra.mxu0 0
    %781 = vmatprep.subr.bf16.mxu0 0
    %782 = vmatpush1.bf16.msra.mxu0 0
    %783 = vmatprep.mubr.bf16.mxu0 0
    %784 = vmatmul.mubr.bf16.gmra.mrb[0].mxu0 %v687
    %v785 = vpop.f32.mrb[0].mxu0
    %v786 = vadd.f32 0.0, %v785
    %v787 = vpop.f32.mrb[0].mxu0
    %v788 = vpop.f32.mrb[0].mxu0
    %v789 = vadd.f32 0.0, %v788
    %v790 = vpop.f32.mrb[0].mxu0
    %791 = vmatprep.mubr.bf16.mxu0 0
    %792 = vmatmul.mubr.bf16.gmra.mrb[0].mxu0 %v688
    %v793 = vpop.f32.mrb[0].mxu0
    %v794 = vadd.f32 0.0, %v793
    %v795 = vpop.f32.mrb[0].mxu0
    %v796 = vpop.f32.mrb[0].mxu0
    %v797 = vadd.f32 0.0, %v796
    %v798 = vpop.f32.mrb[0].mxu0
    %799 = vmatprep.mubr.bf16.mxu0 0
    %800 = vmatmul.mubr.bf16.gmra.mrb[0].mxu0 %v689
    %v801 = vpop.f32.mrb[0].mxu0
    %v802 = vadd.f32 0.0, %v801
    %v803 = vpop.f32.mrb[0].mxu0
    %v804 = vpop.f32.mrb[0].mxu0
    %v805 = vadd.f32 0.0, %v804
    %v806 = vpop.f32.mrb[0].mxu0
    %807 = vmatprep.mubr.bf16.mxu0 0
    %808 = vmatmul.mubr.bf16.gmra.mrb[0].mxu0 %v690
    %v809 = vpop.f32.mrb[0].mxu0
    %v810 = vadd.f32 0.0, %v809
    %v811 = vpop.f32.mrb[0].mxu0
    %v812 = vpop.f32.mrb[0].mxu0
    %v813 = vadd.f32 0.0, %v812
    %v814 = vpop.f32.mrb[0].mxu0
    %815 = vmatprep.mubr.bf16.mxu0 0
    %816 = vmatmul.mubr.bf16.gmra.mrb[0].mxu0 %v691
    %v817 = vpop.f32.mrb[0].mxu0
    %v818 = vadd.f32 0.0, %v817
    %v819 = vpop.f32.mrb[0].mxu0
    %v820 = vpop.f32.mrb[0].mxu0
    %v821 = vadd.f32 0.0, %v820
    %v822 = vpop.f32.mrb[0].mxu0
    %823 = vmatprep.mubr.bf16.mxu0 0
    %824 = vmatmul.mubr.bf16.gmra.mrb[0].mxu0 %v692
    %v825 = vpop.f32.mrb[0].mxu0
    %v826 = vadd.f32 0.0, %v825
    %v827 = vpop.f32.mrb[0].mxu0
    %v828 = vpop.f32.mrb[0].mxu0
    %v829 = vadd.f32 0.0, %v828
    %v830 = vpop.f32.mrb[0].mxu0
    %831 = vmatprep.mubr.bf16.mxu0 0
    %832 = vmatmul.mubr.bf16.gmra.mrb[0].mxu0 %v693
    %v833 = vpop.f32.mrb[0].mxu0
    %v834 = vadd.f32 0.0, %v833
    %v835 = vpop.f32.mrb[0].mxu0
    %v836 = vpop.f32.mrb[0].mxu0
    %v837 = vadd.f32 0.0, %v836
    %v838 = vpop.f32.mrb[0].mxu0
    %839 = vmatprep.mubr.bf16.mxu0 0
    %840 = vmatmul.mubr.bf16.gmra.mrb[0].mxu0 %v694
    %v841 = vpop.f32.mrb[0].mxu0
    %v842 = vadd.f32 0.0, %v841
    %v843 = vpop.f32.mrb[0].mxu0
    %v844 = vpop.f32.mrb[0].mxu0
    %v845 = vadd.f32 0.0, %v844
    %v846 = vpop.f32.mrb[0].mxu0
    %847 = vdwg.mxu0
    %v848 = vunpack.c.l.b16 %v399
    %v849 = vunpack.c.l.b16 %v511
    %v850 = vpack.c.b16 %v671, %v848
    %v851 = vpack.c.b16 %v673, %v672
    %v852 = vpack.c.b16 %v675, %v674
    %v853 = vpack.c.b16 %v677, %v676
    %v854 = vpack.c.b16 %v679, %v849
    %v855 = vpack.c.b16 %v681, %v680
    %v856 = vpack.c.b16 %v683, %v682
    %v857 = vpack.c.b16 %v685, %v684
    %v882 = vunpack.c.l.b16 %v610
    %v883 = vunpack.c.l.b16 %v611
    %v884 = vunpack.c.l.b16 %v612
    %v885 = vunpack.c.l.b16 %v613
    %v886 = vunpack.c.l.b16 %v614
    %v887 = vunpack.c.l.b16 %v615
    %v888 = vunpack.c.l.b16 %v616
    %v889 = vunpack.c.l.b16 %v617
    %v890 = vunpack.c.l.b16 %v618
    %v891 = vunpack.c.l.b16 %v619
    %v892 = vunpack.c.l.b16 %v620
    %v893 = vunpack.c.l.b16 %v621
    %v894 = vunpack.c.l.b16 %v622
    %v895 = vunpack.c.l.b16 %v623
    %v896 = vunpack.c.l.b16 %v624
    %v897 = vunpack.c.l.b16 %v625
    %v898 = vpack.c.b16 %v883, %v882
    %v899 = vpack.c.b16 %v885, %v884
    %v900 = vpack.c.b16 %v887, %v886
    %v901 = vpack.c.b16 %v889, %v888
    %v902 = vpack.c.b16 %v891, %v890
    %v903 = vpack.c.b16 %v893, %v892
    %v904 = vpack.c.b16 %v895, %v894
    %v905 = vpack.c.b16 %v897, %v896
    %914 = vmatprep.subr.bf16.mxu0 0
    %915 = vmatpush1.bf16.msra.mxu0 %v898
    %916 = vmatprep.subr.bf16.mxu0 0
    %917 = vmatpush1.bf16.msra.mxu0 %v899
    %918 = vmatprep.subr.bf16.mxu0 0
    %919 = vmatpush1.bf16.msra.mxu0 %v900
    %920 = vmatprep.subr.bf16.mxu0 0
    %921 = vmatpush1.bf16.msra.mxu0 %v901
    %922 = vmatprep.subr.bf16.mxu0 0
    %923 = vmatpush1.bf16.msra.mxu0 %v902
    %924 = vmatprep.subr.bf16.mxu0 0
    %925 = vmatpush1.bf16.msra.mxu0 %v903
    %926 = vmatprep.subr.bf16.mxu0 0
    %927 = vmatpush1.bf16.msra.mxu0 %v904
    %928 = vmatprep.subr.bf16.mxu0 0
    %929 = vmatpush1.bf16.msra.mxu0 %v905
    %930 = vmatprep.subr.bf16.mxu0 0
    %931 = vmatpush1.bf16.msra.mxu0 0
    %932 = vmatprep.subr.bf16.mxu0 0
    %933 = vmatpush1.bf16.msra.mxu0 0
    %934 = vmatprep.subr.bf16.mxu0 0
    %935 = vmatpush1.bf16.msra.mxu0 0
    %936 = vmatprep.subr.bf16.mxu0 0
    %937 = vmatpush1.bf16.msra.mxu0 0
    %938 = vmatprep.subr.bf16.mxu0 0
    %939 = vmatpush1.bf16.msra.mxu0 0
    %940 = vmatprep.subr.bf16.mxu0 0
    %941 = vmatpush1.bf16.msra.mxu0 0
    %942 = vmatprep.subr.bf16.mxu0 0
    %943 = vmatpush1.bf16.msra.mxu0 0
    %944 = vmatprep.subr.bf16.mxu0 0
    %945 = vmatpush1.bf16.msra.mxu0 0
    %946 = vmatprep.mubr.bf16.mxu0 0
    %947 = vmatmul.mubr.bf16.gmra.mrb[0].mxu0 %v850
    %v948 = vpop.f32.mrb[0].mxu0
    %v949 = vadd.f32 %v786, %v948
    %v950 = vpop.f32.mrb[0].mxu0
    %v951 = vpop.f32.mrb[0].mxu0
    %v952 = vadd.f32 %v789, %v951
    %v953 = vpop.f32.mrb[0].mxu0
    %954 = vmatprep.mubr.bf16.mxu0 0
    %955 = vmatmul.mubr.bf16.gmra.mrb[0].mxu0 %v851
    %v956 = vpop.f32.mrb[0].mxu0
    %v957 = vadd.f32 %v794, %v956
    %v958 = vpop.f32.mrb[0].mxu0
    %v959 = vpop.f32.mrb[0].mxu0
    %v960 = vadd.f32 %v797, %v959
    %v961 = vpop.f32.mrb[0].mxu0
    %962 = vmatprep.mubr.bf16.mxu0 0
    %963 = vmatmul.mubr.bf16.gmra.mrb[0].mxu0 %v852
    %v964 = vpop.f32.mrb[0].mxu0
    %v965 = vadd.f32 %v802, %v964
    %v966 = vpop.f32.mrb[0].mxu0
    %v967 = vpop.f32.mrb[0].mxu0
    %v968 = vadd.f32 %v805, %v967
    %v969 = vpop.f32.mrb[0].mxu0
    %970 = vmatprep.mubr.bf16.mxu0 0
    %971 = vmatmul.mubr.bf16.gmra.mrb[0].mxu0 %v853
    %v972 = vpop.f32.mrb[0].mxu0
    %v973 = vadd.f32 %v810, %v972
    %v974 = vpop.f32.mrb[0].mxu0
    %v975 = vpop.f32.mrb[0].mxu0
    %v976 = vadd.f32 %v813, %v975
    %v977 = vpop.f32.mrb[0].mxu0
    %978 = vmatprep.mubr.bf16.mxu0 0
    %979 = vmatmul.mubr.bf16.gmra.mrb[0].mxu0 %v854
    %v980 = vpop.f32.mrb[0].mxu0
    %v981 = vadd.f32 %v818, %v980
    %v982 = vpop.f32.mrb[0].mxu0
    %v983 = vpop.f32.mrb[0].mxu0
    %v984 = vadd.f32 %v821, %v983
    %v985 = vpop.f32.mrb[0].mxu0
    %986 = vmatprep.mubr.bf16.mxu0 0
    %987 = vmatmul.mubr.bf16.gmra.mrb[0].mxu0 %v855
    %v988 = vpop.f32.mrb[0].mxu0
    %v989 = vadd.f32 %v826, %v988
    %v990 = vpop.f32.mrb[0].mxu0
    %v991 = vpop.f32.mrb[0].mxu0
    %v992 = vadd.f32 %v829, %v991
    %v993 = vpop.f32.mrb[0].mxu0
    %994 = vmatprep.mubr.bf16.mxu0 0
    %995 = vmatmul.mubr.bf16.gmra.mrb[0].mxu0 %v856
    %v996 = vpop.f32.mrb[0].mxu0
    %v997 = vadd.f32 %v834, %v996
    %v998 = vpop.f32.mrb[0].mxu0
    %v999 = vpop.f32.mrb[0].mxu0
    %v1000 = vadd.f32 %v837, %v999
    %v1001 = vpop.f32.mrb[0].mxu0
    %1002 = vmatprep.mubr.bf16.mxu0 0
    %1003 = vmatmul.mubr.bf16.gmra.mrb[0].mxu0 %v857
    %v1004 = vpop.f32.mrb[0].mxu0
    %v1005 = vadd.f32 %v842, %v1004
    %v1006 = vpop.f32.mrb[0].mxu0
    %v1007 = vpop.f32.mrb[0].mxu0
    %v1008 = vadd.f32 %v845, %v1007
    %v1009 = vpop.f32.mrb[0].mxu0
    %1010 = vdwg.mxu0
    %v1012 = vshrl.u32 %v361, 16
    %v1014 = vrot.slane %v1012, 4
    %v1015 = vshll.u32 %v361, 16
    %v1017 = vrot.slane %v1015, 5
    %v1018 = vor.u32 %v1014, %v1017
    %v1019 = vrot.slane %v1018, 4
    %v1021 = vshll.u32 %v362, 16
    %v1023 = vrot.slane %v1021, 5
    %v1024 = vsel %vm385, %v1019, %v1023
    %v1026 = vshrl.u32 %v381, 16
    %v1028 = vrot.slane %v1026, 4
    %v1029 = vshll.u32 %v381, 16
    %v1031 = vrot.slane %v1029, 5
    %v1032 = vor.u32 %v1028, %v1031
    %v1033 = vrot.slane %v1032, 4
    %v1035 = vshll.u32 %v382, 16
    %v1037 = vrot.slane %v1035, 5
    %v1038 = vsel %vm385, %v1033, %v1037
    %s1039 = scalar_lea.vmem [#allocation6], 384
    %v1040 = vld [vmem:[%s1039] sm:$0xf]
    %v1041 = vld [vmem:[%s1039 + $0x4] sm:$0xf]
    %v1042 = vld [vmem:[%s1039 + $0x8] sm:$0xf]
    %v1043 = vld [vmem:[%s1039 + $0xc] sm:$0xf]
    %v1044 = vld [vmem:[%s1039 + $0x10] sm:$0xf]
    %v1045 = vld [vmem:[%s1039 + $0x14] sm:$0xf]
    %v1046 = vld [vmem:[%s1039 + $0x18] sm:$0xf]
    %v1047 = vld [vmem:[%s1039 + $0x1c] sm:$0xf]
    %v1048 = vld [vmem:[%s1039 + $0x20] sm:$0xf]
    %v1049 = vld [vmem:[%s1039 + $0x24] sm:$0xf]
    %v1050 = vld [vmem:[%s1039 + $0x28] sm:$0xf]
    %v1051 = vld [vmem:[%s1039 + $0x2c] sm:$0xf]
    %v1052 = vld [vmem:[%s1039 + $0x30] sm:$0xf]
    %v1053 = vld [vmem:[%s1039 + $0x34] sm:$0xf]
    %v1054 = vld [vmem:[%s1039 + $0x38] sm:$0xf]
    %v1055 = vld [vmem:[%s1039 + $0x3c] sm:$0xf]
    %v1056 = vunpack.c.l.b16 %v1024
    %v1057 = vunpack.c.l.b16 %v1038
    %v1058 = vpack.c.b16 %v1056, %v678
    %v1059 = vpack.c.b16 %v1057, %v686
    %v1078 = vunpack.c.l.b16 %v1040
    %v1079 = vunpack.c.l.b16 %v1041
    %v1080 = vunpack.c.l.b16 %v1042
    %v1081 = vunpack.c.l.b16 %v1043
    %v1082 = vunpack.c.l.b16 %v1044
    %v1083 = vunpack.c.l.b16 %v1045
    %v1084 = vunpack.c.l.b16 %v1046
    %v1085 = vunpack.c.l.b16 %v1047
    %v1086 = vunpack.c.l.b16 %v1048
    %v1087 = vunpack.c.l.b16 %v1049
    %v1088 = vunpack.c.l.b16 %v1050
    %v1089 = vunpack.c.l.b16 %v1051
    %v1090 = vunpack.c.l.b16 %v1052
    %v1091 = vunpack.c.l.b16 %v1053
    %v1092 = vunpack.c.l.b16 %v1054
    %v1093 = vunpack.c.l.b16 %v1055
    %v1094 = vpack.c.b16 %v1079, %v1078
    %v1095 = vpack.c.b16 %v1081, %v1080
    %v1096 = vpack.c.b16 %v1083, %v1082
    %v1097 = vpack.c.b16 %v1085, %v1084
    %v1098 = vpack.c.b16 %v1087, %v1086
    %v1099 = vpack.c.b16 %v1089, %v1088
    %v1100 = vpack.c.b16 %v1091, %v1090
    %v1101 = vpack.c.b16 %v1093, %v1092
    %1110 = vmatprep.subr.bf16.mxu0 0
    %1111 = vmatpush1.bf16.msra.mxu0 %v1094
    %1112 = vmatprep.subr.bf16.mxu0 0
    %1113 = vmatpush1.bf16.msra.mxu0 %v1095
    %1114 = vmatprep.subr.bf16.mxu0 0
    %1115 = vmatpush1.bf16.msra.mxu0 %v1096
    %1116 = vmatprep.subr.bf16.mxu0 0
    %1117 = vmatpush1.bf16.msra.mxu0 %v1097
    %1118 = vmatprep.subr.bf16.mxu0 0
    %1119 = vmatpush1.bf16.msra.mxu0 %v1098
    %1120 = vmatprep.subr.bf16.mxu0 0
    %1121 = vmatpush1.bf16.msra.mxu0 %v1099
    %1122 = vmatprep.subr.bf16.mxu0 0
    %1123 = vmatpush1.bf16.msra.mxu0 %v1100
    %1124 = vmatprep.subr.bf16.mxu0 0
    %1125 = vmatpush1.bf16.msra.mxu0 %v1101
    %1126 = vmatprep.subr.bf16.mxu0 0
    %1127 = vmatpush1.bf16.msra.mxu0 0
    %1128 = vmatprep.subr.bf16.mxu0 0
    %1129 = vmatpush1.bf16.msra.mxu0 0
    %1130 = vmatprep.subr.bf16.mxu0 0
    %1131 = vmatpush1.bf16.msra.mxu0 0
    %1132 = vmatprep.subr.bf16.mxu0 0
    %1133 = vmatpush1.bf16.msra.mxu0 0
    %1134 = vmatprep.subr.bf16.mxu0 0
    %1135 = vmatpush1.bf16.msra.mxu0 0
    %1136 = vmatprep.subr.bf16.mxu0 0
    %1137 = vmatpush1.bf16.msra.mxu0 0
    %1138 = vmatprep.subr.bf16.mxu0 0
    %1139 = vmatpush1.bf16.msra.mxu0 0
    %1140 = vmatprep.subr.bf16.mxu0 0
    %1141 = vmatpush1.bf16.msra.mxu0 0
    %1142 = vmatprep.mubr.bf16.mxu0 0
    %1143 = vmatmul.mubr.bf16.gmra.mrb[0].mxu0 %v851
    %v1144 = vpop.f32.mrb[0].mxu0
    %v1145 = vadd.f32 0.0, %v1144
    %v1146 = vpop.f32.mrb[0].mxu0
    %v1147 = vpop.f32.mrb[0].mxu0
    %v1148 = vadd.f32 0.0, %v1147
    %v1149 = vpop.f32.mrb[0].mxu0
    %1150 = vmatprep.mubr.bf16.mxu0 0
    %1151 = vmatmul.mubr.bf16.gmra.mrb[0].mxu0 %v852
    %v1152 = vpop.f32.mrb[0].mxu0
    %v1153 = vadd.f32 0.0, %v1152
    %v1154 = vpop.f32.mrb[0].mxu0
    %v1155 = vpop.f32.mrb[0].mxu0
    %v1156 = vadd.f32 0.0, %v1155
    %v1157 = vpop.f32.mrb[0].mxu0
    %1158 = vmatprep.mubr.bf16.mxu0 0
    %1159 = vmatmul.mubr.bf16.gmra.mrb[0].mxu0 %v853
    %v1160 = vpop.f32.mrb[0].mxu0
    %v1161 = vadd.f32 0.0, %v1160
    %v1162 = vpop.f32.mrb[0].mxu0
    %v1163 = vpop.f32.mrb[0].mxu0
    %v1164 = vadd.f32 0.0, %v1163
    %v1165 = vpop.f32.mrb[0].mxu0
    %1166 = vmatprep.mubr.bf16.mxu0 0
    %1167 = vmatmul.mubr.bf16.gmra.mrb[0].mxu0 %v1058
    %v1168 = vpop.f32.mrb[0].mxu0
    %v1169 = vadd.f32 0.0, %v1168
    %v1170 = vpop.f32.mrb[0].mxu0
    %v1171 = vpop.f32.mrb[0].mxu0
    %v1172 = vadd.f32 0.0, %v1171
    %v1173 = vpop.f32.mrb[0].mxu0
    %1174 = vmatprep.mubr.bf16.mxu0 0
    %1175 = vmatmul.mubr.bf16.gmra.mrb[0].mxu0 %v855
    %v1176 = vpop.f32.mrb[0].mxu0
    %v1177 = vadd.f32 0.0, %v1176
    %v1178 = vpop.f32.mrb[0].mxu0
    %v1179 = vpop.f32.mrb[0].mxu0
    %v1180 = vadd.f32 0.0, %v1179
    %v1181 = vpop.f32.mrb[0].mxu0
    %1182 = vmatprep.mubr.bf16.mxu0 0
    %1183 = vmatmul.mubr.bf16.gmra.mrb[0].mxu0 %v856
    %v1184 = vpop.f32.mrb[0].mxu0
    %v1185 = vadd.f32 0.0, %v1184
    %v1186 = vpop.f32.mrb[0].mxu0
    %v1187 = vpop.f32.mrb[0].mxu0
    %v1188 = vadd.f32 0.0, %v1187
    %v1189 = vpop.f32.mrb[0].mxu0
    %1190 = vmatprep.mubr.bf16.mxu0 0
    %1191 = vmatmul.mubr.bf16.gmra.mrb[0].mxu0 %v857
    %v1192 = vpop.f32.mrb[0].mxu0
    %v1193 = vadd.f32 0.0, %v1192
    %v1194 = vpop.f32.mrb[0].mxu0
    %v1195 = vpop.f32.mrb[0].mxu0
    %v1196 = vadd.f32 0.0, %v1195
    %v1197 = vpop.f32.mrb[0].mxu0
    %1198 = vmatprep.mubr.bf16.mxu0 0
    %1199 = vmatmul.mubr.bf16.gmra.mrb[0].mxu0 %v1059
    %v1200 = vpop.f32.mrb[0].mxu0
    %v1201 = vadd.f32 0.0, %v1200
    %v1202 = vpop.f32.mrb[0].mxu0
    %v1203 = vpop.f32.mrb[0].mxu0
    %v1204 = vadd.f32 0.0, %v1203
    %v1205 = vpop.f32.mrb[0].mxu0
    %1206 = vdwg.mxu0
    %v1207 = vadd.f32 %v949, %v1145
    %v1208 = vadd.f32 %v952, %v1148
    %v1209 = vadd.f32 %v957, %v1153
    %v1210 = vadd.f32 %v960, %v1156
    %v1211 = vadd.f32 %v965, %v1161
    %v1212 = vadd.f32 %v968, %v1164
    %v1213 = vadd.f32 %v973, %v1169
    %v1214 = vadd.f32 %v976, %v1172
    %v1215 = vadd.f32 %v981, %v1177
    %v1216 = vadd.f32 %v984, %v1180
    %v1217 = vadd.f32 %v989, %v1185
    %v1218 = vadd.f32 %v992, %v1188
    %v1219 = vadd.f32 %v997, %v1193
    %v1220 = vadd.f32 %v1000, %v1196
    %v1221 = vadd.f32 %v1005, %v1201
    %v1222 = vadd.f32 %v1008, %v1204
    %v1223 = vld [vmem:[#allocation2 + $0x8] sm:$0xe]
    %v1224 = vld [vmem:[#allocation2 + $0x10] sm:$0xe]
    %v1225 = vld [vmem:[#allocation2 + $0x18] sm:$0xe]
    %v1226 = vld [vmem:[#allocation2 + $0x20] sm:$0xe]
    %v1227 = vld [vmem:[#allocation2 + $0x28] sm:$0xe]
    %v1228 = vld [vmem:[#allocation2 + $0x30] sm:$0xe]
    %v1229 = vld [vmem:[#allocation2 + $0x38] sm:$0xe]
    %v1230 = vld [vmem:[#allocation2 + $0x40] sm:$0xe]
    %v1231 = vld [vmem:[#allocation2 + $0x48] sm:$0xe]
    %v1232 = vld [vmem:[#allocation2 + $0x50] sm:$0xe]
    %v1233 = vld [vmem:[#allocation2 + $0x60] sm:$0xe]
    %v1234 = vld [vmem:[#allocation2 + $0x68] sm:$0xe]
    %v1235 = vld [vmem:[#allocation2 + $0x70] sm:$0xe]
    %v1236 = vld [vmem:[#allocation2 + $0x78] sm:$0xe]
    %v1237 = vld [vmem:[#allocation2 + $0x80] sm:$0xe]
    %v1238 = vld [vmem:[#allocation2 + $0x88] sm:$0xe]
    %v1239 = vld [vmem:[#allocation2 + $0x90] sm:$0xe]
    %v1240 = vld [vmem:[#allocation2 + $0x98] sm:$0xe]
    %v1241 = vld [vmem:[#allocation2 + $0xa0] sm:$0xe]
    %v1242 = vld [vmem:[#allocation2 + $0xa8] sm:$0xe]
    %vm1275 = vcmask 1042432
    %vm1276 = vcmask 1046532
    %vm1277 = vmor %vm1275, %vm1276
    %v1278 = vrot.slane %v1223, 5
    %v1279 = vrot.slane %v1278, 4
    %v1280 = vrot.slane %v344, 5
    %v1281 = vsel %vm1277, %v1279, %v1280
    %v1282 = vrot.slane %v1224, 5
    %v1283 = vrot.slane %v1282, 4
    %v1284 = vrot.slane %v346, 5
    %v1285 = vsel %vm1277, %v1283, %v1284
    %v1286 = vrot.slane %v1225, 5
    %v1287 = vrot.slane %v1286, 4
    %v1288 = vrot.slane %v348, 5
    %v1289 = vsel %vm1277, %v1287, %v1288
    %v1290 = vrot.slane %v1226, 5
    %v1291 = vrot.slane %v1290, 4
    %v1292 = vrot.slane %v350, 5
    %v1293 = vsel %vm1277, %v1291, %v1292
    %v1294 = vrot.slane %v1227, 5
    %v1295 = vrot.slane %v1294, 4
    %v1296 = vrot.slane %v352, 5
    %v1297 = vsel %vm1277, %v1295, %v1296
    %v1298 = vrot.slane %v1228, 5
    %v1299 = vrot.slane %v1298, 4
    %v1300 = vrot.slane %v354, 5
    %v1301 = vsel %vm1277, %v1299, %v1300
    %v1302 = vrot.slane %v1229, 5
    %v1303 = vrot.slane %v1302, 4
    %v1304 = vrot.slane %v356, 5
    %v1305 = vsel %vm1277, %v1303, %v1304
    %v1306 = vrot.slane %v1230, 5
    %v1307 = vrot.slane %v1306, 4
    %v1308 = vrot.slane %v358, 5
    %v1309 = vsel %vm1277, %v1307, %v1308
    %v1310 = vrot.slane %v1233, 5
    %v1311 = vrot.slane %v1310, 4
    %v1312 = vrot.slane %v364, 5
    %v1313 = vsel %vm1277, %v1311, %v1312
    %v1314 = vrot.slane %v1234, 5
    %v1315 = vrot.slane %v1314, 4
    %v1316 = vrot.slane %v366, 5
    %v1317 = vsel %vm1277, %v1315, %v1316
    %v1318 = vrot.slane %v1235, 5
    %v1319 = vrot.slane %v1318, 4
    %v1320 = vrot.slane %v368, 5
    %v1321 = vsel %vm1277, %v1319, %v1320
    %v1322 = vrot.slane %v1236, 5
    %v1323 = vrot.slane %v1322, 4
    %v1324 = vrot.slane %v370, 5
    %v1325 = vsel %vm1277, %v1323, %v1324
    %v1326 = vrot.slane %v1237, 5
    %v1327 = vrot.slane %v1326, 4
    %v1328 = vrot.slane %v372, 5
    %v1329 = vsel %vm1277, %v1327, %v1328
    %v1330 = vrot.slane %v1238, 5
    %v1331 = vrot.slane %v1330, 4
    %v1332 = vrot.slane %v374, 5
    %v1333 = vsel %vm1277, %v1331, %v1332
    %v1334 = vrot.slane %v1239, 5
    %v1335 = vrot.slane %v1334, 4
    %v1336 = vrot.slane %v376, 5
    %v1337 = vsel %vm1277, %v1335, %v1336
    %v1338 = vrot.slane %v1240, 5
    %v1339 = vrot.slane %v1338, 4
    %v1340 = vrot.slane %v378, 5
    %v1341 = vsel %vm1277, %v1339, %v1340
    %s1342 = scalar_lea.vmem [#allocation6], 64
    %v1343 = vld [vmem:[%s1342] sm:$0xf]
    %v1344 = vld [vmem:[%s1342 + $0x4] sm:$0xf]
    %v1345 = vld [vmem:[%s1342 + $0x8] sm:$0xf]
    %v1346 = vld [vmem:[%s1342 + $0xc] sm:$0xf]
    %v1347 = vld [vmem:[%s1342 + $0x10] sm:$0xf]
    %v1348 = vld [vmem:[%s1342 + $0x14] sm:$0xf]
    %v1349 = vld [vmem:[%s1342 + $0x18] sm:$0xf]
    %v1350 = vld [vmem:[%s1342 + $0x1c] sm:$0xf]
    %v1351 = vld [vmem:[%s1342 + $0x20] sm:$0xf]
    %v1352 = vld [vmem:[%s1342 + $0x24] sm:$0xf]
    %v1353 = vld [vmem:[%s1342 + $0x28] sm:$0xf]
    %v1354 = vld [vmem:[%s1342 + $0x2c] sm:$0xf]
    %v1355 = vld [vmem:[%s1342 + $0x30] sm:$0xf]
    %v1356 = vld [vmem:[%s1342 + $0x34] sm:$0xf]
    %v1357 = vld [vmem:[%s1342 + $0x38] sm:$0xf]
    %v1358 = vld [vmem:[%s1342 + $0x3c] sm:$0xf]
    %v1359 = vunpack.c.l.b16 %v1281
    %v1360 = vunpack.c.l.b16 %v1285
    %v1361 = vunpack.c.l.b16 %v1289
    %v1362 = vunpack.c.l.b16 %v1293
    %v1363 = vunpack.c.l.b16 %v1297
    %v1364 = vunpack.c.l.b16 %v1301
    %v1365 = vunpack.c.l.b16 %v1305
    %v1366 = vunpack.c.l.b16 %v1309
    %v1367 = vunpack.c.l.b16 %v1313
    %v1368 = vunpack.c.l.b16 %v1317
    %v1369 = vunpack.c.l.b16 %v1321
    %v1370 = vunpack.c.l.b16 %v1325
    %v1371 = vunpack.c.l.b16 %v1329
    %v1372 = vunpack.c.l.b16 %v1333
    %v1373 = vunpack.c.l.b16 %v1337
    %v1374 = vunpack.c.l.b16 %v1341
    %v1375 = vpack.c.b16 %v1360, %v1359
    %v1376 = vpack.c.b16 %v1362, %v1361
    %v1377 = vpack.c.b16 %v1364, %v1363
    %v1378 = vpack.c.b16 %v1366, %v1365
    %v1379 = vpack.c.b16 %v1368, %v1367
    %v1380 = vpack.c.b16 %v1370, %v1369
    %v1381 = vpack.c.b16 %v1372, %v1371
    %v1382 = vpack.c.b16 %v1374, %v1373
    %v1407 = vunpack.c.l.b16 %v1343
    %v1408 = vunpack.c.l.b16 %v1344
    %v1409 = vunpack.c.l.b16 %v1345
    %v1410 = vunpack.c.l.b16 %v1346
    %v1411 = vunpack.c.l.b16 %v1347
    %v1412 = vunpack.c.l.b16 %v1348
    %v1413 = vunpack.c.l.b16 %v1349
    %v1414 = vunpack.c.l.b16 %v1350
    %v1415 = vunpack.c.l.b16 %v1351
    %v1416 = vunpack.c.l.b16 %v1352
    %v1417 = vunpack.c.l.b16 %v1353
    %v1418 = vunpack.c.l.b16 %v1354
    %v1419 = vunpack.c.l.b16 %v1355
    %v1420 = vunpack.c.l.b16 %v1356
    %v1421 = vunpack.c.l.b16 %v1357
    %v1422 = vunpack.c.l.b16 %v1358
    %v1423 = vpack.c.b16 %v1408, %v1407
    %v1424 = vpack.c.b16 %v1410, %v1409
    %v1425 = vpack.c.b16 %v1412, %v1411
    %v1426 = vpack.c.b16 %v1414, %v1413
    %v1427 = vpack.c.b16 %v1416, %v1415
    %v1428 = vpack.c.b16 %v1418, %v1417
    %v1429 = vpack.c.b16 %v1420, %v1419
    %v1430 = vpack.c.b16 %v1422, %v1421
    %1439 = vmatprep.subr.bf16.mxu0 0
    %1440 = vmatpush1.bf16.msra.mxu0 %v1423
    %1441 = vmatprep.subr.bf16.mxu0 0
    %1442 = vmatpush1.bf16.msra.mxu0 %v1424
    %1443 = vmatprep.subr.bf16.mxu0 0
    %1444 = vmatpush1.bf16.msra.mxu0 %v1425
    %1445 = vmatprep.subr.bf16.mxu0 0
    %1446 = vmatpush1.bf16.msra.mxu0 %v1426
    %1447 = vmatprep.subr.bf16.mxu0 0
    %1448 = vmatpush1.bf16.msra.mxu0 %v1427
    %1449 = vmatprep.subr.bf16.mxu0 0
    %1450 = vmatpush1.bf16.msra.mxu0 %v1428
    %1451 = vmatprep.subr.bf16.mxu0 0
    %1452 = vmatpush1.bf16.msra.mxu0 %v1429
    %1453 = vmatprep.subr.bf16.mxu0 0
    %1454 = vmatpush1.bf16.msra.mxu0 %v1430
    %1455 = vmatprep.subr.bf16.mxu0 0
    %1456 = vmatpush1.bf16.msra.mxu0 0
    %1457 = vmatprep.subr.bf16.mxu0 0
    %1458 = vmatpush1.bf16.msra.mxu0 0
    %1459 = vmatprep.subr.bf16.mxu0 0
    %1460 = vmatpush1.bf16.msra.mxu0 0
    %1461 = vmatprep.subr.bf16.mxu0 0
    %1462 = vmatpush1.bf16.msra.mxu0 0
    %1463 = vmatprep.subr.bf16.mxu0 0
    %1464 = vmatpush1.bf16.msra.mxu0 0
    %1465 = vmatprep.subr.bf16.mxu0 0
    %1466 = vmatpush1.bf16.msra.mxu0 0
    %1467 = vmatprep.subr.bf16.mxu0 0
    %1468 = vmatpush1.bf16.msra.mxu0 0
    %1469 = vmatprep.subr.bf16.mxu0 0
    %1470 = vmatpush1.bf16.msra.mxu0 0
    %1471 = vmatprep.mubr.bf16.mxu0 0
    %1472 = vmatmul.mubr.bf16.gmra.mrb[0].mxu0 %v1375
    %v1473 = vpop.f32.mrb[0].mxu0
    %v1474 = vadd.f32 0.0, %v1473
    %v1475 = vpop.f32.mrb[0].mxu0
    %v1476 = vpop.f32.mrb[0].mxu0
    %v1477 = vadd.f32 0.0, %v1476
    %v1478 = vpop.f32.mrb[0].mxu0
    %1479 = vmatprep.mubr.bf16.mxu0 0
    %1480 = vmatmul.mubr.bf16.gmra.mrb[0].mxu0 %v1376
    %v1481 = vpop.f32.mrb[0].mxu0
    %v1482 = vadd.f32 0.0, %v1481
    %v1483 = vpop.f32.mrb[0].mxu0
    %v1484 = vpop.f32.mrb[0].mxu0
    %v1485 = vadd.f32 0.0, %v1484
    %v1486 = vpop.f32.mrb[0].mxu0
    %1487 = vmatprep.mubr.bf16.mxu0 0
    %1488 = vmatmul.mubr.bf16.gmra.mrb[0].mxu0 %v1377
    %v1489 = vpop.f32.mrb[0].mxu0
    %v1490 = vadd.f32 0.0, %v1489
    %v1491 = vpop.f32.mrb[0].mxu0
    %v1492 = vpop.f32.mrb[0].mxu0
    %v1493 = vadd.f32 0.0, %v1492
    %v1494 = vpop.f32.mrb[0].mxu0
    %1495 = vmatprep.mubr.bf16.mxu0 0
    %1496 = vmatmul.mubr.bf16.gmra.mrb[0].mxu0 %v1378
    %v1497 = vpop.f32.mrb[0].mxu0
    %v1498 = vadd.f32 0.0, %v1497
    %v1499 = vpop.f32.mrb[0].mxu0
    %v1500 = vpop.f32.mrb[0].mxu0
    %v1501 = vadd.f32 0.0, %v1500
    %v1502 = vpop.f32.mrb[0].mxu0
    %1503 = vmatprep.mubr.bf16.mxu0 0
    %1504 = vmatmul.mubr.bf16.gmra.mrb[0].mxu0 %v1379
    %v1505 = vpop.f32.mrb[0].mxu0
    %v1506 = vadd.f32 0.0, %v1505
    %v1507 = vpop.f32.mrb[0].mxu0
    %v1508 = vpop.f32.mrb[0].mxu0
    %v1509 = vadd.f32 0.0, %v1508
    %v1510 = vpop.f32.mrb[0].mxu0
    %1511 = vmatprep.mubr.bf16.mxu0 0
    %1512 = vmatmul.mubr.bf16.gmra.mrb[0].mxu0 %v1380
    %v1513 = vpop.f32.mrb[0].mxu0
    %v1514 = vadd.f32 0.0, %v1513
    %v1515 = vpop.f32.mrb[0].mxu0
    %v1516 = vpop.f32.mrb[0].mxu0
    %v1517 = vadd.f32 0.0, %v1516
    %v1518 = vpop.f32.mrb[0].mxu0
    %1519 = vmatprep.mubr.bf16.mxu0 0
    %1520 = vmatmul.mubr.bf16.gmra.mrb[0].mxu0 %v1381
    %v1521 = vpop.f32.mrb[0].mxu0
    %v1522 = vadd.f32 0.0, %v1521
    %v1523 = vpop.f32.mrb[0].mxu0
    %v1524 = vpop.f32.mrb[0].mxu0
    %v1525 = vadd.f32 0.0, %v1524
    %v1526 = vpop.f32.mrb[0].mxu0
    %1527 = vmatprep.mubr.bf16.mxu0 0
    %1528 = vmatmul.mubr.bf16.gmra.mrb[0].mxu0 %v1382
    %v1529 = vpop.f32.mrb[0].mxu0
    %v1530 = vadd.f32 0.0, %v1529
    %v1531 = vpop.f32.mrb[0].mxu0
    %v1532 = vpop.f32.mrb[0].mxu0
    %v1533 = vadd.f32 0.0, %v1532
    %v1534 = vpop.f32.mrb[0].mxu0
    %1535 = vdwg.mxu0
    %v1536 = vadd.f32 %v1207, %v1474
    %v1537 = vadd.f32 %v1208, %v1477
    %v1538 = vadd.f32 %v1209, %v1482
    %v1539 = vadd.f32 %v1210, %v1485
    %v1540 = vadd.f32 %v1211, %v1490
    %v1541 = vadd.f32 %v1212, %v1493
    %v1542 = vadd.f32 %v1213, %v1498
    %v1543 = vadd.f32 %v1214, %v1501
    %v1544 = vadd.f32 %v1215, %v1506
    %v1545 = vadd.f32 %v1216, %v1509
    %v1546 = vadd.f32 %v1217, %v1514
    %v1547 = vadd.f32 %v1218, %v1517
    %v1548 = vadd.f32 %v1219, %v1522
    %v1549 = vadd.f32 %v1220, %v1525
    %v1550 = vadd.f32 %v1221, %v1530
    %v1551 = vadd.f32 %v1222, %v1533
    %v1556 = vrot.slane %v1231, 5
    %v1557 = vrot.slane %v1556, 4
    %v1558 = vrot.slane %v360, 5
    %v1559 = vsel %vm1277, %v1557, %v1558
    %v1560 = vrot.slane %v1241, 5
    %v1561 = vrot.slane %v1560, 4
    %v1562 = vrot.slane %v380, 5
    %v1563 = vsel %vm1277, %v1561, %v1562
    %s1564 = scalar_lea.vmem [#allocation6], 256
    %v1565 = vld [vmem:[%s1564] sm:$0xf]
    %v1566 = vld [vmem:[%s1564 + $0x4] sm:$0xf]
    %v1567 = vld [vmem:[%s1564 + $0x8] sm:$0xf]
    %v1568 = vld [vmem:[%s1564 + $0xc] sm:$0xf]
    %v1569 = vld [vmem:[%s1564 + $0x10] sm:$0xf]
    %v1570 = vld [vmem:[%s1564 + $0x14] sm:$0xf]
    %v1571 = vld [vmem:[%s1564 + $0x18] sm:$0xf]
    %v1572 = vld [vmem:[%s1564 + $0x1c] sm:$0xf]
    %v1573 = vld [vmem:[%s1564 + $0x20] sm:$0xf]
    %v1574 = vld [vmem:[%s1564 + $0x24] sm:$0xf]
    %v1575 = vld [vmem:[%s1564 + $0x28] sm:$0xf]
    %v1576 = vld [vmem:[%s1564 + $0x2c] sm:$0xf]
    %v1577 = vld [vmem:[%s1564 + $0x30] sm:$0xf]
    %v1578 = vld [vmem:[%s1564 + $0x34] sm:$0xf]
    %v1579 = vld [vmem:[%s1564 + $0x38] sm:$0xf]
    %v1580 = vld [vmem:[%s1564 + $0x3c] sm:$0xf]
    %v1581 = vunpack.c.l.b16 %v1559
    %v1582 = vunpack.c.l.b16 %v1563
    %v1583 = vpack.c.b16 %v1361, %v1360
    %v1584 = vpack.c.b16 %v1363, %v1362
    %v1585 = vpack.c.b16 %v1365, %v1364
    %v1586 = vpack.c.b16 %v1581, %v1366
    %v1587 = vpack.c.b16 %v1369, %v1368
    %v1588 = vpack.c.b16 %v1371, %v1370
    %v1589 = vpack.c.b16 %v1373, %v1372
    %v1590 = vpack.c.b16 %v1582, %v1374
    %v1615 = vunpack.c.l.b16 %v1565
    %v1616 = vunpack.c.l.b16 %v1566
    %v1617 = vunpack.c.l.b16 %v1567
    %v1618 = vunpack.c.l.b16 %v1568
    %v1619 = vunpack.c.l.b16 %v1569
    %v1620 = vunpack.c.l.b16 %v1570
    %v1621 = vunpack.c.l.b16 %v1571
    %v1622 = vunpack.c.l.b16 %v1572
    %v1623 = vunpack.c.l.b16 %v1573
    %v1624 = vunpack.c.l.b16 %v1574
    %v1625 = vunpack.c.l.b16 %v1575
    %v1626 = vunpack.c.l.b16 %v1576
    %v1627 = vunpack.c.l.b16 %v1577
    %v1628 = vunpack.c.l.b16 %v1578
    %v1629 = vunpack.c.l.b16 %v1579
    %v1630 = vunpack.c.l.b16 %v1580
    %v1631 = vpack.c.b16 %v1616, %v1615
    %v1632 = vpack.c.b16 %v1618, %v1617
    %v1633 = vpack.c.b16 %v1620, %v1619
    %v1634 = vpack.c.b16 %v1622, %v1621
    %v1635 = vpack.c.b16 %v1624, %v1623
    %v1636 = vpack.c.b16 %v1626, %v1625
    %v1637 = vpack.c.b16 %v1628, %v1627
    %v1638 = vpack.c.b16 %v1630, %v1629
    %1647 = vmatprep.subr.bf16.mxu0 0
    %1648 = vmatpush1.bf16.msra.mxu0 %v1631
    %1649 = vmatprep.subr.bf16.mxu0 0
    %1650 = vmatpush1.bf16.msra.mxu0 %v1632
    %1651 = vmatprep.subr.bf16.mxu0 0
    %1652 = vmatpush1.bf16.msra.mxu0 %v1633
    %1653 = vmatprep.subr.bf16.mxu0 0
    %1654 = vmatpush1.bf16.msra.mxu0 %v1634
    %1655 = vmatprep.subr.bf16.mxu0 0
    %1656 = vmatpush1.bf16.msra.mxu0 %v1635
    %1657 = vmatprep.subr.bf16.mxu0 0
    %1658 = vmatpush1.bf16.msra.mxu0 %v1636
    %1659 = vmatprep.subr.bf16.mxu0 0
    %1660 = vmatpush1.bf16.msra.mxu0 %v1637
    %1661 = vmatprep.subr.bf16.mxu0 0
    %1662 = vmatpush1.bf16.msra.mxu0 %v1638
    %1663 = vmatprep.subr.bf16.mxu0 0
    %1664 = vmatpush1.bf16.msra.mxu0 0
    %1665 = vmatprep.subr.bf16.mxu0 0
    %1666 = vmatpush1.bf16.msra.mxu0 0
    %1667 = vmatprep.subr.bf16.mxu0 0
    %1668 = vmatpush1.bf16.msra.mxu0 0
    %1669 = vmatprep.subr.bf16.mxu0 0
    %1670 = vmatpush1.bf16.msra.mxu0 0
    %1671 = vmatprep.subr.bf16.mxu0 0
    %1672 = vmatpush1.bf16.msra.mxu0 0
    %1673 = vmatprep.subr.bf16.mxu0 0
    %1674 = vmatpush1.bf16.msra.mxu0 0
    %1675 = vmatprep.subr.bf16.mxu0 0
    %1676 = vmatpush1.bf16.msra.mxu0 0
    %1677 = vmatprep.subr.bf16.mxu0 0
    %1678 = vmatpush1.bf16.msra.mxu0 0
    %1679 = vmatprep.mubr.bf16.mxu0 0
    %1680 = vmatmul.mubr.bf16.gmra.mrb[0].mxu0 %v1583
    %v1681 = vpop.f32.mrb[0].mxu0
    %v1682 = vadd.f32 0.0, %v1681
    %v1683 = vpop.f32.mrb[0].mxu0
    %v1684 = vpop.f32.mrb[0].mxu0
    %v1685 = vadd.f32 0.0, %v1684
    %v1686 = vpop.f32.mrb[0].mxu0
    %1687 = vmatprep.mubr.bf16.mxu0 0
    %1688 = vmatmul.mubr.bf16.gmra.mrb[0].mxu0 %v1584
    %v1689 = vpop.f32.mrb[0].mxu0
    %v1690 = vadd.f32 0.0, %v1689
    %v1691 = vpop.f32.mrb[0].mxu0
    %v1692 = vpop.f32.mrb[0].mxu0
    %v1693 = vadd.f32 0.0, %v1692
    %v1694 = vpop.f32.mrb[0].mxu0
    %1695 = vmatprep.mubr.bf16.mxu0 0
    %1696 = vmatmul.mubr.bf16.gmra.mrb[0].mxu0 %v1585
    %v1697 = vpop.f32.mrb[0].mxu0
    %v1698 = vadd.f32 0.0, %v1697
    %v1699 = vpop.f32.mrb[0].mxu0
    %v1700 = vpop.f32.mrb[0].mxu0
    %v1701 = vadd.f32 0.0, %v1700
    %v1702 = vpop.f32.mrb[0].mxu0
    %1703 = vmatprep.mubr.bf16.mxu0 0
    %1704 = vmatmul.mubr.bf16.gmra.mrb[0].mxu0 %v1586
    %v1705 = vpop.f32.mrb[0].mxu0
    %v1706 = vadd.f32 0.0, %v1705
    %v1707 = vpop.f32.mrb[0].mxu0
    %v1708 = vpop.f32.mrb[0].mxu0
    %v1709 = vadd.f32 0.0, %v1708
    %v1710 = vpop.f32.mrb[0].mxu0
    %1711 = vmatprep.mubr.bf16.mxu0 0
    %1712 = vmatmul.mubr.bf16.gmra.mrb[0].mxu0 %v1587
    %v1713 = vpop.f32.mrb[0].mxu0
    %v1714 = vadd.f32 0.0, %v1713
    %v1715 = vpop.f32.mrb[0].mxu0
    %v1716 = vpop.f32.mrb[0].mxu0
    %v1717 = vadd.f32 0.0, %v1716
    %v1718 = vpop.f32.mrb[0].mxu0
    %1719 = vmatprep.mubr.bf16.mxu0 0
    %1720 = vmatmul.mubr.bf16.gmra.mrb[0].mxu0 %v1588
    %v1721 = vpop.f32.mrb[0].mxu0
    %v1722 = vadd.f32 0.0, %v1721
    %v1723 = vpop.f32.mrb[0].mxu0
    %v1724 = vpop.f32.mrb[0].mxu0
    %v1725 = vadd.f32 0.0, %v1724
    %v1726 = vpop.f32.mrb[0].mxu0
    %1727 = vmatprep.mubr.bf16.mxu0 0
    %1728 = vmatmul.mubr.bf16.gmra.mrb[0].mxu0 %v1589
    %v1729 = vpop.f32.mrb[0].mxu0
    %v1730 = vadd.f32 0.0, %v1729
    %v1731 = vpop.f32.mrb[0].mxu0
    %v1732 = vpop.f32.mrb[0].mxu0
    %v1733 = vadd.f32 0.0, %v1732
    %v1734 = vpop.f32.mrb[0].mxu0
    %1735 = vmatprep.mubr.bf16.mxu0 0
    %1736 = vmatmul.mubr.bf16.gmra.mrb[0].mxu0 %v1590
    %v1737 = vpop.f32.mrb[0].mxu0
    %v1738 = vadd.f32 0.0, %v1737
    %v1739 = vpop.f32.mrb[0].mxu0
    %v1740 = vpop.f32.mrb[0].mxu0
    %v1741 = vadd.f32 0.0, %v1740
    %v1742 = vpop.f32.mrb[0].mxu0
    %1743 = vdwg.mxu0
    %v1744 = vadd.f32 %v1536, %v1682
    %v1745 = vadd.f32 %v1537, %v1685
    %v1746 = vadd.f32 %v1538, %v1690
    %v1747 = vadd.f32 %v1539, %v1693
    %v1748 = vadd.f32 %v1540, %v1698
    %v1749 = vadd.f32 %v1541, %v1701
    %v1750 = vadd.f32 %v1542, %v1706
    %v1751 = vadd.f32 %v1543, %v1709
    %v1752 = vadd.f32 %v1544, %v1714
    %v1753 = vadd.f32 %v1545, %v1717
    %v1754 = vadd.f32 %v1546, %v1722
    %v1755 = vadd.f32 %v1547, %v1725
    %v1756 = vadd.f32 %v1548, %v1730
    %v1757 = vadd.f32 %v1549, %v1733
    %v1758 = vadd.f32 %v1550, %v1738
    %v1759 = vadd.f32 %v1551, %v1741
    %v1764 = vrot.slane %v1232, 5
    %v1765 = vrot.slane %v1764, 4
    %v1766 = vrot.slane %v362, 5
    %v1767 = vsel %vm1277, %v1765, %v1766
    %v1768 = vrot.slane %v1242, 5
    %v1769 = vrot.slane %v1768, 4
    %v1770 = vrot.slane %v382, 5
    %v1771 = vsel %vm1277, %v1769, %v1770
    %s1772 = scalar_lea.vmem [#allocation6], 448
    %v1773 = vld [vmem:[%s1772] sm:$0xf]
    %v1774 = vld [vmem:[%s1772 + $0x4] sm:$0xf]
    %v1775 = vld [vmem:[%s1772 + $0x8] sm:$0xf]
    %v1776 = vld [vmem:[%s1772 + $0xc] sm:$0xf]
    %v1777 = vld [vmem:[%s1772 + $0x10] sm:$0xf]
    %v1778 = vld [vmem:[%s1772 + $0x14] sm:$0xf]
    %v1779 = vld [vmem:[%s1772 + $0x18] sm:$0xf]
    %v1780 = vld [vmem:[%s1772 + $0x1c] sm:$0xf]
    %v1781 = vld [vmem:[%s1772 + $0x20] sm:$0xf]
    %v1782 = vld [vmem:[%s1772 + $0x24] sm:$0xf]
    %v1783 = vld [vmem:[%s1772 + $0x28] sm:$0xf]
    %v1784 = vld [vmem:[%s1772 + $0x2c] sm:$0xf]
    %v1785 = vld [vmem:[%s1772 + $0x30] sm:$0xf]
    %v1786 = vld [vmem:[%s1772 + $0x34] sm:$0xf]
    %v1787 = vld [vmem:[%s1772 + $0x38] sm:$0xf]
    %v1788 = vld [vmem:[%s1772 + $0x3c] sm:$0xf]
    %v1789 = vunpack.c.l.b16 %v1767
    %v1790 = vunpack.c.l.b16 %v1771
    %v1791 = vpack.c.b16 %v1789, %v1581
    %v1792 = vpack.c.b16 %v1790, %v1582
    %v1811 = vunpack.c.l.b16 %v1773
    %v1812 = vunpack.c.l.b16 %v1774
    %v1813 = vunpack.c.l.b16 %v1775
    %v1814 = vunpack.c.l.b16 %v1776
    %v1815 = vunpack.c.l.b16 %v1777
    %v1816 = vunpack.c.l.b16 %v1778
    %v1817 = vunpack.c.l.b16 %v1779
    %v1818 = vunpack.c.l.b16 %v1780
    %v1819 = vunpack.c.l.b16 %v1781
    %v1820 = vunpack.c.l.b16 %v1782
    %v1821 = vunpack.c.l.b16 %v1783
    %v1822 = vunpack.c.l.b16 %v1784
    %v1823 = vunpack.c.l.b16 %v1785
    %v1824 = vunpack.c.l.b16 %v1786
    %v1825 = vunpack.c.l.b16 %v1787
    %v1826 = vunpack.c.l.b16 %v1788
    %v1827 = vpack.c.b16 %v1812, %v1811
    %v1828 = vpack.c.b16 %v1814, %v1813
    %v1829 = vpack.c.b16 %v1816, %v1815
    %v1830 = vpack.c.b16 %v1818, %v1817
    %v1831 = vpack.c.b16 %v1820, %v1819
    %v1832 = vpack.c.b16 %v1822, %v1821
    %v1833 = vpack.c.b16 %v1824, %v1823
    %v1834 = vpack.c.b16 %v1826, %v1825
    %1843 = vmatprep.subr.bf16.mxu0 0
    %1844 = vmatpush1.bf16.msra.mxu0 %v1827
    %1845 = vmatprep.subr.bf16.mxu0 0
    %1846 = vmatpush1.bf16.msra.mxu0 %v1828
    %1847 = vmatprep.subr.bf16.mxu0 0
    %1848 = vmatpush1.bf16.msra.mxu0 %v1829
    %1849 = vmatprep.subr.bf16.mxu0 0
    %1850 = vmatpush1.bf16.msra.mxu0 %v1830
    %1851 = vmatprep.subr.bf16.mxu0 0
    %1852 = vmatpush1.bf16.msra.mxu0 %v1831
    %1853 = vmatprep.subr.bf16.mxu0 0
    %1854 = vmatpush1.bf16.msra.mxu0 %v1832
    %1855 = vmatprep.subr.bf16.mxu0 0
    %1856 = vmatpush1.bf16.msra.mxu0 %v1833
    %1857 = vmatprep.subr.bf16.mxu0 0
    %1858 = vmatpush1.bf16.msra.mxu0 %v1834
    %1859 = vmatprep.subr.bf16.mxu0 0
    %1860 = vmatpush1.bf16.msra.mxu0 0
    %1861 = vmatprep.subr.bf16.mxu0 0
    %1862 = vmatpush1.bf16.msra.mxu0 0
    %1863 = vmatprep.subr.bf16.mxu0 0
    %1864 = vmatpush1.bf16.msra.mxu0 0
    %1865 = vmatprep.subr.bf16.mxu0 0
    %1866 = vmatpush1.bf16.msra.mxu0 0
    %1867 = vmatprep.subr.bf16.mxu0 0
    %1868 = vmatpush1.bf16.msra.mxu0 0
    %1869 = vmatprep.subr.bf16.mxu0 0
    %1870 = vmatpush1.bf16.msra.mxu0 0
    %1871 = vmatprep.subr.bf16.mxu0 0
    %1872 = vmatpush1.bf16.msra.mxu0 0
    %1873 = vmatprep.subr.bf16.mxu0 0
    %1874 = vmatpush1.bf16.msra.mxu0 0
    %1875 = vmatprep.mubr.bf16.mxu0 0
    %1876 = vmatmul.mubr.bf16.gmra.mrb[0].mxu0 %v1376
    %v1877 = vpop.f32.mrb[0].mxu0
    %v1878 = vadd.f32 0.0, %v1877
    %v1879 = vpop.f32.mrb[0].mxu0
    %v1880 = vpop.f32.mrb[0].mxu0
    %v1881 = vadd.f32 0.0, %v1880
    %v1882 = vpop.f32.mrb[0].mxu0
    %1883 = vmatprep.mubr.bf16.mxu0 0
    %1884 = vmatmul.mubr.bf16.gmra.mrb[0].mxu0 %v1377
    %v1885 = vpop.f32.mrb[0].mxu0
    %v1886 = vadd.f32 0.0, %v1885
    %v1887 = vpop.f32.mrb[0].mxu0
    %v1888 = vpop.f32.mrb[0].mxu0
    %v1889 = vadd.f32 0.0, %v1888
    %v1890 = vpop.f32.mrb[0].mxu0
    %1891 = vmatprep.mubr.bf16.mxu0 0
    %1892 = vmatmul.mubr.bf16.gmra.mrb[0].mxu0 %v1378
    %v1893 = vpop.f32.mrb[0].mxu0
    %v1894 = vadd.f32 0.0, %v1893
    %v1895 = vpop.f32.mrb[0].mxu0
    %v1896 = vpop.f32.mrb[0].mxu0
    %v1897 = vadd.f32 0.0, %v1896
    %v1898 = vpop.f32.mrb[0].mxu0
    %1899 = vmatprep.mubr.bf16.mxu0 0
    %1900 = vmatmul.mubr.bf16.gmra.mrb[0].mxu0 %v1791
    %v1901 = vpop.f32.mrb[0].mxu0
    %v1902 = vadd.f32 0.0, %v1901
    %v1903 = vpop.f32.mrb[0].mxu0
    %v1904 = vpop.f32.mrb[0].mxu0
    %v1905 = vadd.f32 0.0, %v1904
    %v1906 = vpop.f32.mrb[0].mxu0
    %1907 = vmatprep.mubr.bf16.mxu0 0
    %1908 = vmatmul.mubr.bf16.gmra.mrb[0].mxu0 %v1380
    %v1909 = vpop.f32.mrb[0].mxu0
    %v1910 = vadd.f32 0.0, %v1909
    %v1911 = vpop.f32.mrb[0].mxu0
    %v1912 = vpop.f32.mrb[0].mxu0
    %v1913 = vadd.f32 0.0, %v1912
    %v1914 = vpop.f32.mrb[0].mxu0
    %1915 = vmatprep.mubr.bf16.mxu0 0
    %1916 = vmatmul.mubr.bf16.gmra.mrb[0].mxu0 %v1381
    %v1917 = vpop.f32.mrb[0].mxu0
    %v1918 = vadd.f32 0.0, %v1917
    %v1919 = vpop.f32.mrb[0].mxu0
    %v1920 = vpop.f32.mrb[0].mxu0
    %v1921 = vadd.f32 0.0, %v1920
    %v1922 = vpop.f32.mrb[0].mxu0
    %1923 = vmatprep.mubr.bf16.mxu0 0
    %1924 = vmatmul.mubr.bf16.gmra.mrb[0].mxu0 %v1382
    %v1925 = vpop.f32.mrb[0].mxu0
    %v1926 = vadd.f32 0.0, %v1925
    %v1927 = vpop.f32.mrb[0].mxu0
    %v1928 = vpop.f32.mrb[0].mxu0
    %v1929 = vadd.f32 0.0, %v1928
    %v1930 = vpop.f32.mrb[0].mxu0
    %1931 = vmatprep.mubr.bf16.mxu0 0
    %1932 = vmatmul.mubr.bf16.gmra.mrb[0].mxu0 %v1792
    %v1933 = vpop.f32.mrb[0].mxu0
    %v1934 = vadd.f32 0.0, %v1933
    %v1935 = vpop.f32.mrb[0].mxu0
    %v1936 = vpop.f32.mrb[0].mxu0
    %v1937 = vadd.f32 0.0, %v1936
    %v1938 = vpop.f32.mrb[0].mxu0
    %1939 = vdwg.mxu0
    %v1940 = vadd.f32 %v1744, %v1878
    %v1941 = vadd.f32 %v1745, %v1881
    %v1942 = vadd.f32 %v1746, %v1886
    %v1943 = vadd.f32 %v1747, %v1889
    %v1944 = vadd.f32 %v1748, %v1894
    %v1945 = vadd.f32 %v1749, %v1897
    %v1946 = vadd.f32 %v1750, %v1902
    %v1947 = vadd.f32 %v1751, %v1905
    %v1948 = vadd.f32 %v1752, %v1910
    %v1949 = vadd.f32 %v1753, %v1913
    %v1950 = vadd.f32 %v1754, %v1918
    %v1951 = vadd.f32 %v1755, %v1921
    %v1952 = vadd.f32 %v1756, %v1926
    %v1953 = vadd.f32 %v1757, %v1929
    %v1954 = vadd.f32 %v1758, %v1934
    %v1955 = vadd.f32 %v1759, %v1937
    %v1956 = vld [vmem:[#allocation2 + $0xc] sm:$0x3]
    %v1957 = vld [vmem:[#allocation2 + $0x14] sm:$0x3]
    %v1958 = vld [vmem:[#allocation2 + $0x1c] sm:$0x3]
    %v1959 = vld [vmem:[#allocation2 + $0x24] sm:$0x3]
    %v1960 = vld [vmem:[#allocation2 + $0x2c] sm:$0x3]
    %v1961 = vld [vmem:[#allocation2 + $0x34] sm:$0x3]
    %v1962 = vld [vmem:[#allocation2 + $0x3c] sm:$0x3]
    %v1963 = vld [vmem:[#allocation2 + $0x44] sm:$0x3]
    %v1964 = vld [vmem:[#allocation2 + $0x4c] sm:$0x3]
    %v1965 = vld [vmem:[#allocation2 + $0x54] sm:$0x3]
    %v1966 = vld [vmem:[#allocation2 + $0x64] sm:$0x3]
    %v1967 = vld [vmem:[#allocation2 + $0x6c] sm:$0x3]
    %v1968 = vld [vmem:[#allocation2 + $0x74] sm:$0x3]
    %v1969 = vld [vmem:[#allocation2 + $0x7c] sm:$0x3]
    %v1970 = vld [vmem:[#allocation2 + $0x84] sm:$0x3]
    %v1971 = vld [vmem:[#allocation2 + $0x8c] sm:$0x3]
    %v1972 = vld [vmem:[#allocation2 + $0x94] sm:$0x3]
    %v1973 = vld [vmem:[#allocation2 + $0x9c] sm:$0x3]
    %v1974 = vld [vmem:[#allocation2 + $0xa4] sm:$0x3]
    %v1975 = vld [vmem:[#allocation2 + $0xac] sm:$0x3]
    %vm1976 = vsmask.f32 2304
    %vm1977 = vsmask.f32 6416
    %vm1978 = vmor %vm1976, %vm1977
    %v1980 = vshrl.u32 %v1223, 16
    %v1982 = vrot.slane %v1980, 5
    %v1983 = vshll.u32 %v1223, 16
    %v1985 = vrot.slane %v1983, 6
    %v1986 = vor.u32 %v1982, %v1985
    %v1987 = vrot.slane %v1986, 4
    %v1989 = vshrl.u32 %v1956, 16
    %v1991 = vrot.slane %v1989, 5
    %v1992 = vshll.u32 %v1956, 16
    %v1994 = vrot.slane %v1992, 6
    %v1995 = vor.u32 %v1991, %v1994
    %v1996 = vsel %vm1978, %v1987, %v1995
    %v1998 = vshrl.u32 %v1224, 16
    %v2000 = vrot.slane %v1998, 5
    %v2001 = vshll.u32 %v1224, 16
    %v2003 = vrot.slane %v2001, 6
    %v2004 = vor.u32 %v2000, %v2003
    %v2005 = vrot.slane %v2004, 4
    %v2007 = vshrl.u32 %v1957, 16
    %v2009 = vrot.slane %v2007, 5
    %v2010 = vshll.u32 %v1957, 16
    %v2012 = vrot.slane %v2010, 6
    %v2013 = vor.u32 %v2009, %v2012
    %v2014 = vsel %vm1978, %v2005, %v2013
    %v2016 = vshrl.u32 %v1225, 16
    %v2018 = vrot.slane %v2016, 5
    %v2019 = vshll.u32 %v1225, 16
    %v2021 = vrot.slane %v2019, 6
    %v2022 = vor.u32 %v2018, %v2021
    %v2023 = vrot.slane %v2022, 4
    %v2025 = vshrl.u32 %v1958, 16
    %v2027 = vrot.slane %v2025, 5
    %v2028 = vshll.u32 %v1958, 16
    %v2030 = vrot.slane %v2028, 6
    %v2031 = vor.u32 %v2027, %v2030
    %v2032 = vsel %vm1978, %v2023, %v2031
    %v2034 = vshrl.u32 %v1226, 16
    %v2036 = vrot.slane %v2034, 5
    %v2037 = vshll.u32 %v1226, 16
    %v2039 = vrot.slane %v2037, 6
    %v2040 = vor.u32 %v2036, %v2039
    %v2041 = vrot.slane %v2040, 4
    %v2043 = vshrl.u32 %v1959, 16
    %v2045 = vrot.slane %v2043, 5
    %v2046 = vshll.u32 %v1959, 16
    %v2048 = vrot.slane %v2046, 6
    %v2049 = vor.u32 %v2045, %v2048
    %v2050 = vsel %vm1978, %v2041, %v2049
    %v2052 = vshrl.u32 %v1227, 16
    %v2054 = vrot.slane %v2052, 5
    %v2055 = vshll.u32 %v1227, 16
    %v2057 = vrot.slane %v2055, 6
    %v2058 = vor.u32 %v2054, %v2057
    %v2059 = vrot.slane %v2058, 4
    %v2061 = vshrl.u32 %v1960, 16
    %v2063 = vrot.slane %v2061, 5
    %v2064 = vshll.u32 %v1960, 16
    %v2066 = vrot.slane %v2064, 6
    %v2067 = vor.u32 %v2063, %v2066
    %v2068 = vsel %vm1978, %v2059, %v2067
    %v2070 = vshrl.u32 %v1228, 16
    %v2072 = vrot.slane %v2070, 5
    %v2073 = vshll.u32 %v1228, 16
    %v2075 = vrot.slane %v2073, 6
    %v2076 = vor.u32 %v2072, %v2075
    %v2077 = vrot.slane %v2076, 4
    %v2079 = vshrl.u32 %v1961, 16
    %v2081 = vrot.slane %v2079, 5
    %v2082 = vshll.u32 %v1961, 16
    %v2084 = vrot.slane %v2082, 6
    %v2085 = vor.u32 %v2081, %v2084
    %v2086 = vsel %vm1978, %v2077, %v2085
    %v2088 = vshrl.u32 %v1229, 16
    %v2090 = vrot.slane %v2088, 5
    %v2091 = vshll.u32 %v1229, 16
    %v2093 = vrot.slane %v2091, 6
    %v2094 = vor.u32 %v2090, %v2093
    %v2095 = vrot.slane %v2094, 4
    %v2097 = vshrl.u32 %v1962, 16
    %v2099 = vrot.slane %v2097, 5
    %v2100 = vshll.u32 %v1962, 16
    %v2102 = vrot.slane %v2100, 6
    %v2103 = vor.u32 %v2099, %v2102
    %v2104 = vsel %vm1978, %v2095, %v2103
    %v2106 = vshrl.u32 %v1230, 16
    %v2108 = vrot.slane %v2106, 5
    %v2109 = vshll.u32 %v1230, 16
    %v2111 = vrot.slane %v2109, 6
    %v2112 = vor.u32 %v2108, %v2111
    %v2113 = vrot.slane %v2112, 4
    %v2115 = vshrl.u32 %v1963, 16
    %v2117 = vrot.slane %v2115, 5
    %v2118 = vshll.u32 %v1963, 16
    %v2120 = vrot.slane %v2118, 6
    %v2121 = vor.u32 %v2117, %v2120
    %v2122 = vsel %vm1978, %v2113, %v2121
    %v2124 = vshrl.u32 %v1233, 16
    %v2126 = vrot.slane %v2124, 5
    %v2127 = vshll.u32 %v1233, 16
    %v2129 = vrot.slane %v2127, 6
    %v2130 = vor.u32 %v2126, %v2129
    %v2131 = vrot.slane %v2130, 4
    %v2133 = vshrl.u32 %v1966, 16
    %v2135 = vrot.slane %v2133, 5
    %v2136 = vshll.u32 %v1966, 16
    %v2138 = vrot.slane %v2136, 6
    %v2139 = vor.u32 %v2135, %v2138
    %v2140 = vsel %vm1978, %v2131, %v2139
    %v2142 = vshrl.u32 %v1234, 16
    %v2144 = vrot.slane %v2142, 5
    %v2145 = vshll.u32 %v1234, 16
    %v2147 = vrot.slane %v2145, 6
    %v2148 = vor.u32 %v2144, %v2147
    %v2149 = vrot.slane %v2148, 4
    %v2151 = vshrl.u32 %v1967, 16
    %v2153 = vrot.slane %v2151, 5
    %v2154 = vshll.u32 %v1967, 16
    %v2156 = vrot.slane %v2154, 6
    %v2157 = vor.u32 %v2153, %v2156
    %v2158 = vsel %vm1978, %v2149, %v2157
    %v2160 = vshrl.u32 %v1235, 16
    %v2162 = vrot.slane %v2160, 5
    %v2163 = vshll.u32 %v1235, 16
    %v2165 = vrot.slane %v2163, 6
    %v2166 = vor.u32 %v2162, %v2165
    %v2167 = vrot.slane %v2166, 4
    %v2169 = vshrl.u32 %v1968, 16
    %v2171 = vrot.slane %v2169, 5
    %v2172 = vshll.u32 %v1968, 16
    %v2174 = vrot.slane %v2172, 6
    %v2175 = vor.u32 %v2171, %v2174
    %v2176 = vsel %vm1978, %v2167, %v2175
    %v2178 = vshrl.u32 %v1236, 16
    %v2180 = vrot.slane %v2178, 5
    %v2181 = vshll.u32 %v1236, 16
    %v2183 = vrot.slane %v2181, 6
    %v2184 = vor.u32 %v2180, %v2183
    %v2185 = vrot.slane %v2184, 4
    %v2187 = vshrl.u32 %v1969, 16
    %v2189 = vrot.slane %v2187, 5
    %v2190 = vshll.u32 %v1969, 16
    %v2192 = vrot.slane %v2190, 6
    %v2193 = vor.u32 %v2189, %v2192
    %v2194 = vsel %vm1978, %v2185, %v2193
    %v2196 = vshrl.u32 %v1237, 16
    %v2198 = vrot.slane %v2196, 5
    %v2199 = vshll.u32 %v1237, 16
    %v2201 = vrot.slane %v2199, 6
    %v2202 = vor.u32 %v2198, %v2201
    %v2203 = vrot.slane %v2202, 4
    %v2205 = vshrl.u32 %v1970, 16
    %v2207 = vrot.slane %v2205, 5
    %v2208 = vshll.u32 %v1970, 16
    %v2210 = vrot.slane %v2208, 6
    %v2211 = vor.u32 %v2207, %v2210
    %v2212 = vsel %vm1978, %v2203, %v2211
    %v2214 = vshrl.u32 %v1238, 16
    %v2216 = vrot.slane %v2214, 5
    %v2217 = vshll.u32 %v1238, 16
    %v2219 = vrot.slane %v2217, 6
    %v2220 = vor.u32 %v2216, %v2219
    %v2221 = vrot.slane %v2220, 4
    %v2223 = vshrl.u32 %v1971, 16
    %v2225 = vrot.slane %v2223, 5
    %v2226 = vshll.u32 %v1971, 16
    %v2228 = vrot.slane %v2226, 6
    %v2229 = vor.u32 %v2225, %v2228
    %v2230 = vsel %vm1978, %v2221, %v2229
    %v2232 = vshrl.u32 %v1239, 16
    %v2234 = vrot.slane %v2232, 5
    %v2235 = vshll.u32 %v1239, 16
    %v2237 = vrot.slane %v2235, 6
    %v2238 = vor.u32 %v2234, %v2237
    %v2239 = vrot.slane %v2238, 4
    %v2241 = vshrl.u32 %v1972, 16
    %v2243 = vrot.slane %v2241, 5
    %v2244 = vshll.u32 %v1972, 16
    %v2246 = vrot.slane %v2244, 6
    %v2247 = vor.u32 %v2243, %v2246
    %v2248 = vsel %vm1978, %v2239, %v2247
    %v2250 = vshrl.u32 %v1240, 16
    %v2252 = vrot.slane %v2250, 5
    %v2253 = vshll.u32 %v1240, 16
    %v2255 = vrot.slane %v2253, 6
    %v2256 = vor.u32 %v2252, %v2255
    %v2257 = vrot.slane %v2256, 4
    %v2259 = vshrl.u32 %v1973, 16
    %v2261 = vrot.slane %v2259, 5
    %v2262 = vshll.u32 %v1973, 16
    %v2264 = vrot.slane %v2262, 6
    %v2265 = vor.u32 %v2261, %v2264
    %v2266 = vsel %vm1978, %v2257, %v2265
    %s2267 = scalar_lea.vmem [#allocation6], 128
    %v2268 = vld [vmem:[%s2267] sm:$0xf]
    %v2269 = vld [vmem:[%s2267 + $0x4] sm:$0xf]
    %v2270 = vld [vmem:[%s2267 + $0x8] sm:$0xf]
    %v2271 = vld [vmem:[%s2267 + $0xc] sm:$0xf]
    %v2272 = vld [vmem:[%s2267 + $0x10] sm:$0xf]
    %v2273 = vld [vmem:[%s2267 + $0x14] sm:$0xf]
    %v2274 = vld [vmem:[%s2267 + $0x18] sm:$0xf]
    %v2275 = vld [vmem:[%s2267 + $0x1c] sm:$0xf]
    %v2276 = vld [vmem:[%s2267 + $0x20] sm:$0xf]
    %v2277 = vld [vmem:[%s2267 + $0x24] sm:$0xf]
    %v2278 = vld [vmem:[%s2267 + $0x28] sm:$0xf]
    %v2279 = vld [vmem:[%s2267 + $0x2c] sm:$0xf]
    %v2280 = vld [vmem:[%s2267 + $0x30] sm:$0xf]
    %v2281 = vld [vmem:[%s2267 + $0x34] sm:$0xf]
    %v2282 = vld [vmem:[%s2267 + $0x38] sm:$0xf]
    %v2283 = vld [vmem:[%s2267 + $0x3c] sm:$0xf]
    %v2284 = vunpack.c.l.b16 %v1996
    %v2285 = vunpack.c.l.b16 %v2014
    %v2286 = vunpack.c.l.b16 %v2032
    %v2287 = vunpack.c.l.b16 %v2050
    %v2288 = vunpack.c.l.b16 %v2068
    %v2289 = vunpack.c.l.b16 %v2086
    %v2290 = vunpack.c.l.b16 %v2104
    %v2291 = vunpack.c.l.b16 %v2122
    %v2292 = vunpack.c.l.b16 %v2140
    %v2293 = vunpack.c.l.b16 %v2158
    %v2294 = vunpack.c.l.b16 %v2176
    %v2295 = vunpack.c.l.b16 %v2194
    %v2296 = vunpack.c.l.b16 %v2212
    %v2297 = vunpack.c.l.b16 %v2230
    %v2298 = vunpack.c.l.b16 %v2248
    %v2299 = vunpack.c.l.b16 %v2266
    %v2300 = vpack.c.b16 %v2285, %v2284
    %v2301 = vpack.c.b16 %v2287, %v2286
    %v2302 = vpack.c.b16 %v2289, %v2288
    %v2303 = vpack.c.b16 %v2291, %v2290
    %v2304 = vpack.c.b16 %v2293, %v2292
    %v2305 = vpack.c.b16 %v2295, %v2294
    %v2306 = vpack.c.b16 %v2297, %v2296
    %v2307 = vpack.c.b16 %v2299, %v2298
    %v2332 = vunpack.c.l.b16 %v2268
    %v2333 = vunpack.c.l.b16 %v2269
    %v2334 = vunpack.c.l.b16 %v2270
    %v2335 = vunpack.c.l.b16 %v2271
    %v2336 = vunpack.c.l.b16 %v2272
    %v2337 = vunpack.c.l.b16 %v2273
    %v2338 = vunpack.c.l.b16 %v2274
    %v2339 = vunpack.c.l.b16 %v2275
    %v2340 = vunpack.c.l.b16 %v2276
    %v2341 = vunpack.c.l.b16 %v2277
    %v2342 = vunpack.c.l.b16 %v2278
    %v2343 = vunpack.c.l.b16 %v2279
    %v2344 = vunpack.c.l.b16 %v2280
    %v2345 = vunpack.c.l.b16 %v2281
    %v2346 = vunpack.c.l.b16 %v2282
    %v2347 = vunpack.c.l.b16 %v2283
    %v2348 = vpack.c.b16 %v2333, %v2332
    %v2349 = vpack.c.b16 %v2335, %v2334
    %v2350 = vpack.c.b16 %v2337, %v2336
    %v2351 = vpack.c.b16 %v2339, %v2338
    %v2352 = vpack.c.b16 %v2341, %v2340
    %v2353 = vpack.c.b16 %v2343, %v2342
    %v2354 = vpack.c.b16 %v2345, %v2344
    %v2355 = vpack.c.b16 %v2347, %v2346
    %2364 = vmatprep.subr.bf16.mxu0 0
    %2365 = vmatpush1.bf16.msra.mxu0 %v2348
    %2366 = vmatprep.subr.bf16.mxu0 0
    %2367 = vmatpush1.bf16.msra.mxu0 %v2349
    %2368 = vmatprep.subr.bf16.mxu0 0
    %2369 = vmatpush1.bf16.msra.mxu0 %v2350
    %2370 = vmatprep.subr.bf16.mxu0 0
    %2371 = vmatpush1.bf16.msra.mxu0 %v2351
    %2372 = vmatprep.subr.bf16.mxu0 0
    %2373 = vmatpush1.bf16.msra.mxu0 %v2352
    %2374 = vmatprep.subr.bf16.mxu0 0
    %2375 = vmatpush1.bf16.msra.mxu0 %v2353
    %2376 = vmatprep.subr.bf16.mxu0 0
    %2377 = vmatpush1.bf16.msra.mxu0 %v2354
    %2378 = vmatprep.subr.bf16.mxu0 0
    %2379 = vmatpush1.bf16.msra.mxu0 %v2355
    %2380 = vmatprep.subr.bf16.mxu0 0
    %2381 = vmatpush1.bf16.msra.mxu0 0
    %2382 = vmatprep.subr.bf16.mxu0 0
    %2383 = vmatpush1.bf16.msra.mxu0 0
    %2384 = vmatprep.subr.bf16.mxu0 0
    %2385 = vmatpush1.bf16.msra.mxu0 0
    %2386 = vmatprep.subr.bf16.mxu0 0
    %2387 = vmatpush1.bf16.msra.mxu0 0
    %2388 = vmatprep.subr.bf16.mxu0 0
    %2389 = vmatpush1.bf16.msra.mxu0 0
    %2390 = vmatprep.subr.bf16.mxu0 0
    %2391 = vmatpush1.bf16.msra.mxu0 0
    %2392 = vmatprep.subr.bf16.mxu0 0
    %2393 = vmatpush1.bf16.msra.mxu0 0
    %2394 = vmatprep.subr.bf16.mxu0 0
    %2395 = vmatpush1.bf16.msra.mxu0 0
    %2396 = vmatprep.mubr.bf16.mxu0 0
    %2397 = vmatmul.mubr.bf16.gmra.mrb[0].mxu0 %v2300
    %v2398 = vpop.f32.mrb[0].mxu0
    %v2399 = vadd.f32 0.0, %v2398
    %v2400 = vpop.f32.mrb[0].mxu0
    %v2401 = vpop.f32.mrb[0].mxu0
    %v2402 = vadd.f32 0.0, %v2401
    %v2403 = vpop.f32.mrb[0].mxu0
    %2404 = vmatprep.mubr.bf16.mxu0 0
    %2405 = vmatmul.mubr.bf16.gmra.mrb[0].mxu0 %v2301
    %v2406 = vpop.f32.mrb[0].mxu0
    %v2407 = vadd.f32 0.0, %v2406
    %v2408 = vpop.f32.mrb[0].mxu0
    %v2409 = vpop.f32.mrb[0].mxu0
    %v2410 = vadd.f32 0.0, %v2409
    %v2411 = vpop.f32.mrb[0].mxu0
    %2412 = vmatprep.mubr.bf16.mxu0 0
    %2413 = vmatmul.mubr.bf16.gmra.mrb[0].mxu0 %v2302
    %v2414 = vpop.f32.mrb[0].mxu0
    %v2415 = vadd.f32 0.0, %v2414
    %v2416 = vpop.f32.mrb[0].mxu0
    %v2417 = vpop.f32.mrb[0].mxu0
    %v2418 = vadd.f32 0.0, %v2417
    %v2419 = vpop.f32.mrb[0].mxu0
    %2420 = vmatprep.mubr.bf16.mxu0 0
    %2421 = vmatmul.mubr.bf16.gmra.mrb[0].mxu0 %v2303
    %v2422 = vpop.f32.mrb[0].mxu0
    %v2423 = vadd.f32 0.0, %v2422
    %v2424 = vpop.f32.mrb[0].mxu0
    %v2425 = vpop.f32.mrb[0].mxu0
    %v2426 = vadd.f32 0.0, %v2425
    %v2427 = vpop.f32.mrb[0].mxu0
    %2428 = vmatprep.mubr.bf16.mxu0 0
    %2429 = vmatmul.mubr.bf16.gmra.mrb[0].mxu0 %v2304
    %v2430 = vpop.f32.mrb[0].mxu0
    %v2431 = vadd.f32 0.0, %v2430
    %v2432 = vpop.f32.mrb[0].mxu0
    %v2433 = vpop.f32.mrb[0].mxu0
    %v2434 = vadd.f32 0.0, %v2433
    %v2435 = vpop.f32.mrb[0].mxu0
    %2436 = vmatprep.mubr.bf16.mxu0 0
    %2437 = vmatmul.mubr.bf16.gmra.mrb[0].mxu0 %v2305
    %v2438 = vpop.f32.mrb[0].mxu0
    %v2439 = vadd.f32 0.0, %v2438
    %v2440 = vpop.f32.mrb[0].mxu0
    %v2441 = vpop.f32.mrb[0].mxu0
    %v2442 = vadd.f32 0.0, %v2441
    %v2443 = vpop.f32.mrb[0].mxu0
    %2444 = vmatprep.mubr.bf16.mxu0 0
    %2445 = vmatmul.mubr.bf16.gmra.mrb[0].mxu0 %v2306
    %v2446 = vpop.f32.mrb[0].mxu0
    %v2447 = vadd.f32 0.0, %v2446
    %v2448 = vpop.f32.mrb[0].mxu0
    %v2449 = vpop.f32.mrb[0].mxu0
    %v2450 = vadd.f32 0.0, %v2449
    %v2451 = vpop.f32.mrb[0].mxu0
    %2452 = vmatprep.mubr.bf16.mxu0 0
    %2453 = vmatmul.mubr.bf16.gmra.mrb[0].mxu0 %v2307
    %v2454 = vpop.f32.mrb[0].mxu0
    %v2455 = vadd.f32 0.0, %v2454
    %v2456 = vpop.f32.mrb[0].mxu0
    %v2457 = vpop.f32.mrb[0].mxu0
    %v2458 = vadd.f32 0.0, %v2457
    %v2459 = vpop.f32.mrb[0].mxu0
    %2460 = vdwg.mxu0
    %v2461 = vadd.f32 %v1940, %v2399
    %v2462 = vadd.f32 %v1941, %v2402
    %v2463 = vadd.f32 %v1942, %v2407
    %v2464 = vadd.f32 %v1943, %v2410
    %v2465 = vadd.f32 %v1944, %v2415
    %v2466 = vadd.f32 %v1945, %v2418
    %v2467 = vadd.f32 %v1946, %v2423
    %v2468 = vadd.f32 %v1947, %v2426
    %v2469 = vadd.f32 %v1948, %v2431
    %v2470 = vadd.f32 %v1949, %v2434
    %v2471 = vadd.f32 %v1950, %v2439
    %v2472 = vadd.f32 %v1951, %v2442
    %v2473 = vadd.f32 %v1952, %v2447
    %v2474 = vadd.f32 %v1953, %v2450
    %v2475 = vadd.f32 %v1954, %v2455
    %v2476 = vadd.f32 %v1955, %v2458
    %v2478 = vshrl.u32 %v1231, 16
    %v2480 = vrot.slane %v2478, 5
    %v2481 = vshll.u32 %v1231, 16
    %v2483 = vrot.slane %v2481, 6
    %v2484 = vor.u32 %v2480, %v2483
    %v2485 = vrot.slane %v2484, 4
    %v2487 = vshrl.u32 %v1964, 16
    %v2489 = vrot.slane %v2487, 5
    %v2490 = vshll.u32 %v1964, 16
    %v2492 = vrot.slane %v2490, 6
    %v2493 = vor.u32 %v2489, %v2492
    %v2494 = vsel %vm1978, %v2485, %v2493
    %v2496 = vshrl.u32 %v1241, 16
    %v2498 = vrot.slane %v2496, 5
    %v2499 = vshll.u32 %v1241, 16
    %v2501 = vrot.slane %v2499, 6
    %v2502 = vor.u32 %v2498, %v2501
    %v2503 = vrot.slane %v2502, 4
    %v2505 = vshrl.u32 %v1974, 16
    %v2507 = vrot.slane %v2505, 5
    %v2508 = vshll.u32 %v1974, 16
    %v2510 = vrot.slane %v2508, 6
    %v2511 = vor.u32 %v2507, %v2510
    %v2512 = vsel %vm1978, %v2503, %v2511
    %s2513 = scalar_lea.vmem [#allocation6], 320
    %v2514 = vld [vmem:[%s2513] sm:$0xf]
    %v2515 = vld [vmem:[%s2513 + $0x4] sm:$0xf]
    %v2516 = vld [vmem:[%s2513 + $0x8] sm:$0xf]
    %v2517 = vld [vmem:[%s2513 + $0xc] sm:$0xf]
    %v2518 = vld [vmem:[%s2513 + $0x10] sm:$0xf]
    %v2519 = vld [vmem:[%s2513 + $0x14] sm:$0xf]
    %v2520 = vld [vmem:[%s2513 + $0x18] sm:$0xf]
    %v2521 = vld [vmem:[%s2513 + $0x1c] sm:$0xf]
    %v2522 = vld [vmem:[%s2513 + $0x20] sm:$0xf]
    %v2523 = vld [vmem:[%s2513 + $0x24] sm:$0xf]
    %v2524 = vld [vmem:[%s2513 + $0x28] sm:$0xf]
    %v2525 = vld [vmem:[%s2513 + $0x2c] sm:$0xf]
    %v2526 = vld [vmem:[%s2513 + $0x30] sm:$0xf]
    %v2527 = vld [vmem:[%s2513 + $0x34] sm:$0xf]
    %v2528 = vld [vmem:[%s2513 + $0x38] sm:$0xf]
    %v2529 = vld [vmem:[%s2513 + $0x3c] sm:$0xf]
    %v2530 = vunpack.c.l.b16 %v2494
    %v2531 = vunpack.c.l.b16 %v2512
    %v2532 = vpack.c.b16 %v2286, %v2285
    %v2533 = vpack.c.b16 %v2288, %v2287
    %v2534 = vpack.c.b16 %v2290, %v2289
    %v2535 = vpack.c.b16 %v2530, %v2291
    %v2536 = vpack.c.b16 %v2294, %v2293
    %v2537 = vpack.c.b16 %v2296, %v2295
    %v2538 = vpack.c.b16 %v2298, %v2297
    %v2539 = vpack.c.b16 %v2531, %v2299
    %v2564 = vunpack.c.l.b16 %v2514
    %v2565 = vunpack.c.l.b16 %v2515
    %v2566 = vunpack.c.l.b16 %v2516
    %v2567 = vunpack.c.l.b16 %v2517
    %v2568 = vunpack.c.l.b16 %v2518
    %v2569 = vunpack.c.l.b16 %v2519
    %v2570 = vunpack.c.l.b16 %v2520
    %v2571 = vunpack.c.l.b16 %v2521
    %v2572 = vunpack.c.l.b16 %v2522
    %v2573 = vunpack.c.l.b16 %v2523
    %v2574 = vunpack.c.l.b16 %v2524
    %v2575 = vunpack.c.l.b16 %v2525
    %v2576 = vunpack.c.l.b16 %v2526
    %v2577 = vunpack.c.l.b16 %v2527
    %v2578 = vunpack.c.l.b16 %v2528
    %v2579 = vunpack.c.l.b16 %v2529
    %v2580 = vpack.c.b16 %v2565, %v2564
    %v2581 = vpack.c.b16 %v2567, %v2566
    %v2582 = vpack.c.b16 %v2569, %v2568
    %v2583 = vpack.c.b16 %v2571, %v2570
    %v2584 = vpack.c.b16 %v2573, %v2572
    %v2585 = vpack.c.b16 %v2575, %v2574
    %v2586 = vpack.c.b16 %v2577, %v2576
    %v2587 = vpack.c.b16 %v2579, %v2578
    %2596 = vmatprep.subr.bf16.mxu0 0
    %2597 = vmatpush1.bf16.msra.mxu0 %v2580
    %2598 = vmatprep.subr.bf16.mxu0 0
    %2599 = vmatpush1.bf16.msra.mxu0 %v2581
    %2600 = vmatprep.subr.bf16.mxu0 0
    %2601 = vmatpush1.bf16.msra.mxu0 %v2582
    %2602 = vmatprep.subr.bf16.mxu0 0
    %2603 = vmatpush1.bf16.msra.mxu0 %v2583
    %2604 = vmatprep.subr.bf16.mxu0 0
    %2605 = vmatpush1.bf16.msra.mxu0 %v2584
    %2606 = vmatprep.subr.bf16.mxu0 0
    %2607 = vmatpush1.bf16.msra.mxu0 %v2585
    %2608 = vmatprep.subr.bf16.mxu0 0
    %2609 = vmatpush1.bf16.msra.mxu0 %v2586
    %2610 = vmatprep.subr.bf16.mxu0 0
    %2611 = vmatpush1.bf16.msra.mxu0 %v2587
    %2612 = vmatprep.subr.bf16.mxu0 0
    %2613 = vmatpush1.bf16.msra.mxu0 0
    %2614 = vmatprep.subr.bf16.mxu0 0
    %2615 = vmatpush1.bf16.msra.mxu0 0
    %2616 = vmatprep.subr.bf16.mxu0 0
    %2617 = vmatpush1.bf16.msra.mxu0 0
    %2618 = vmatprep.subr.bf16.mxu0 0
    %2619 = vmatpush1.bf16.msra.mxu0 0
    %2620 = vmatprep.subr.bf16.mxu0 0
    %2621 = vmatpush1.bf16.msra.mxu0 0
    %2622 = vmatprep.subr.bf16.mxu0 0
    %2623 = vmatpush1.bf16.msra.mxu0 0
    %2624 = vmatprep.subr.bf16.mxu0 0
    %2625 = vmatpush1.bf16.msra.mxu0 0
    %2626 = vmatprep.subr.bf16.mxu0 0
    %2627 = vmatpush1.bf16.msra.mxu0 0
    %2628 = vmatprep.mubr.bf16.mxu0 0
    %2629 = vmatmul.mubr.bf16.gmra.mrb[0].mxu0 %v2532
    %v2630 = vpop.f32.mrb[0].mxu0
    %v2631 = vadd.f32 0.0, %v2630
    %v2632 = vpop.f32.mrb[0].mxu0
    %v2633 = vpop.f32.mrb[0].mxu0
    %v2634 = vadd.f32 0.0, %v2633
    %v2635 = vpop.f32.mrb[0].mxu0
    %2636 = vmatprep.mubr.bf16.mxu0 0
    %2637 = vmatmul.mubr.bf16.gmra.mrb[0].mxu0 %v2533
    %v2638 = vpop.f32.mrb[0].mxu0
    %v2639 = vadd.f32 0.0, %v2638
    %v2640 = vpop.f32.mrb[0].mxu0
    %v2641 = vpop.f32.mrb[0].mxu0
    %v2642 = vadd.f32 0.0, %v2641
    %v2643 = vpop.f32.mrb[0].mxu0
    %2644 = vmatprep.mubr.bf16.mxu0 0
    %2645 = vmatmul.mubr.bf16.gmra.mrb[0].mxu0 %v2534
    %v2646 = vpop.f32.mrb[0].mxu0
    %v2647 = vadd.f32 0.0, %v2646
    %v2648 = vpop.f32.mrb[0].mxu0
    %v2649 = vpop.f32.mrb[0].mxu0
    %v2650 = vadd.f32 0.0, %v2649
    %v2651 = vpop.f32.mrb[0].mxu0
    %2652 = vmatprep.mubr.bf16.mxu0 0
    %2653 = vmatmul.mubr.bf16.gmra.mrb[0].mxu0 %v2535
    %v2654 = vpop.f32.mrb[0].mxu0
    %v2655 = vadd.f32 0.0, %v2654
    %v2656 = vpop.f32.mrb[0].mxu0
    %v2657 = vpop.f32.mrb[0].mxu0
    %v2658 = vadd.f32 0.0, %v2657
    %v2659 = vpop.f32.mrb[0].mxu0
    %2660 = vmatprep.mubr.bf16.mxu0 0
    %2661 = vmatmul.mubr.bf16.gmra.mrb[0].mxu0 %v2536
    %v2662 = vpop.f32.mrb[0].mxu0
    %v2663 = vadd.f32 0.0, %v2662
    %v2664 = vpop.f32.mrb[0].mxu0
    %v2665 = vpop.f32.mrb[0].mxu0
    %v2666 = vadd.f32 0.0, %v2665
    %v2667 = vpop.f32.mrb[0].mxu0
    %2668 = vmatprep.mubr.bf16.mxu0 0
    %2669 = vmatmul.mubr.bf16.gmra.mrb[0].mxu0 %v2537
    %v2670 = vpop.f32.mrb[0].mxu0
    %v2671 = vadd.f32 0.0, %v2670
    %v2672 = vpop.f32.mrb[0].mxu0
    %v2673 = vpop.f32.mrb[0].mxu0
    %v2674 = vadd.f32 0.0, %v2673
    %v2675 = vpop.f32.mrb[0].mxu0
    %2676 = vmatprep.mubr.bf16.mxu0 0
    %2677 = vmatmul.mubr.bf16.gmra.mrb[0].mxu0 %v2538
    %v2678 = vpop.f32.mrb[0].mxu0
    %v2679 = vadd.f32 0.0, %v2678
    %v2680 = vpop.f32.mrb[0].mxu0
    %v2681 = vpop.f32.mrb[0].mxu0
    %v2682 = vadd.f32 0.0, %v2681
    %v2683 = vpop.f32.mrb[0].mxu0
    %2684 = vmatprep.mubr.bf16.mxu0 0
    %2685 = vmatmul.mubr.bf16.gmra.mrb[0].mxu0 %v2539
    %v2686 = vpop.f32.mrb[0].mxu0
    %v2687 = vadd.f32 0.0, %v2686
    %v2688 = vpop.f32.mrb[0].mxu0
    %v2689 = vpop.f32.mrb[0].mxu0
    %v2690 = vadd.f32 0.0, %v2689
    %v2691 = vpop.f32.mrb[0].mxu0
    %2692 = vdwg.mxu0
    %v2693 = vadd.f32 %v2461, %v2631
    %v2694 = vadd.f32 %v2462, %v2634
    %v2695 = vadd.f32 %v2463, %v2639
    %v2696 = vadd.f32 %v2464, %v2642
    %v2697 = vadd.f32 %v2465, %v2647
    %v2698 = vadd.f32 %v2466, %v2650
    %v2699 = vadd.f32 %v2467, %v2655
    %v2700 = vadd.f32 %v2468, %v2658
    %v2701 = vadd.f32 %v2469, %v2663
    %v2702 = vadd.f32 %v2470, %v2666
    %v2703 = vadd.f32 %v2471, %v2671
    %v2704 = vadd.f32 %v2472, %v2674
    %v2705 = vadd.f32 %v2473, %v2679
    %v2706 = vadd.f32 %v2474, %v2682
    %v2707 = vadd.f32 %v2475, %v2687
    %v2708 = vadd.f32 %v2476, %v2690
    %v2710 = vshrl.u32 %v1232, 16
    %v2712 = vrot.slane %v2710, 5
    %v2713 = vshll.u32 %v1232, 16
    %v2715 = vrot.slane %v2713, 6
    %v2716 = vor.u32 %v2712, %v2715
    %v2717 = vrot.slane %v2716, 4
    %v2719 = vshrl.u32 %v1965, 16
    %v2721 = vrot.slane %v2719, 5
    %v2722 = vshll.u32 %v1965, 16
    %v2724 = vrot.slane %v2722, 6
    %v2725 = vor.u32 %v2721, %v2724
    %v2726 = vsel %vm1978, %v2717, %v2725
    %v2728 = vshrl.u32 %v1242, 16
    %v2730 = vrot.slane %v2728, 5
    %v2731 = vshll.u32 %v1242, 16
    %v2733 = vrot.slane %v2731, 6
    %v2734 = vor.u32 %v2730, %v2733
    %v2735 = vrot.slane %v2734, 4
    %v2737 = vshrl.u32 %v1975, 16
    %v2739 = vrot.slane %v2737, 5
    %v2740 = vshll.u32 %v1975, 16
    %v2742 = vrot.slane %v2740, 6
    %v2743 = vor.u32 %v2739, %v2742
    %v2744 = vsel %vm1978, %v2735, %v2743
    %s2745 = scalar_lea.vmem [#allocation6], 512
    %v2746 = vld [vmem:[%s2745] sm:$0xf]
    %v2747 = vld [vmem:[%s2745 + $0x4] sm:$0xf]
    %v2748 = vld [vmem:[%s2745 + $0x8] sm:$0xf]
    %v2749 = vld [vmem:[%s2745 + $0xc] sm:$0xf]
    %v2750 = vld [vmem:[%s2745 + $0x10] sm:$0xf]
    %v2751 = vld [vmem:[%s2745 + $0x14] sm:$0xf]
    %v2752 = vld [vmem:[%s2745 + $0x18] sm:$0xf]
    %v2753 = vld [vmem:[%s2745 + $0x1c] sm:$0xf]
    %v2754 = vld [vmem:[%s2745 + $0x20] sm:$0xf]
    %v2755 = vld [vmem:[%s2745 + $0x24] sm:$0xf]
    %v2756 = vld [vmem:[%s2745 + $0x28] sm:$0xf]
    %v2757 = vld [vmem:[%s2745 + $0x2c] sm:$0xf]
    %v2758 = vld [vmem:[%s2745 + $0x30] sm:$0xf]
    %v2759 = vld [vmem:[%s2745 + $0x34] sm:$0xf]
    %v2760 = vld [vmem:[%s2745 + $0x38] sm:$0xf]
    %v2761 = vld [vmem:[%s2745 + $0x3c] sm:$0xf]
    %v2762 = vunpack.c.l.b16 %v2726
    %v2763 = vunpack.c.l.b16 %v2744
    %v2764 = vpack.c.b16 %v2762, %v2530
    %v2765 = vpack.c.b16 %v2763, %v2531
    %v2784 = vunpack.c.l.b16 %v2746
    %v2785 = vunpack.c.l.b16 %v2747
    %v2786 = vunpack.c.l.b16 %v2748
    %v2787 = vunpack.c.l.b16 %v2749
    %v2788 = vunpack.c.l.b16 %v2750
    %v2789 = vunpack.c.l.b16 %v2751
    %v2790 = vunpack.c.l.b16 %v2752
    %v2791 = vunpack.c.l.b16 %v2753
    %v2792 = vunpack.c.l.b16 %v2754
    %v2793 = vunpack.c.l.b16 %v2755
    %v2794 = vunpack.c.l.b16 %v2756
    %v2795 = vunpack.c.l.b16 %v2757
    %v2796 = vunpack.c.l.b16 %v2758
    %v2797 = vunpack.c.l.b16 %v2759
    %v2798 = vunpack.c.l.b16 %v2760
    %v2799 = vunpack.c.l.b16 %v2761
    %v2800 = vpack.c.b16 %v2785, %v2784
    %v2801 = vpack.c.b16 %v2787, %v2786
    %v2802 = vpack.c.b16 %v2789, %v2788
    %v2803 = vpack.c.b16 %v2791, %v2790
    %v2804 = vpack.c.b16 %v2793, %v2792
    %v2805 = vpack.c.b16 %v2795, %v2794
    %v2806 = vpack.c.b16 %v2797, %v2796
    %v2807 = vpack.c.b16 %v2799, %v2798
    %2816 = vmatprep.subr.bf16.mxu0 0
    %2817 = vmatpush1.bf16.msra.mxu0 %v2800
    %2818 = vmatprep.subr.bf16.mxu0 0
    %2819 = vmatpush1.bf16.msra.mxu0 %v2801
    %2820 = vmatprep.subr.bf16.mxu0 0
    %2821 = vmatpush1.bf16.msra.mxu0 %v2802
    %2822 = vmatprep.subr.bf16.mxu0 0
    %2823 = vmatpush1.bf16.msra.mxu0 %v2803
    %2824 = vmatprep.subr.bf16.mxu0 0
    %2825 = vmatpush1.bf16.msra.mxu0 %v2804
    %2826 = vmatprep.subr.bf16.mxu0 0
    %2827 = vmatpush1.bf16.msra.mxu0 %v2805
    %2828 = vmatprep.subr.bf16.mxu0 0
    %2829 = vmatpush1.bf16.msra.mxu0 %v2806
    %2830 = vmatprep.subr.bf16.mxu0 0
    %2831 = vmatpush1.bf16.msra.mxu0 %v2807
    %2832 = vmatprep.subr.bf16.mxu0 0
    %2833 = vmatpush1.bf16.msra.mxu0 0
    %2834 = vmatprep.subr.bf16.mxu0 0
    %2835 = vmatpush1.bf16.msra.mxu0 0
    %2836 = vmatprep.subr.bf16.mxu0 0
    %2837 = vmatpush1.bf16.msra.mxu0 0
    %2838 = vmatprep.subr.bf16.mxu0 0
    %2839 = vmatpush1.bf16.msra.mxu0 0
    %2840 = vmatprep.subr.bf16.mxu0 0
    %2841 = vmatpush1.bf16.msra.mxu0 0
    %2842 = vmatprep.subr.bf16.mxu0 0
    %2843 = vmatpush1.bf16.msra.mxu0 0
    %2844 = vmatprep.subr.bf16.mxu0 0
    %2845 = vmatpush1.bf16.msra.mxu0 0
    %2846 = vmatprep.subr.bf16.mxu0 0
    %2847 = vmatpush1.bf16.msra.mxu0 0
    %2848 = vmatprep.mubr.bf16.mxu0 0
    %2849 = vmatmul.mubr.bf16.gmra.mrb[0].mxu0 %v2301
    %v2850 = vpop.f32.mrb[0].mxu0
    %v2851 = vadd.f32 0.0, %v2850
    %v2852 = vpop.f32.mrb[0].mxu0
    %v2853 = vpop.f32.mrb[0].mxu0
    %v2854 = vadd.f32 0.0, %v2853
    %v2855 = vpop.f32.mrb[0].mxu0
    %2856 = vmatprep.mubr.bf16.mxu0 0
    %2857 = vmatmul.mubr.bf16.gmra.mrb[0].mxu0 %v2302
    %v2858 = vpop.f32.mrb[0].mxu0
    %v2859 = vadd.f32 0.0, %v2858
    %v2860 = vpop.f32.mrb[0].mxu0
    %v2861 = vpop.f32.mrb[0].mxu0
    %v2862 = vadd.f32 0.0, %v2861
    %v2863 = vpop.f32.mrb[0].mxu0
    %2864 = vmatprep.mubr.bf16.mxu0 0
    %2865 = vmatmul.mubr.bf16.gmra.mrb[0].mxu0 %v2303
    %v2866 = vpop.f32.mrb[0].mxu0
    %v2867 = vadd.f32 0.0, %v2866
    %v2868 = vpop.f32.mrb[0].mxu0
    %v2869 = vpop.f32.mrb[0].mxu0
    %v2870 = vadd.f32 0.0, %v2869
    %v2871 = vpop.f32.mrb[0].mxu0
    %2872 = vmatprep.mubr.bf16.mxu0 0
    %2873 = vmatmul.mubr.bf16.gmra.mrb[0].mxu0 %v2764
    %v2874 = vpop.f32.mrb[0].mxu0
    %v2875 = vadd.f32 0.0, %v2874
    %v2876 = vpop.f32.mrb[0].mxu0
    %v2877 = vpop.f32.mrb[0].mxu0
    %v2878 = vadd.f32 0.0, %v2877
    %v2879 = vpop.f32.mrb[0].mxu0
    %2880 = vmatprep.mubr.bf16.mxu0 0
    %2881 = vmatmul.mubr.bf16.gmra.mrb[0].mxu0 %v2305
    %v2882 = vpop.f32.mrb[0].mxu0
    %v2883 = vadd.f32 0.0, %v2882
    %v2884 = vpop.f32.mrb[0].mxu0
    %v2885 = vpop.f32.mrb[0].mxu0
    %v2886 = vadd.f32 0.0, %v2885
    %v2887 = vpop.f32.mrb[0].mxu0
    %2888 = vmatprep.mubr.bf16.mxu0 0
    %2889 = vmatmul.mubr.bf16.gmra.mrb[0].mxu0 %v2306
    %v2890 = vpop.f32.mrb[0].mxu0
    %v2891 = vadd.f32 0.0, %v2890
    %v2892 = vpop.f32.mrb[0].mxu0
    %v2893 = vpop.f32.mrb[0].mxu0
    %v2894 = vadd.f32 0.0, %v2893
    %v2895 = vpop.f32.mrb[0].mxu0
    %2896 = vmatprep.mubr.bf16.mxu0 0
    %2897 = vmatmul.mubr.bf16.gmra.mrb[0].mxu0 %v2307
    %v2898 = vpop.f32.mrb[0].mxu0
    %v2899 = vadd.f32 0.0, %v2898
    %v2900 = vpop.f32.mrb[0].mxu0
    %v2901 = vpop.f32.mrb[0].mxu0
    %v2902 = vadd.f32 0.0, %v2901
    %v2903 = vpop.f32.mrb[0].mxu0
    %2904 = vmatprep.mubr.bf16.mxu0 0
    %2905 = vmatmul.mubr.bf16.gmra.mrb[0].mxu0 %v2765
    %v2906 = vpop.f32.mrb[0].mxu0
    %v2907 = vadd.f32 0.0, %v2906
    %v2908 = vpop.f32.mrb[0].mxu0
    %v2909 = vpop.f32.mrb[0].mxu0
    %v2910 = vadd.f32 0.0, %v2909
    %v2911 = vpop.f32.mrb[0].mxu0
    %2912 = vdwg.mxu0
    %v2913 = vadd.f32 %v2693, %v2851
    %v2914 = vadd.f32 %v2694, %v2854
    %v2915 = vadd.f32 %v2695, %v2859
    %v2916 = vadd.f32 %v2696, %v2862
    %v2917 = vadd.f32 %v2697, %v2867
    %v2918 = vadd.f32 %v2698, %v2870
    %v2919 = vadd.f32 %v2699, %v2875
    %v2920 = vadd.f32 %v2700, %v2878
    %v2921 = vadd.f32 %v2701, %v2883
    %v2922 = vadd.f32 %v2702, %v2886
    %v2923 = vadd.f32 %v2703, %v2891
    %v2924 = vadd.f32 %v2704, %v2894
    %v2925 = vadd.f32 %v2705, %v2899
    %v2926 = vadd.f32 %v2706, %v2902
    %v2927 = vadd.f32 %v2707, %v2907
    %v2928 = vadd.f32 %v2708, %v2910
    %v2929 = vld [vmem:[%s2] sm:$0x1]
    %v2931 = vlaneseq
    %v2932 = vshrl.u32 %v2931, 7
    %v2933 = vsub.s32 0, %v2932
    %v2934 = vrot.slane %v2929, %v2933
    %v2936 = vmul.f32 %v2913, %v2934
    %v2937 = vmul.f32 %v2914, %v2934
    %v2938 = vmul.f32 %v2915, %v2934
    %v2939 = vmul.f32 %v2916, %v2934
    %v2940 = vmul.f32 %v2917, %v2934
    %v2941 = vmul.f32 %v2918, %v2934
    %v2942 = vmul.f32 %v2919, %v2934
    %v2943 = vmul.f32 %v2920, %v2934
    %v2944 = vmul.f32 %v2921, %v2934
    %v2945 = vmul.f32 %v2922, %v2934
    %v2946 = vmul.f32 %v2923, %v2934
    %v2947 = vmul.f32 %v2924, %v2934
    %v2948 = vmul.f32 %v2925, %v2934
    %v2949 = vmul.f32 %v2926, %v2934
    %v2950 = vmul.f32 %v2927, %v2934
    %v2951 = vmul.f32 %v2928, %v2934
    %v2952 = vld [vmem:[%s3] sm:$0x1]
    %v2954 = vlaneseq
    %v2955 = vshrl.u32 %v2954, 7
    %v2956 = vsub.s32 0, %v2955
    %v2957 = vrot.slane %v2952, %v2956
    %v2959 = vadd.f32 %v2936, %v2957
    %v2960 = vadd.f32 %v2937, %v2957
    %v2961 = vadd.f32 %v2938, %v2957
    %v2962 = vadd.f32 %v2939, %v2957
    %v2963 = vadd.f32 %v2940, %v2957
    %v2964 = vadd.f32 %v2941, %v2957
    %v2965 = vadd.f32 %v2942, %v2957
    %v2966 = vadd.f32 %v2943, %v2957
    %v2967 = vadd.f32 %v2944, %v2957
    %v2968 = vadd.f32 %v2945, %v2957
    %v2969 = vadd.f32 %v2946, %v2957
    %v2970 = vadd.f32 %v2947, %v2957
    %v2971 = vadd.f32 %v2948, %v2957
    %v2972 = vadd.f32 %v2949, %v2957
    %v2973 = vadd.f32 %v2950, %v2957
    %v2974 = vadd.f32 %v2951, %v2957
    %v2975 = vmax.f32 %v2959, 0.0
    %v2976 = vmax.f32 %v2960, 0.0
    %v2977 = vmax.f32 %v2961, 0.0
    %v2978 = vmax.f32 %v2962, 0.0
    %v2979 = vmax.f32 %v2963, 0.0
    %v2980 = vmax.f32 %v2964, 0.0
    %v2981 = vmax.f32 %v2965, 0.0
    %v2982 = vmax.f32 %v2966, 0.0
    %v2983 = vmax.f32 %v2967, 0.0
    %v2984 = vmax.f32 %v2968, 0.0
    %v2985 = vmax.f32 %v2969, 0.0
    %v2986 = vmax.f32 %v2970, 0.0
    %v2987 = vmax.f32 %v2971, 0.0
    %v2988 = vmax.f32 %v2972, 0.0
    %v2989 = vmax.f32 %v2973, 0.0
    %v2990 = vmax.f32 %v2974, 0.0
    %v2991 = vpack.c.bf16 %v2975, %v2975
    %v2992 = vpack.c.bf16 %v2976, %v2976
    %v2993 = vpack.c.bf16 %v2977, %v2977
    %v2994 = vpack.c.bf16 %v2978, %v2978
    %v2995 = vpack.c.bf16 %v2979, %v2979
    %v2996 = vpack.c.bf16 %v2980, %v2980
    %v2997 = vpack.c.bf16 %v2981, %v2981
    %v2998 = vpack.c.bf16 %v2982, %v2982
    %v2999 = vpack.c.bf16 %v2983, %v2983
    %v3000 = vpack.c.bf16 %v2984, %v2984
    %v3001 = vpack.c.bf16 %v2985, %v2985
    %v3002 = vpack.c.bf16 %v2986, %v2986
    %v3003 = vpack.c.bf16 %v2987, %v2987
    %v3004 = vpack.c.bf16 %v2988, %v2988
    %v3005 = vpack.c.bf16 %v2989, %v2989
    %v3006 = vpack.c.bf16 %v2990, %v2990
    %v3023 = vunpack.c.l.b16 %v2991
    %v3024 = vunpack.c.l.b16 %v2992
    %v3025 = vunpack.c.l.b16 %v2993
    %v3026 = vunpack.c.l.b16 %v2994
    %v3027 = vunpack.c.l.b16 %v2995
    %v3028 = vunpack.c.l.b16 %v2996
    %v3029 = vunpack.c.l.b16 %v2997
    %v3030 = vunpack.c.l.b16 %v2998
    %v3031 = vunpack.c.l.b16 %v2999
    %v3032 = vunpack.c.l.b16 %v3000
    %v3033 = vunpack.c.l.b16 %v3001
    %v3034 = vunpack.c.l.b16 %v3002
    %v3035 = vunpack.c.l.b16 %v3003
    %v3036 = vunpack.c.l.b16 %v3004
    %v3037 = vunpack.c.l.b16 %v3005
    %v3038 = vunpack.c.l.b16 %v3006
    %v3039 = vpack.c.b16 %v3023, %v3023
    %v3040 = vpack.c.b16 %v3024, %v3024
    %v3041 = vpack.c.b16 %v3025, %v3025
    %v3042 = vpack.c.b16 %v3026, %v3026
    %v3043 = vpack.c.b16 %v3027, %v3027
    %v3044 = vpack.c.b16 %v3028, %v3028
    %v3045 = vpack.c.b16 %v3029, %v3029
    %v3046 = vpack.c.b16 %v3030, %v3030
    %v3047 = vpack.c.b16 %v3031, %v3031
    %v3048 = vpack.c.b16 %v3032, %v3032
    %v3049 = vpack.c.b16 %v3033, %v3033
    %v3050 = vpack.c.b16 %v3034, %v3034
    %v3051 = vpack.c.b16 %v3035, %v3035
    %v3052 = vpack.c.b16 %v3036, %v3036
    %v3053 = vpack.c.b16 %v3037, %v3037
    %v3054 = vpack.c.b16 %v3038, %v3038
    %v3055 = vrot.slane %v3039, 7
    %v3056 = vrot.slane %v3055, 4
    %v3057 = vrot.slane %v3040, 7
    %v3058 = vrot.slane %v3057, 4
    %v3059 = vrot.slane %v3041, 7
    %v3060 = vrot.slane %v3059, 4
    %v3061 = vrot.slane %v3042, 7
    %v3062 = vrot.slane %v3061, 4
    %v3063 = vrot.slane %v3043, 7
    %v3064 = vrot.slane %v3063, 4
    %v3065 = vrot.slane %v3044, 7
    %v3066 = vrot.slane %v3065, 4
    %v3067 = vrot.slane %v3045, 7
    %v3068 = vrot.slane %v3067, 4
    %v3069 = vrot.slane %v3046, 7
    %v3070 = vrot.slane %v3069, 4
    %v3071 = vrot.slane %v3047, 7
    %v3072 = vrot.slane %v3071, 4
    %v3073 = vrot.slane %v3048, 7
    %v3074 = vrot.slane %v3073, 4
    %v3075 = vrot.slane %v3049, 7
    %v3076 = vrot.slane %v3075, 4
    %v3077 = vrot.slane %v3050, 7
    %v3078 = vrot.slane %v3077, 4
    %v3079 = vrot.slane %v3051, 7
    %v3080 = vrot.slane %v3079, 4
    %v3081 = vrot.slane %v3052, 7
    %v3082 = vrot.slane %v3081, 4
    %v3083 = vrot.slane %v3053, 7
    %v3084 = vrot.slane %v3083, 4
    %v3085 = vrot.slane %v3054, 7
    %v3086 = vrot.slane %v3085, 4
    %3119 = vst [vmem:[%s310] sm:$0xe] %v3055
    %3120 = vst [vmem:[%s310 + $0x4] sm:$0x1] %v3056
    %3121 = vst [vmem:[%s310 + $0x8] sm:$0xe] %v3057
    %3122 = vst [vmem:[%s310 + $0xc] sm:$0x1] %v3058
    %3123 = vst [vmem:[%s310 + $0x10] sm:$0xe] %v3059
    %3124 = vst [vmem:[%s310 + $0x14] sm:$0x1] %v3060
    %3125 = vst [vmem:[%s310 + $0x18] sm:$0xe] %v3061
    %3126 = vst [vmem:[%s310 + $0x1c] sm:$0x1] %v3062
    %3127 = vst [vmem:[%s310 + $0x20] sm:$0xe] %v3063
    %3128 = vst [vmem:[%s310 + $0x24] sm:$0x1] %v3064
    %3129 = vst [vmem:[%s310 + $0x28] sm:$0xe] %v3065
    %3130 = vst [vmem:[%s310 + $0x2c] sm:$0x1] %v3066
    %3131 = vst [vmem:[%s310 + $0x30] sm:$0xe] %v3067
    %3132 = vst [vmem:[%s310 + $0x34] sm:$0x1] %v3068
    %3133 = vst [vmem:[%s310 + $0x38] sm:$0xe] %v3069
    %3134 = vst [vmem:[%s310 + $0x3c] sm:$0x1] %v3070
    %3135 = vst [vmem:[%s310 + $0x58] sm:$0xe] %v3071
    %3136 = vst [vmem:[%s310 + $0x5c] sm:$0x1] %v3072
    %3137 = vst [vmem:[%s310 + $0x60] sm:$0xe] %v3073
    %3138 = vst [vmem:[%s310 + $0x64] sm:$0x1] %v3074
    %3139 = vst [vmem:[%s310 + $0x68] sm:$0xe] %v3075
    %3140 = vst [vmem:[%s310 + $0x6c] sm:$0x1] %v3076
    %3141 = vst [vmem:[%s310 + $0x70] sm:$0xe] %v3077
    %3142 = vst [vmem:[%s310 + $0x74] sm:$0x1] %v3078
    %3143 = vst [vmem:[%s310 + $0x78] sm:$0xe] %v3079
    %3144 = vst [vmem:[%s310 + $0x7c] sm:$0x1] %v3080
    %3145 = vst [vmem:[%s310 + $0x80] sm:$0xe] %v3081
    %3146 = vst [vmem:[%s310 + $0x84] sm:$0x1] %v3082
    %3147 = vst [vmem:[%s310 + $0x88] sm:$0xe] %v3083
    %3148 = vst [vmem:[%s310 + $0x8c] sm:$0x1] %v3084
    %3149 = vst [vmem:[%s310 + $0x90] sm:$0xe] %v3085
    %3150 = vst [vmem:[%s310 + $0x94] sm:$0x1] %v3086
    %v3151 = vld [vmem:[#allocation2 + $0x8] sm:$0xf]
    %v3152 = vld [vmem:[#allocation2 + $0xc] sm:$0x1]
    %v3153 = vld [vmem:[#allocation2 + $0x10] sm:$0xf]
    %v3154 = vld [vmem:[#allocation2 + $0x14] sm:$0x1]
    %v3155 = vld [vmem:[#allocation2 + $0x18] sm:$0xf]
    %v3156 = vld [vmem:[#allocation2 + $0x1c] sm:$0x1]
    %v3157 = vld [vmem:[#allocation2 + $0x20] sm:$0xf]
    %v3158 = vld [vmem:[#allocation2 + $0x24] sm:$0x1]
    %v3159 = vld [vmem:[#allocation2 + $0x28] sm:$0xf]
    %v3160 = vld [vmem:[#allocation2 + $0x2c] sm:$0x1]
    %v3161 = vld [vmem:[#allocation2 + $0x30] sm:$0xf]
    %v3162 = vld [vmem:[#allocation2 + $0x34] sm:$0x1]
    %v3163 = vld [vmem:[#allocation2 + $0x38] sm:$0xf]
    %v3164 = vld [vmem:[#allocation2 + $0x3c] sm:$0x1]
    %v3165 = vld [vmem:[#allocation2 + $0x40] sm:$0xf]
    %v3166 = vld [vmem:[#allocation2 + $0x44] sm:$0x1]
    %v3167 = vld [vmem:[#allocation2 + $0x48] sm:$0xf]
    %v3168 = vld [vmem:[#allocation2 + $0x4c] sm:$0x1]
    %v3169 = vld [vmem:[#allocation2 + $0x50] sm:$0xf]
    %v3170 = vld [vmem:[#allocation2 + $0x54] sm:$0x1]
    %v3171 = vld [vmem:[#allocation2 + $0x60] sm:$0xf]
    %v3172 = vld [vmem:[#allocation2 + $0x64] sm:$0x1]
    %v3173 = vld [vmem:[#allocation2 + $0x68] sm:$0xf]
    %v3174 = vld [vmem:[#allocation2 + $0x6c] sm:$0x1]
    %v3175 = vld [vmem:[#allocation2 + $0x70] sm:$0xf]
    %v3176 = vld [vmem:[#allocation2 + $0x74] sm:$0x1]
    %v3177 = vld [vmem:[#allocation2 + $0x78] sm:$0xf]
    %v3178 = vld [vmem:[#allocation2 + $0x7c] sm:$0x1]
    %v3179 = vld [vmem:[#allocation2 + $0x80] sm:$0xf]
    %v3180 = vld [vmem:[#allocation2 + $0x84] sm:$0x1]
    %v3181 = vld [vmem:[#allocation2 + $0x88] sm:$0xf]
    %v3182 = vld [vmem:[#allocation2 + $0x8c] sm:$0x1]
    %v3183 = vld [vmem:[#allocation2 + $0x90] sm:$0xf]
    %v3184 = vld [vmem:[#allocation2 + $0x94] sm:$0x1]
    %v3185 = vld [vmem:[#allocation2 + $0x98] sm:$0xf]
    %v3186 = vld [vmem:[#allocation2 + $0x9c] sm:$0x1]
    %v3187 = vld [vmem:[#allocation2 + $0xa0] sm:$0xf]
    %v3188 = vld [vmem:[#allocation2 + $0xa4] sm:$0x1]
    %v3189 = vld [vmem:[#allocation2 + $0xa8] sm:$0xf]
    %v3190 = vld [vmem:[#allocation2 + $0xac] sm:$0x1]
    %v3192 = vshrl.u32 %v3151, 16
    %v3194 = vrot.slane %v3192, 4
    %v3195 = vshll.u32 %v3151, 16
    %v3197 = vrot.slane %v3195, 5
    %v3198 = vor.u32 %v3194, %v3197
    %v3199 = vrot.slane %v3198, 4
    %v3201 = vshll.u32 %v3152, 16
    %v3203 = vrot.slane %v3201, 5
    %v3204 = vsel %vm385, %v3199, %v3203
    %v3206 = vshrl.u32 %v3153, 16
    %v3208 = vrot.slane %v3206, 4
    %v3209 = vshll.u32 %v3153, 16
    %v3211 = vrot.slane %v3209, 5
    %v3212 = vor.u32 %v3208, %v3211
    %v3213 = vrot.slane %v3212, 4
    %v3215 = vshll.u32 %v3154, 16
    %v3217 = vrot.slane %v3215, 5
    %v3218 = vsel %vm385, %v3213, %v3217
    %v3220 = vshrl.u32 %v3155, 16
    %v3222 = vrot.slane %v3220, 4
    %v3223 = vshll.u32 %v3155, 16
    %v3225 = vrot.slane %v3223, 5
    %v3226 = vor.u32 %v3222, %v3225
    %v3227 = vrot.slane %v3226, 4
    %v3229 = vshll.u32 %v3156, 16
    %v3231 = vrot.slane %v3229, 5
    %v3232 = vsel %vm385, %v3227, %v3231
    %v3234 = vshrl.u32 %v3157, 16
    %v3236 = vrot.slane %v3234, 4
    %v3237 = vshll.u32 %v3157, 16
    %v3239 = vrot.slane %v3237, 5
    %v3240 = vor.u32 %v3236, %v3239
    %v3241 = vrot.slane %v3240, 4
    %v3243 = vshll.u32 %v3158, 16
    %v3245 = vrot.slane %v3243, 5
    %v3246 = vsel %vm385, %v3241, %v3245
    %v3248 = vshrl.u32 %v3159, 16
    %v3250 = vrot.slane %v3248, 4
    %v3251 = vshll.u32 %v3159, 16
    %v3253 = vrot.slane %v3251, 5
    %v3254 = vor.u32 %v3250, %v3253
    %v3255 = vrot.slane %v3254, 4
    %v3257 = vshll.u32 %v3160, 16
    %v3259 = vrot.slane %v3257, 5
    %v3260 = vsel %vm385, %v3255, %v3259
    %v3262 = vshrl.u32 %v3161, 16
    %v3264 = vrot.slane %v3262, 4
    %v3265 = vshll.u32 %v3161, 16
    %v3267 = vrot.slane %v3265, 5
    %v3268 = vor.u32 %v3264, %v3267
    %v3269 = vrot.slane %v3268, 4
    %v3271 = vshll.u32 %v3162, 16
    %v3273 = vrot.slane %v3271, 5
    %v3274 = vsel %vm385, %v3269, %v3273
    %v3276 = vshrl.u32 %v3163, 16
    %v3278 = vrot.slane %v3276, 4
    %v3279 = vshll.u32 %v3163, 16
    %v3281 = vrot.slane %v3279, 5
    %v3282 = vor.u32 %v3278, %v3281
    %v3283 = vrot.slane %v3282, 4
    %v3285 = vshll.u32 %v3164, 16
    %v3287 = vrot.slane %v3285, 5
    %v3288 = vsel %vm385, %v3283, %v3287
    %v3290 = vshrl.u32 %v3165, 16
    %v3292 = vrot.slane %v3290, 4
    %v3293 = vshll.u32 %v3165, 16
    %v3295 = vrot.slane %v3293, 5
    %v3296 = vor.u32 %v3292, %v3295
    %v3297 = vrot.slane %v3296, 4
    %v3299 = vshll.u32 %v3166, 16
    %v3301 = vrot.slane %v3299, 5
    %v3302 = vsel %vm385, %v3297, %v3301
    %v3304 = vshrl.u32 %v3171, 16
    %v3306 = vrot.slane %v3304, 4
    %v3307 = vshll.u32 %v3171, 16
    %v3309 = vrot.slane %v3307, 5
    %v3310 = vor.u32 %v3306, %v3309
    %v3311 = vrot.slane %v3310, 4
    %v3313 = vshll.u32 %v3172, 16
    %v3315 = vrot.slane %v3313, 5
    %v3316 = vsel %vm385, %v3311, %v3315
    %v3318 = vshrl.u32 %v3173, 16
    %v3320 = vrot.slane %v3318, 4
    %v3321 = vshll.u32 %v3173, 16
    %v3323 = vrot.slane %v3321, 5
    %v3324 = vor.u32 %v3320, %v3323
    %v3325 = vrot.slane %v3324, 4
    %v3327 = vshll.u32 %v3174, 16
    %v3329 = vrot.slane %v3327, 5
    %v3330 = vsel %vm385, %v3325, %v3329
    %v3332 = vshrl.u32 %v3175, 16
    %v3334 = vrot.slane %v3332, 4
    %v3335 = vshll.u32 %v3175, 16
    %v3337 = vrot.slane %v3335, 5
    %v3338 = vor.u32 %v3334, %v3337
    %v3339 = vrot.slane %v3338, 4
    %v3341 = vshll.u32 %v3176, 16
    %v3343 = vrot.slane %v3341, 5
    %v3344 = vsel %vm385, %v3339, %v3343
    %v3346 = vshrl.u32 %v3177, 16
    %v3348 = vrot.slane %v3346, 4
    %v3349 = vshll.u32 %v3177, 16
    %v3351 = vrot.slane %v3349, 5
    %v3352 = vor.u32 %v3348, %v3351
    %v3353 = vrot.slane %v3352, 4
    %v3355 = vshll.u32 %v3178, 16
    %v3357 = vrot.slane %v3355, 5
    %v3358 = vsel %vm385, %v3353, %v3357
    %v3360 = vshrl.u32 %v3179, 16
    %v3362 = vrot.slane %v3360, 4
    %v3363 = vshll.u32 %v3179, 16
    %v3365 = vrot.slane %v3363, 5
    %v3366 = vor.u32 %v3362, %v3365
    %v3367 = vrot.slane %v3366, 4
    %v3369 = vshll.u32 %v3180, 16
    %v3371 = vrot.slane %v3369, 5
    %v3372 = vsel %vm385, %v3367, %v3371
    %v3374 = vshrl.u32 %v3181, 16
    %v3376 = vrot.slane %v3374, 4
    %v3377 = vshll.u32 %v3181, 16
    %v3379 = vrot.slane %v3377, 5
    %v3380 = vor.u32 %v3376, %v3379
    %v3381 = vrot.slane %v3380, 4
    %v3383 = vshll.u32 %v3182, 16
    %v3385 = vrot.slane %v3383, 5
    %v3386 = vsel %vm385, %v3381, %v3385
    %v3388 = vshrl.u32 %v3183, 16
    %v3390 = vrot.slane %v3388, 4
    %v3391 = vshll.u32 %v3183, 16
    %v3393 = vrot.slane %v3391, 5
    %v3394 = vor.u32 %v3390, %v3393
    %v3395 = vrot.slane %v3394, 4
    %v3397 = vshll.u32 %v3184, 16
    %v3399 = vrot.slane %v3397, 5
    %v3400 = vsel %vm385, %v3395, %v3399
    %v3402 = vshrl.u32 %v3185, 16
    %v3404 = vrot.slane %v3402, 4
    %v3405 = vshll.u32 %v3185, 16
    %v3407 = vrot.slane %v3405, 5
    %v3408 = vor.u32 %v3404, %v3407
    %v3409 = vrot.slane %v3408, 4
    %v3411 = vshll.u32 %v3186, 16
    %v3413 = vrot.slane %v3411, 5
    %v3414 = vsel %vm385, %v3409, %v3413
    %v3415 = vld [vmem:[#allocation8] sm:$0xf]
    %v3416 = vld [vmem:[#allocation8 + $0x4] sm:$0xf]
    %v3417 = vld [vmem:[#allocation8 + $0x8] sm:$0xf]
    %v3418 = vld [vmem:[#allocation8 + $0xc] sm:$0xf]
    %v3419 = vld [vmem:[#allocation8 + $0x10] sm:$0xf]
    %v3420 = vld [vmem:[#allocation8 + $0x14] sm:$0xf]
    %v3421 = vld [vmem:[#allocation8 + $0x18] sm:$0xf]
    %v3422 = vld [vmem:[#allocation8 + $0x1c] sm:$0xf]
    %v3423 = vld [vmem:[#allocation8 + $0x20] sm:$0xf]
    %v3424 = vld [vmem:[#allocation8 + $0x24] sm:$0xf]
    %v3425 = vld [vmem:[#allocation8 + $0x28] sm:$0xf]
    %v3426 = vld [vmem:[#allocation8 + $0x2c] sm:$0xf]
    %v3427 = vld [vmem:[#allocation8 + $0x30] sm:$0xf]
    %v3428 = vld [vmem:[#allocation8 + $0x34] sm:$0xf]
    %v3429 = vld [vmem:[#allocation8 + $0x38] sm:$0xf]
    %v3430 = vld [vmem:[#allocation8 + $0x3c] sm:$0xf]
    %v3432 = vshrl.u32 %v3167, 16
    %v3434 = vrot.slane %v3432, 4
    %v3435 = vshll.u32 %v3167, 16
    %v3437 = vrot.slane %v3435, 5
    %v3438 = vor.u32 %v3434, %v3437
    %v3439 = vrot.slane %v3438, 4
    %v3441 = vshll.u32 %v3168, 16
    %v3443 = vrot.slane %v3441, 5
    %v3444 = vsel %vm385, %v3439, %v3443
    %v3446 = vshrl.u32 %v3187, 16
    %v3448 = vrot.slane %v3446, 4
    %v3449 = vshll.u32 %v3187, 16
    %v3451 = vrot.slane %v3449, 5
    %v3452 = vor.u32 %v3448, %v3451
    %v3453 = vrot.slane %v3452, 4
    %v3455 = vshll.u32 %v3188, 16
    %v3457 = vrot.slane %v3455, 5
    %v3458 = vsel %vm385, %v3453, %v3457
    %s3459 = scalar_lea.vmem [#allocation8], 192
    %v3460 = vld [vmem:[%s3459] sm:$0xf]
    %v3461 = vld [vmem:[%s3459 + $0x4] sm:$0xf]
    %v3462 = vld [vmem:[%s3459 + $0x8] sm:$0xf]
    %v3463 = vld [vmem:[%s3459 + $0xc] sm:$0xf]
    %v3464 = vld [vmem:[%s3459 + $0x10] sm:$0xf]
    %v3465 = vld [vmem:[%s3459 + $0x14] sm:$0xf]
    %v3466 = vld [vmem:[%s3459 + $0x18] sm:$0xf]
    %v3467 = vld [vmem:[%s3459 + $0x1c] sm:$0xf]
    %v3468 = vld [vmem:[%s3459 + $0x20] sm:$0xf]
    %v3469 = vld [vmem:[%s3459 + $0x24] sm:$0xf]
    %v3470 = vld [vmem:[%s3459 + $0x28] sm:$0xf]
    %v3471 = vld [vmem:[%s3459 + $0x2c] sm:$0xf]
    %v3472 = vld [vmem:[%s3459 + $0x30] sm:$0xf]
    %v3473 = vld [vmem:[%s3459 + $0x34] sm:$0xf]
    %v3474 = vld [vmem:[%s3459 + $0x38] sm:$0xf]
    %v3475 = vld [vmem:[%s3459 + $0x3c] sm:$0xf]
    %v3476 = vunpack.c.l.b16 %v3218
    %v3477 = vunpack.c.l.b16 %v3232
    %v3478 = vunpack.c.l.b16 %v3246
    %v3479 = vunpack.c.l.b16 %v3260
    %v3480 = vunpack.c.l.b16 %v3274
    %v3481 = vunpack.c.l.b16 %v3288
    %v3482 = vunpack.c.l.b16 %v3302
    %v3483 = vunpack.c.l.b16 %v3444
    %v3484 = vunpack.c.l.b16 %v3330
    %v3485 = vunpack.c.l.b16 %v3344
    %v3486 = vunpack.c.l.b16 %v3358
    %v3487 = vunpack.c.l.b16 %v3372
    %v3488 = vunpack.c.l.b16 %v3386
    %v3489 = vunpack.c.l.b16 %v3400
    %v3490 = vunpack.c.l.b16 %v3414
    %v3491 = vunpack.c.l.b16 %v3458
    %v3492 = vpack.c.b16 %v3477, %v3476
    %v3493 = vpack.c.b16 %v3479, %v3478
    %v3494 = vpack.c.b16 %v3481, %v3480
    %v3495 = vpack.c.b16 %v3483, %v3482
    %v3496 = vpack.c.b16 %v3485, %v3484
    %v3497 = vpack.c.b16 %v3487, %v3486
    %v3498 = vpack.c.b16 %v3489, %v3488
    %v3499 = vpack.c.b16 %v3491, %v3490
    %v3524 = vunpack.c.l.b16 %v3460
    %v3525 = vunpack.c.l.b16 %v3461
    %v3526 = vunpack.c.l.b16 %v3462
    %v3527 = vunpack.c.l.b16 %v3463
    %v3528 = vunpack.c.l.b16 %v3464
    %v3529 = vunpack.c.l.b16 %v3465
    %v3530 = vunpack.c.l.b16 %v3466
    %v3531 = vunpack.c.l.b16 %v3467
    %v3532 = vunpack.c.l.b16 %v3468
    %v3533 = vunpack.c.l.b16 %v3469
    %v3534 = vunpack.c.l.b16 %v3470
    %v3535 = vunpack.c.l.b16 %v3471
    %v3536 = vunpack.c.l.b16 %v3472
    %v3537 = vunpack.c.l.b16 %v3473
    %v3538 = vunpack.c.l.b16 %v3474
    %v3539 = vunpack.c.l.b16 %v3475
    %v3540 = vpack.c.b16 %v3525, %v3524
    %v3541 = vpack.c.b16 %v3527, %v3526
    %v3542 = vpack.c.b16 %v3529, %v3528
    %v3543 = vpack.c.b16 %v3531, %v3530
    %v3544 = vpack.c.b16 %v3533, %v3532
    %v3545 = vpack.c.b16 %v3535, %v3534
    %v3546 = vpack.c.b16 %v3537, %v3536
    %v3547 = vpack.c.b16 %v3539, %v3538
    %3556 = vmatprep.subr.bf16.mxu0 0
    %3557 = vmatpush1.bf16.msra.mxu0 %v3540
    %3558 = vmatprep.subr.bf16.mxu0 0
    %3559 = vmatpush1.bf16.msra.mxu0 %v3541
    %3560 = vmatprep.subr.bf16.mxu0 0
    %3561 = vmatpush1.bf16.msra.mxu0 %v3542
    %3562 = vmatprep.subr.bf16.mxu0 0
    %3563 = vmatpush1.bf16.msra.mxu0 %v3543
    %3564 = vmatprep.subr.bf16.mxu0 0
    %3565 = vmatpush1.bf16.msra.mxu0 %v3544
    %3566 = vmatprep.subr.bf16.mxu0 0
    %3567 = vmatpush1.bf16.msra.mxu0 %v3545
    %3568 = vmatprep.subr.bf16.mxu0 0
    %3569 = vmatpush1.bf16.msra.mxu0 %v3546
    %3570 = vmatprep.subr.bf16.mxu0 0
    %3571 = vmatpush1.bf16.msra.mxu0 %v3547
    %3572 = vmatprep.subr.bf16.mxu0 0
    %3573 = vmatpush1.bf16.msra.mxu0 0
    %3574 = vmatprep.subr.bf16.mxu0 0
    %3575 = vmatpush1.bf16.msra.mxu0 0
    %3576 = vmatprep.subr.bf16.mxu0 0
    %3577 = vmatpush1.bf16.msra.mxu0 0
    %3578 = vmatprep.subr.bf16.mxu0 0
    %3579 = vmatpush1.bf16.msra.mxu0 0
    %3580 = vmatprep.subr.bf16.mxu0 0
    %3581 = vmatpush1.bf16.msra.mxu0 0
    %3582 = vmatprep.subr.bf16.mxu0 0
    %3583 = vmatpush1.bf16.msra.mxu0 0
    %3584 = vmatprep.subr.bf16.mxu0 0
    %3585 = vmatpush1.bf16.msra.mxu0 0
    %3586 = vmatprep.subr.bf16.mxu0 0
    %3587 = vmatpush1.bf16.msra.mxu0 0
    %3588 = vmatprep.mubr.bf16.mxu0 0
    %3589 = vmatmul.mubr.bf16.gmra.mrb[0].mxu0 %v3492
    %v3590 = vpop.f32.mrb[0].mxu0
    %v3591 = vadd.f32 0.0, %v3590
    %v3592 = vpop.f32.mrb[0].mxu0
    %v3593 = vpop.f32.mrb[0].mxu0
    %v3594 = vadd.f32 0.0, %v3593
    %v3595 = vpop.f32.mrb[0].mxu0
    %3596 = vmatprep.mubr.bf16.mxu0 0
    %3597 = vmatmul.mubr.bf16.gmra.mrb[0].mxu0 %v3493
    %v3598 = vpop.f32.mrb[0].mxu0
    %v3599 = vadd.f32 0.0, %v3598
    %v3600 = vpop.f32.mrb[0].mxu0
    %v3601 = vpop.f32.mrb[0].mxu0
    %v3602 = vadd.f32 0.0, %v3601
    %v3603 = vpop.f32.mrb[0].mxu0
    %3604 = vmatprep.mubr.bf16.mxu0 0
    %3605 = vmatmul.mubr.bf16.gmra.mrb[0].mxu0 %v3494
    %v3606 = vpop.f32.mrb[0].mxu0
    %v3607 = vadd.f32 0.0, %v3606
    %v3608 = vpop.f32.mrb[0].mxu0
    %v3609 = vpop.f32.mrb[0].mxu0
    %v3610 = vadd.f32 0.0, %v3609
    %v3611 = vpop.f32.mrb[0].mxu0
    %3612 = vmatprep.mubr.bf16.mxu0 0
    %3613 = vmatmul.mubr.bf16.gmra.mrb[0].mxu0 %v3495
    %v3614 = vpop.f32.mrb[0].mxu0
    %v3615 = vadd.f32 0.0, %v3614
    %v3616 = vpop.f32.mrb[0].mxu0
    %v3617 = vpop.f32.mrb[0].mxu0
    %v3618 = vadd.f32 0.0, %v3617
    %v3619 = vpop.f32.mrb[0].mxu0
    %3620 = vmatprep.mubr.bf16.mxu0 0
    %3621 = vmatmul.mubr.bf16.gmra.mrb[0].mxu0 %v3496
    %v3622 = vpop.f32.mrb[0].mxu0
    %v3623 = vadd.f32 0.0, %v3622
    %v3624 = vpop.f32.mrb[0].mxu0
    %v3625 = vpop.f32.mrb[0].mxu0
    %v3626 = vadd.f32 0.0, %v3625
    %v3627 = vpop.f32.mrb[0].mxu0
    %3628 = vmatprep.mubr.bf16.mxu0 0
    %3629 = vmatmul.mubr.bf16.gmra.mrb[0].mxu0 %v3497
    %v3630 = vpop.f32.mrb[0].mxu0
    %v3631 = vadd.f32 0.0, %v3630
    %v3632 = vpop.f32.mrb[0].mxu0
    %v3633 = vpop.f32.mrb[0].mxu0
    %v3634 = vadd.f32 0.0, %v3633
    %v3635 = vpop.f32.mrb[0].mxu0
    %3636 = vmatprep.mubr.bf16.mxu0 0
    %3637 = vmatmul.mubr.bf16.gmra.mrb[0].mxu0 %v3498
    %v3638 = vpop.f32.mrb[0].mxu0
    %v3639 = vadd.f32 0.0, %v3638
    %v3640 = vpop.f32.mrb[0].mxu0
    %v3641 = vpop.f32.mrb[0].mxu0
    %v3642 = vadd.f32 0.0, %v3641
    %v3643 = vpop.f32.mrb[0].mxu0
    %3644 = vmatprep.mubr.bf16.mxu0 0
    %3645 = vmatmul.mubr.bf16.gmra.mrb[0].mxu0 %v3499
    %v3646 = vpop.f32.mrb[0].mxu0
    %v3647 = vadd.f32 0.0, %v3646
    %v3648 = vpop.f32.mrb[0].mxu0
    %v3649 = vpop.f32.mrb[0].mxu0
    %v3650 = vadd.f32 0.0, %v3649
    %v3651 = vpop.f32.mrb[0].mxu0
    %3652 = vdwg.mxu0
    %v3653 = vunpack.c.l.b16 %v3204
    %v3654 = vunpack.c.l.b16 %v3316
    %v3655 = vpack.c.b16 %v3476, %v3653
    %v3656 = vpack.c.b16 %v3478, %v3477
    %v3657 = vpack.c.b16 %v3480, %v3479
    %v3658 = vpack.c.b16 %v3482, %v3481
    %v3659 = vpack.c.b16 %v3484, %v3654
    %v3660 = vpack.c.b16 %v3486, %v3485
    %v3661 = vpack.c.b16 %v3488, %v3487
    %v3662 = vpack.c.b16 %v3490, %v3489
    %v3687 = vunpack.c.l.b16 %v3415
    %v3688 = vunpack.c.l.b16 %v3416
    %v3689 = vunpack.c.l.b16 %v3417
    %v3690 = vunpack.c.l.b16 %v3418
    %v3691 = vunpack.c.l.b16 %v3419
    %v3692 = vunpack.c.l.b16 %v3420
    %v3693 = vunpack.c.l.b16 %v3421
    %v3694 = vunpack.c.l.b16 %v3422
    %v3695 = vunpack.c.l.b16 %v3423
    %v3696 = vunpack.c.l.b16 %v3424
    %v3697 = vunpack.c.l.b16 %v3425
    %v3698 = vunpack.c.l.b16 %v3426
    %v3699 = vunpack.c.l.b16 %v3427
    %v3700 = vunpack.c.l.b16 %v3428
    %v3701 = vunpack.c.l.b16 %v3429
    %v3702 = vunpack.c.l.b16 %v3430
    %v3703 = vpack.c.b16 %v3688, %v3687
    %v3704 = vpack.c.b16 %v3690, %v3689
    %v3705 = vpack.c.b16 %v3692, %v3691
    %v3706 = vpack.c.b16 %v3694, %v3693
    %v3707 = vpack.c.b16 %v3696, %v3695
    %v3708 = vpack.c.b16 %v3698, %v3697
    %v3709 = vpack.c.b16 %v3700, %v3699
    %v3710 = vpack.c.b16 %v3702, %v3701
    %3719 = vmatprep.subr.bf16.mxu0 0
    %3720 = vmatpush1.bf16.msra.mxu0 %v3703
    %3721 = vmatprep.subr.bf16.mxu0 0
    %3722 = vmatpush1.bf16.msra.mxu0 %v3704
    %3723 = vmatprep.subr.bf16.mxu0 0
    %3724 = vmatpush1.bf16.msra.mxu0 %v3705
    %3725 = vmatprep.subr.bf16.mxu0 0
    %3726 = vmatpush1.bf16.msra.mxu0 %v3706
    %3727 = vmatprep.subr.bf16.mxu0 0
    %3728 = vmatpush1.bf16.msra.mxu0 %v3707
    %3729 = vmatprep.subr.bf16.mxu0 0
    %3730 = vmatpush1.bf16.msra.mxu0 %v3708
    %3731 = vmatprep.subr.bf16.mxu0 0
    %3732 = vmatpush1.bf16.msra.mxu0 %v3709
    %3733 = vmatprep.subr.bf16.mxu0 0
    %3734 = vmatpush1.bf16.msra.mxu0 %v3710
    %3735 = vmatprep.subr.bf16.mxu0 0
    %3736 = vmatpush1.bf16.msra.mxu0 0
    %3737 = vmatprep.subr.bf16.mxu0 0
    %3738 = vmatpush1.bf16.msra.mxu0 0
    %3739 = vmatprep.subr.bf16.mxu0 0
    %3740 = vmatpush1.bf16.msra.mxu0 0
    %3741 = vmatprep.subr.bf16.mxu0 0
    %3742 = vmatpush1.bf16.msra.mxu0 0
    %3743 = vmatprep.subr.bf16.mxu0 0
    %3744 = vmatpush1.bf16.msra.mxu0 0
    %3745 = vmatprep.subr.bf16.mxu0 0
    %3746 = vmatpush1.bf16.msra.mxu0 0
    %3747 = vmatprep.subr.bf16.mxu0 0
    %3748 = vmatpush1.bf16.msra.mxu0 0
    %3749 = vmatprep.subr.bf16.mxu0 0
    %3750 = vmatpush1.bf16.msra.mxu0 0
    %3751 = vmatprep.mubr.bf16.mxu0 0
    %3752 = vmatmul.mubr.bf16.gmra.mrb[0].mxu0 %v3655
    %v3753 = vpop.f32.mrb[0].mxu0
    %v3754 = vadd.f32 %v3591, %v3753
    %v3755 = vpop.f32.mrb[0].mxu0
    %v3756 = vpop.f32.mrb[0].mxu0
    %v3757 = vadd.f32 %v3594, %v3756
    %v3758 = vpop.f32.mrb[0].mxu0
    %3759 = vmatprep.mubr.bf16.mxu0 0
    %3760 = vmatmul.mubr.bf16.gmra.mrb[0].mxu0 %v3656
    %v3761 = vpop.f32.mrb[0].mxu0
    %v3762 = vadd.f32 %v3599, %v3761
    %v3763 = vpop.f32.mrb[0].mxu0
    %v3764 = vpop.f32.mrb[0].mxu0
    %v3765 = vadd.f32 %v3602, %v3764
    %v3766 = vpop.f32.mrb[0].mxu0
    %3767 = vmatprep.mubr.bf16.mxu0 0
    %3768 = vmatmul.mubr.bf16.gmra.mrb[0].mxu0 %v3657
    %v3769 = vpop.f32.mrb[0].mxu0
    %v3770 = vadd.f32 %v3607, %v3769
    %v3771 = vpop.f32.mrb[0].mxu0
    %v3772 = vpop.f32.mrb[0].mxu0
    %v3773 = vadd.f32 %v3610, %v3772
    %v3774 = vpop.f32.mrb[0].mxu0
    %3775 = vmatprep.mubr.bf16.mxu0 0
    %3776 = vmatmul.mubr.bf16.gmra.mrb[0].mxu0 %v3658
    %v3777 = vpop.f32.mrb[0].mxu0
    %v3778 = vadd.f32 %v3615, %v3777
    %v3779 = vpop.f32.mrb[0].mxu0
    %v3780 = vpop.f32.mrb[0].mxu0
    %v3781 = vadd.f32 %v3618, %v3780
    %v3782 = vpop.f32.mrb[0].mxu0
    %3783 = vmatprep.mubr.bf16.mxu0 0
    %3784 = vmatmul.mubr.bf16.gmra.mrb[0].mxu0 %v3659
    %v3785 = vpop.f32.mrb[0].mxu0
    %v3786 = vadd.f32 %v3623, %v3785
    %v3787 = vpop.f32.mrb[0].mxu0
    %v3788 = vpop.f32.mrb[0].mxu0
    %v3789 = vadd.f32 %v3626, %v3788
    %v3790 = vpop.f32.mrb[0].mxu0
    %3791 = vmatprep.mubr.bf16.mxu0 0
    %3792 = vmatmul.mubr.bf16.gmra.mrb[0].mxu0 %v3660
    %v3793 = vpop.f32.mrb[0].mxu0
    %v3794 = vadd.f32 %v3631, %v3793
    %v3795 = vpop.f32.mrb[0].mxu0
    %v3796 = vpop.f32.mrb[0].mxu0
    %v3797 = vadd.f32 %v3634, %v3796
    %v3798 = vpop.f32.mrb[0].mxu0
    %3799 = vmatprep.mubr.bf16.mxu0 0
    %3800 = vmatmul.mubr.bf16.gmra.mrb[0].mxu0 %v3661
    %v3801 = vpop.f32.mrb[0].mxu0
    %v3802 = vadd.f32 %v3639, %v3801
    %v3803 = vpop.f32.mrb[0].mxu0
    %v3804 = vpop.f32.mrb[0].mxu0
    %v3805 = vadd.f32 %v3642, %v3804
    %v3806 = vpop.f32.mrb[0].mxu0
    %3807 = vmatprep.mubr.bf16.mxu0 0
    %3808 = vmatmul.mubr.bf16.gmra.mrb[0].mxu0 %v3662
    %v3809 = vpop.f32.mrb[0].mxu0
    %v3810 = vadd.f32 %v3647, %v3809
    %v3811 = vpop.f32.mrb[0].mxu0
    %v3812 = vpop.f32.mrb[0].mxu0
    %v3813 = vadd.f32 %v3650, %v3812
    %v3814 = vpop.f32.mrb[0].mxu0
    %3815 = vdwg.mxu0
    %v3817 = vshrl.u32 %v3169, 16
    %v3819 = vrot.slane %v3817, 4
    %v3820 = vshll.u32 %v3169, 16
    %v3822 = vrot.slane %v3820, 5
    %v3823 = vor.u32 %v3819, %v3822
    %v3824 = vrot.slane %v3823, 4
    %v3826 = vshll.u32 %v3170, 16
    %v3828 = vrot.slane %v3826, 5
    %v3829 = vsel %vm385, %v3824, %v3828
    %v3831 = vshrl.u32 %v3189, 16
    %v3833 = vrot.slane %v3831, 4
    %v3834 = vshll.u32 %v3189, 16
    %v3836 = vrot.slane %v3834, 5
    %v3837 = vor.u32 %v3833, %v3836
    %v3838 = vrot.slane %v3837, 4
    %v3840 = vshll.u32 %v3190, 16
    %v3842 = vrot.slane %v3840, 5
    %v3843 = vsel %vm385, %v3838, %v3842
    %s3844 = scalar_lea.vmem [#allocation8], 384
    %v3845 = vld [vmem:[%s3844] sm:$0xf]
    %v3846 = vld [vmem:[%s3844 + $0x4] sm:$0xf]
    %v3847 = vld [vmem:[%s3844 + $0x8] sm:$0xf]
    %v3848 = vld [vmem:[%s3844 + $0xc] sm:$0xf]
    %v3849 = vld [vmem:[%s3844 + $0x10] sm:$0xf]
    %v3850 = vld [vmem:[%s3844 + $0x14] sm:$0xf]
    %v3851 = vld [vmem:[%s3844 + $0x18] sm:$0xf]
    %v3852 = vld [vmem:[%s3844 + $0x1c] sm:$0xf]
    %v3853 = vld [vmem:[%s3844 + $0x20] sm:$0xf]
    %v3854 = vld [vmem:[%s3844 + $0x24] sm:$0xf]
    %v3855 = vld [vmem:[%s3844 + $0x28] sm:$0xf]
    %v3856 = vld [vmem:[%s3844 + $0x2c] sm:$0xf]
    %v3857 = vld [vmem:[%s3844 + $0x30] sm:$0xf]
    %v3858 = vld [vmem:[%s3844 + $0x34] sm:$0xf]
    %v3859 = vld [vmem:[%s3844 + $0x38] sm:$0xf]
    %v3860 = vld [vmem:[%s3844 + $0x3c] sm:$0xf]
    %v3861 = vunpack.c.l.b16 %v3829
    %v3862 = vunpack.c.l.b16 %v3843
    %v3863 = vpack.c.b16 %v3861, %v3483
    %v3864 = vpack.c.b16 %v3862, %v3491
    %v3883 = vunpack.c.l.b16 %v3845
    %v3884 = vunpack.c.l.b16 %v3846
    %v3885 = vunpack.c.l.b16 %v3847
    %v3886 = vunpack.c.l.b16 %v3848
    %v3887 = vunpack.c.l.b16 %v3849
    %v3888 = vunpack.c.l.b16 %v3850
    %v3889 = vunpack.c.l.b16 %v3851
    %v3890 = vunpack.c.l.b16 %v3852
    %v3891 = vunpack.c.l.b16 %v3853
    %v3892 = vunpack.c.l.b16 %v3854
    %v3893 = vunpack.c.l.b16 %v3855
    %v3894 = vunpack.c.l.b16 %v3856
    %v3895 = vunpack.c.l.b16 %v3857
    %v3896 = vunpack.c.l.b16 %v3858
    %v3897 = vunpack.c.l.b16 %v3859
    %v3898 = vunpack.c.l.b16 %v3860
    %v3899 = vpack.c.b16 %v3884, %v3883
    %v3900 = vpack.c.b16 %v3886, %v3885
    %v3901 = vpack.c.b16 %v3888, %v3887
    %v3902 = vpack.c.b16 %v3890, %v3889
    %v3903 = vpack.c.b16 %v3892, %v3891
    %v3904 = vpack.c.b16 %v3894, %v3893
    %v3905 = vpack.c.b16 %v3896, %v3895
    %v3906 = vpack.c.b16 %v3898, %v3897
    %3915 = vmatprep.subr.bf16.mxu0 0
    %3916 = vmatpush1.bf16.msra.mxu0 %v3899
    %3917 = vmatprep.subr.bf16.mxu0 0
    %3918 = vmatpush1.bf16.msra.mxu0 %v3900
    %3919 = vmatprep.subr.bf16.mxu0 0
    %3920 = vmatpush1.bf16.msra.mxu0 %v3901
    %3921 = vmatprep.subr.bf16.mxu0 0
    %3922 = vmatpush1.bf16.msra.mxu0 %v3902
    %3923 = vmatprep.subr.bf16.mxu0 0
    %3924 = vmatpush1.bf16.msra.mxu0 %v3903
    %3925 = vmatprep.subr.bf16.mxu0 0
    %3926 = vmatpush1.bf16.msra.mxu0 %v3904
    %3927 = vmatprep.subr.bf16.mxu0 0
    %3928 = vmatpush1.bf16.msra.mxu0 %v3905
    %3929 = vmatprep.subr.bf16.mxu0 0
    %3930 = vmatpush1.bf16.msra.mxu0 %v3906
    %3931 = vmatprep.subr.bf16.mxu0 0
    %3932 = vmatpush1.bf16.msra.mxu0 0
    %3933 = vmatprep.subr.bf16.mxu0 0
    %3934 = vmatpush1.bf16.msra.mxu0 0
    %3935 = vmatprep.subr.bf16.mxu0 0
    %3936 = vmatpush1.bf16.msra.mxu0 0
    %3937 = vmatprep.subr.bf16.mxu0 0
    %3938 = vmatpush1.bf16.msra.mxu0 0
    %3939 = vmatprep.subr.bf16.mxu0 0
    %3940 = vmatpush1.bf16.msra.mxu0 0
    %3941 = vmatprep.subr.bf16.mxu0 0
    %3942 = vmatpush1.bf16.msra.mxu0 0
    %3943 = vmatprep.subr.bf16.mxu0 0
    %3944 = vmatpush1.bf16.msra.mxu0 0
    %3945 = vmatprep.subr.bf16.mxu0 0
    %3946 = vmatpush1.bf16.msra.mxu0 0
    %3947 = vmatprep.mubr.bf16.mxu0 0
    %3948 = vmatmul.mubr.bf16.gmra.mrb[0].mxu0 %v3656
    %v3949 = vpop.f32.mrb[0].mxu0
    %v3950 = vadd.f32 0.0, %v3949
    %v3951 = vpop.f32.mrb[0].mxu0
    %v3952 = vpop.f32.mrb[0].mxu0
    %v3953 = vadd.f32 0.0, %v3952
    %v3954 = vpop.f32.mrb[0].mxu0
    %3955 = vmatprep.mubr.bf16.mxu0 0
    %3956 = vmatmul.mubr.bf16.gmra.mrb[0].mxu0 %v3657
    %v3957 = vpop.f32.mrb[0].mxu0
    %v3958 = vadd.f32 0.0, %v3957
    %v3959 = vpop.f32.mrb[0].mxu0
    %v3960 = vpop.f32.mrb[0].mxu0
    %v3961 = vadd.f32 0.0, %v3960
    %v3962 = vpop.f32.mrb[0].mxu0
    %3963 = vmatprep.mubr.bf16.mxu0 0
    %3964 = vmatmul.mubr.bf16.gmra.mrb[0].mxu0 %v3658
    %v3965 = vpop.f32.mrb[0].mxu0
    %v3966 = vadd.f32 0.0, %v3965
    %v3967 = vpop.f32.mrb[0].mxu0
    %v3968 = vpop.f32.mrb[0].mxu0
    %v3969 = vadd.f32 0.0, %v3968
    %v3970 = vpop.f32.mrb[0].mxu0
    %3971 = vmatprep.mubr.bf16.mxu0 0
    %3972 = vmatmul.mubr.bf16.gmra.mrb[0].mxu0 %v3863
    %v3973 = vpop.f32.mrb[0].mxu0
    %v3974 = vadd.f32 0.0, %v3973
    %v3975 = vpop.f32.mrb[0].mxu0
    %v3976 = vpop.f32.mrb[0].mxu0
    %v3977 = vadd.f32 0.0, %v3976
    %v3978 = vpop.f32.mrb[0].mxu0
    %3979 = vmatprep.mubr.bf16.mxu0 0
    %3980 = vmatmul.mubr.bf16.gmra.mrb[0].mxu0 %v3660
    %v3981 = vpop.f32.mrb[0].mxu0
    %v3982 = vadd.f32 0.0, %v3981
    %v3983 = vpop.f32.mrb[0].mxu0
    %v3984 = vpop.f32.mrb[0].mxu0
    %v3985 = vadd.f32 0.0, %v3984
    %v3986 = vpop.f32.mrb[0].mxu0
    %3987 = vmatprep.mubr.bf16.mxu0 0
    %3988 = vmatmul.mubr.bf16.gmra.mrb[0].mxu0 %v3661
    %v3989 = vpop.f32.mrb[0].mxu0
    %v3990 = vadd.f32 0.0, %v3989
    %v3991 = vpop.f32.mrb[0].mxu0
    %v3992 = vpop.f32.mrb[0].mxu0
    %v3993 = vadd.f32 0.0, %v3992
    %v3994 = vpop.f32.mrb[0].mxu0
    %3995 = vmatprep.mubr.bf16.mxu0 0
    %3996 = vmatmul.mubr.bf16.gmra.mrb[0].mxu0 %v3662
    %v3997 = vpop.f32.mrb[0].mxu0
    %v3998 = vadd.f32 0.0, %v3997
    %v3999 = vpop.f32.mrb[0].mxu0
    %v4000 = vpop.f32.mrb[0].mxu0
    %v4001 = vadd.f32 0.0, %v4000
    %v4002 = vpop.f32.mrb[0].mxu0
    %4003 = vmatprep.mubr.bf16.mxu0 0
    %4004 = vmatmul.mubr.bf16.gmra.mrb[0].mxu0 %v3864
    %v4005 = vpop.f32.mrb[0].mxu0
    %v4006 = vadd.f32 0.0, %v4005
    %v4007 = vpop.f32.mrb[0].mxu0
    %v4008 = vpop.f32.mrb[0].mxu0
    %v4009 = vadd.f32 0.0, %v4008
    %v4010 = vpop.f32.mrb[0].mxu0
    %4011 = vdwg.mxu0
    %v4012 = vadd.f32 %v3754, %v3950
    %v4013 = vadd.f32 %v3757, %v3953
    %v4014 = vadd.f32 %v3762, %v3958
    %v4015 = vadd.f32 %v3765, %v3961
    %v4016 = vadd.f32 %v3770, %v3966
    %v4017 = vadd.f32 %v3773, %v3969
    %v4018 = vadd.f32 %v3778, %v3974
    %v4019 = vadd.f32 %v3781, %v3977
    %v4020 = vadd.f32 %v3786, %v3982
    %v4021 = vadd.f32 %v3789, %v3985
    %v4022 = vadd.f32 %v3794, %v3990
    %v4023 = vadd.f32 %v3797, %v3993
    %v4024 = vadd.f32 %v3802, %v3998
    %v4025 = vadd.f32 %v3805, %v4001
    %v4026 = vadd.f32 %v3810, %v4006
    %v4027 = vadd.f32 %v3813, %v4009
    %v4028 = vld [vmem:[#allocation2 + $0x8] sm:$0xe]
    %v4029 = vld [vmem:[#allocation2 + $0x10] sm:$0xe]
    %v4030 = vld [vmem:[#allocation2 + $0x18] sm:$0xe]
    %v4031 = vld [vmem:[#allocation2 + $0x20] sm:$0xe]
    %v4032 = vld [vmem:[#allocation2 + $0x28] sm:$0xe]
    %v4033 = vld [vmem:[#allocation2 + $0x30] sm:$0xe]
    %v4034 = vld [vmem:[#allocation2 + $0x38] sm:$0xe]
    %v4035 = vld [vmem:[#allocation2 + $0x40] sm:$0xe]
    %v4036 = vld [vmem:[#allocation2 + $0x48] sm:$0xe]
    %v4037 = vld [vmem:[#allocation2 + $0x50] sm:$0xe]
    %v4038 = vld [vmem:[#allocation2 + $0x60] sm:$0xe]
    %v4039 = vld [vmem:[#allocation2 + $0x68] sm:$0xe]
    %v4040 = vld [vmem:[#allocation2 + $0x70] sm:$0xe]
    %v4041 = vld [vmem:[#allocation2 + $0x78] sm:$0xe]
    %v4042 = vld [vmem:[#allocation2 + $0x80] sm:$0xe]
    %v4043 = vld [vmem:[#allocation2 + $0x88] sm:$0xe]
    %v4044 = vld [vmem:[#allocation2 + $0x90] sm:$0xe]
    %v4045 = vld [vmem:[#allocation2 + $0x98] sm:$0xe]
    %v4046 = vld [vmem:[#allocation2 + $0xa0] sm:$0xe]
    %v4047 = vld [vmem:[#allocation2 + $0xa8] sm:$0xe]
    %v4080 = vrot.slane %v4028, 5
    %v4081 = vrot.slane %v4080, 4
    %v4082 = vrot.slane %v3152, 5
    %v4083 = vsel %vm1277, %v4081, %v4082
    %v4084 = vrot.slane %v4029, 5
    %v4085 = vrot.slane %v4084, 4
    %v4086 = vrot.slane %v3154, 5
    %v4087 = vsel %vm1277, %v4085, %v4086
    %v4088 = vrot.slane %v4030, 5
    %v4089 = vrot.slane %v4088, 4
    %v4090 = vrot.slane %v3156, 5
    %v4091 = vsel %vm1277, %v4089, %v4090
    %v4092 = vrot.slane %v4031, 5
    %v4093 = vrot.slane %v4092, 4
    %v4094 = vrot.slane %v3158, 5
    %v4095 = vsel %vm1277, %v4093, %v4094
    %v4096 = vrot.slane %v4032, 5
    %v4097 = vrot.slane %v4096, 4
    %v4098 = vrot.slane %v3160, 5
    %v4099 = vsel %vm1277, %v4097, %v4098
    %v4100 = vrot.slane %v4033, 5
    %v4101 = vrot.slane %v4100, 4
    %v4102 = vrot.slane %v3162, 5
    %v4103 = vsel %vm1277, %v4101, %v4102
    %v4104 = vrot.slane %v4034, 5
    %v4105 = vrot.slane %v4104, 4
    %v4106 = vrot.slane %v3164, 5
    %v4107 = vsel %vm1277, %v4105, %v4106
    %v4108 = vrot.slane %v4035, 5
    %v4109 = vrot.slane %v4108, 4
    %v4110 = vrot.slane %v3166, 5
    %v4111 = vsel %vm1277, %v4109, %v4110
    %v4112 = vrot.slane %v4038, 5
    %v4113 = vrot.slane %v4112, 4
    %v4114 = vrot.slane %v3172, 5
    %v4115 = vsel %vm1277, %v4113, %v4114
    %v4116 = vrot.slane %v4039, 5
    %v4117 = vrot.slane %v4116, 4
    %v4118 = vrot.slane %v3174, 5
    %v4119 = vsel %vm1277, %v4117, %v4118
    %v4120 = vrot.slane %v4040, 5
    %v4121 = vrot.slane %v4120, 4
    %v4122 = vrot.slane %v3176, 5
    %v4123 = vsel %vm1277, %v4121, %v4122
    %v4124 = vrot.slane %v4041, 5
    %v4125 = vrot.slane %v4124, 4
    %v4126 = vrot.slane %v3178, 5
    %v4127 = vsel %vm1277, %v4125, %v4126
    %v4128 = vrot.slane %v4042, 5
    %v4129 = vrot.slane %v4128, 4
    %v4130 = vrot.slane %v3180, 5
    %v4131 = vsel %vm1277, %v4129, %v4130
    %v4132 = vrot.slane %v4043, 5
    %v4133 = vrot.slane %v4132, 4
    %v4134 = vrot.slane %v3182, 5
    %v4135 = vsel %vm1277, %v4133, %v4134
    %v4136 = vrot.slane %v4044, 5
    %v4137 = vrot.slane %v4136, 4
    %v4138 = vrot.slane %v3184, 5
    %v4139 = vsel %vm1277, %v4137, %v4138
    %v4140 = vrot.slane %v4045, 5
    %v4141 = vrot.slane %v4140, 4
    %v4142 = vrot.slane %v3186, 5
    %v4143 = vsel %vm1277, %v4141, %v4142
    %s4144 = scalar_lea.vmem [#allocation8], 64
    %v4145 = vld [vmem:[%s4144] sm:$0xf]
    %v4146 = vld [vmem:[%s4144 + $0x4] sm:$0xf]
    %v4147 = vld [vmem:[%s4144 + $0x8] sm:$0xf]
    %v4148 = vld [vmem:[%s4144 + $0xc] sm:$0xf]
    %v4149 = vld [vmem:[%s4144 + $0x10] sm:$0xf]
    %v4150 = vld [vmem:[%s4144 + $0x14] sm:$0xf]
    %v4151 = vld [vmem:[%s4144 + $0x18] sm:$0xf]
    %v4152 = vld [vmem:[%s4144 + $0x1c] sm:$0xf]
    %v4153 = vld [vmem:[%s4144 + $0x20] sm:$0xf]
    %v4154 = vld [vmem:[%s4144 + $0x24] sm:$0xf]
    %v4155 = vld [vmem:[%s4144 + $0x28] sm:$0xf]
    %v4156 = vld [vmem:[%s4144 + $0x2c] sm:$0xf]
    %v4157 = vld [vmem:[%s4144 + $0x30] sm:$0xf]
    %v4158 = vld [vmem:[%s4144 + $0x34] sm:$0xf]
    %v4159 = vld [vmem:[%s4144 + $0x38] sm:$0xf]
    %v4160 = vld [vmem:[%s4144 + $0x3c] sm:$0xf]
    %v4161 = vunpack.c.l.b16 %v4083
    %v4162 = vunpack.c.l.b16 %v4087
    %v4163 = vunpack.c.l.b16 %v4091
    %v4164 = vunpack.c.l.b16 %v4095
    %v4165 = vunpack.c.l.b16 %v4099
    %v4166 = vunpack.c.l.b16 %v4103
    %v4167 = vunpack.c.l.b16 %v4107
    %v4168 = vunpack.c.l.b16 %v4111
    %v4169 = vunpack.c.l.b16 %v4115
    %v4170 = vunpack.c.l.b16 %v4119
    %v4171 = vunpack.c.l.b16 %v4123
    %v4172 = vunpack.c.l.b16 %v4127
    %v4173 = vunpack.c.l.b16 %v4131
    %v4174 = vunpack.c.l.b16 %v4135
    %v4175 = vunpack.c.l.b16 %v4139
    %v4176 = vunpack.c.l.b16 %v4143
    %v4177 = vpack.c.b16 %v4162, %v4161
    %v4178 = vpack.c.b16 %v4164, %v4163
    %v4179 = vpack.c.b16 %v4166, %v4165
    %v4180 = vpack.c.b16 %v4168, %v4167
    %v4181 = vpack.c.b16 %v4170, %v4169
    %v4182 = vpack.c.b16 %v4172, %v4171
    %v4183 = vpack.c.b16 %v4174, %v4173
    %v4184 = vpack.c.b16 %v4176, %v4175
    %v4209 = vunpack.c.l.b16 %v4145
    %v4210 = vunpack.c.l.b16 %v4146
    %v4211 = vunpack.c.l.b16 %v4147
    %v4212 = vunpack.c.l.b16 %v4148
    %v4213 = vunpack.c.l.b16 %v4149
    %v4214 = vunpack.c.l.b16 %v4150
    %v4215 = vunpack.c.l.b16 %v4151
    %v4216 = vunpack.c.l.b16 %v4152
    %v4217 = vunpack.c.l.b16 %v4153
    %v4218 = vunpack.c.l.b16 %v4154
    %v4219 = vunpack.c.l.b16 %v4155
    %v4220 = vunpack.c.l.b16 %v4156
    %v4221 = vunpack.c.l.b16 %v4157
    %v4222 = vunpack.c.l.b16 %v4158
    %v4223 = vunpack.c.l.b16 %v4159
    %v4224 = vunpack.c.l.b16 %v4160
    %v4225 = vpack.c.b16 %v4210, %v4209
    %v4226 = vpack.c.b16 %v4212, %v4211
    %v4227 = vpack.c.b16 %v4214, %v4213
    %v4228 = vpack.c.b16 %v4216, %v4215
    %v4229 = vpack.c.b16 %v4218, %v4217
    %v4230 = vpack.c.b16 %v4220, %v4219
    %v4231 = vpack.c.b16 %v4222, %v4221
    %v4232 = vpack.c.b16 %v4224, %v4223
    %4241 = vmatprep.subr.bf16.mxu0 0
    %4242 = vmatpush1.bf16.msra.mxu0 %v4225
    %4243 = vmatprep.subr.bf16.mxu0 0
    %4244 = vmatpush1.bf16.msra.mxu0 %v4226
    %4245 = vmatprep.subr.bf16.mxu0 0
    %4246 = vmatpush1.bf16.msra.mxu0 %v4227
    %4247 = vmatprep.subr.bf16.mxu0 0
    %4248 = vmatpush1.bf16.msra.mxu0 %v4228
    %4249 = vmatprep.subr.bf16.mxu0 0
    %4250 = vmatpush1.bf16.msra.mxu0 %v4229
    %4251 = vmatprep.subr.bf16.mxu0 0
    %4252 = vmatpush1.bf16.msra.mxu0 %v4230
    %4253 = vmatprep.subr.bf16.mxu0 0
    %4254 = vmatpush1.bf16.msra.mxu0 %v4231
    %4255 = vmatprep.subr.bf16.mxu0 0
    %4256 = vmatpush1.bf16.msra.mxu0 %v4232
    %4257 = vmatprep.subr.bf16.mxu0 0
    %4258 = vmatpush1.bf16.msra.mxu0 0
    %4259 = vmatprep.subr.bf16.mxu0 0
    %4260 = vmatpush1.bf16.msra.mxu0 0
    %4261 = vmatprep.subr.bf16.mxu0 0
    %4262 = vmatpush1.bf16.msra.mxu0 0
    %4263 = vmatprep.subr.bf16.mxu0 0
    %4264 = vmatpush1.bf16.msra.mxu0 0
    %4265 = vmatprep.subr.bf16.mxu0 0
    %4266 = vmatpush1.bf16.msra.mxu0 0
    %4267 = vmatprep.subr.bf16.mxu0 0
    %4268 = vmatpush1.bf16.msra.mxu0 0
    %4269 = vmatprep.subr.bf16.mxu0 0
    %4270 = vmatpush1.bf16.msra.mxu0 0
    %4271 = vmatprep.subr.bf16.mxu0 0
    %4272 = vmatpush1.bf16.msra.mxu0 0
    %4273 = vmatprep.mubr.bf16.mxu0 0
    %4274 = vmatmul.mubr.bf16.gmra.mrb[0].mxu0 %v4177
    %v4275 = vpop.f32.mrb[0].mxu0
    %v4276 = vadd.f32 0.0, %v4275
    %v4277 = vpop.f32.mrb[0].mxu0
    %v4278 = vpop.f32.mrb[0].mxu0
    %v4279 = vadd.f32 0.0, %v4278
    %v4280 = vpop.f32.mrb[0].mxu0
    %4281 = vmatprep.mubr.bf16.mxu0 0
    %4282 = vmatmul.mubr.bf16.gmra.mrb[0].mxu0 %v4178
    %v4283 = vpop.f32.mrb[0].mxu0
    %v4284 = vadd.f32 0.0, %v4283
    %v4285 = vpop.f32.mrb[0].mxu0
    %v4286 = vpop.f32.mrb[0].mxu0
    %v4287 = vadd.f32 0.0, %v4286
    %v4288 = vpop.f32.mrb[0].mxu0
    %4289 = vmatprep.mubr.bf16.mxu0 0
    %4290 = vmatmul.mubr.bf16.gmra.mrb[0].mxu0 %v4179
    %v4291 = vpop.f32.mrb[0].mxu0
    %v4292 = vadd.f32 0.0, %v4291
    %v4293 = vpop.f32.mrb[0].mxu0
    %v4294 = vpop.f32.mrb[0].mxu0
    %v4295 = vadd.f32 0.0, %v4294
    %v4296 = vpop.f32.mrb[0].mxu0
    %4297 = vmatprep.mubr.bf16.mxu0 0
    %4298 = vmatmul.mubr.bf16.gmra.mrb[0].mxu0 %v4180
    %v4299 = vpop.f32.mrb[0].mxu0
    %v4300 = vadd.f32 0.0, %v4299
    %v4301 = vpop.f32.mrb[0].mxu0
    %v4302 = vpop.f32.mrb[0].mxu0
    %v4303 = vadd.f32 0.0, %v4302
    %v4304 = vpop.f32.mrb[0].mxu0
    %4305 = vmatprep.mubr.bf16.mxu0 0
    %4306 = vmatmul.mubr.bf16.gmra.mrb[0].mxu0 %v4181
    %v4307 = vpop.f32.mrb[0].mxu0
    %v4308 = vadd.f32 0.0, %v4307
    %v4309 = vpop.f32.mrb[0].mxu0
    %v4310 = vpop.f32.mrb[0].mxu0
    %v4311 = vadd.f32 0.0, %v4310
    %v4312 = vpop.f32.mrb[0].mxu0
    %4313 = vmatprep.mubr.bf16.mxu0 0
    %4314 = vmatmul.mubr.bf16.gmra.mrb[0].mxu0 %v4182
    %v4315 = vpop.f32.mrb[0].mxu0
    %v4316 = vadd.f32 0.0, %v4315
    %v4317 = vpop.f32.mrb[0].mxu0
    %v4318 = vpop.f32.mrb[0].mxu0
    %v4319 = vadd.f32 0.0, %v4318
    %v4320 = vpop.f32.mrb[0].mxu0
    %4321 = vmatprep.mubr.bf16.mxu0 0
    %4322 = vmatmul.mubr.bf16.gmra.mrb[0].mxu0 %v4183
    %v4323 = vpop.f32.mrb[0].mxu0
    %v4324 = vadd.f32 0.0, %v4323
    %v4325 = vpop.f32.mrb[0].mxu0
    %v4326 = vpop.f32.mrb[0].mxu0
    %v4327 = vadd.f32 0.0, %v4326
    %v4328 = vpop.f32.mrb[0].mxu0
    %4329 = vmatprep.mubr.bf16.mxu0 0
    %4330 = vmatmul.mubr.bf16.gmra.mrb[0].mxu0 %v4184
    %v4331 = vpop.f32.mrb[0].mxu0
    %v4332 = vadd.f32 0.0, %v4331
    %v4333 = vpop.f32.mrb[0].mxu0
    %v4334 = vpop.f32.mrb[0].mxu0
    %v4335 = vadd.f32 0.0, %v4334
    %v4336 = vpop.f32.mrb[0].mxu0
    %4337 = vdwg.mxu0
    %v4338 = vadd.f32 %v4012, %v4276
    %v4339 = vadd.f32 %v4013, %v4279
    %v4340 = vadd.f32 %v4014, %v4284
    %v4341 = vadd.f32 %v4015, %v4287
    %v4342 = vadd.f32 %v4016, %v4292
    %v4343 = vadd.f32 %v4017, %v4295
    %v4344 = vadd.f32 %v4018, %v4300
    %v4345 = vadd.f32 %v4019, %v4303
    %v4346 = vadd.f32 %v4020, %v4308
    %v4347 = vadd.f32 %v4021, %v4311
    %v4348 = vadd.f32 %v4022, %v4316
    %v4349 = vadd.f32 %v4023, %v4319
    %v4350 = vadd.f32 %v4024, %v4324
    %v4351 = vadd.f32 %v4025, %v4327
    %v4352 = vadd.f32 %v4026, %v4332
    %v4353 = vadd.f32 %v4027, %v4335
    %v4358 = vrot.slane %v4036, 5
    %v4359 = vrot.slane %v4358, 4
    %v4360 = vrot.slane %v3168, 5
    %v4361 = vsel %vm1277, %v4359, %v4360
    %v4362 = vrot.slane %v4046, 5
    %v4363 = vrot.slane %v4362, 4
    %v4364 = vrot.slane %v3188, 5
    %v4365 = vsel %vm1277, %v4363, %v4364
    %s4366 = scalar_lea.vmem [#allocation8], 256
    %v4367 = vld [vmem:[%s4366] sm:$0xf]
    %v4368 = vld [vmem:[%s4366 + $0x4] sm:$0xf]
    %v4369 = vld [vmem:[%s4366 + $0x8] sm:$0xf]
    %v4370 = vld [vmem:[%s4366 + $0xc] sm:$0xf]
    %v4371 = vld [vmem:[%s4366 + $0x10] sm:$0xf]
    %v4372 = vld [vmem:[%s4366 + $0x14] sm:$0xf]
    %v4373 = vld [vmem:[%s4366 + $0x18] sm:$0xf]
    %v4374 = vld [vmem:[%s4366 + $0x1c] sm:$0xf]
    %v4375 = vld [vmem:[%s4366 + $0x20] sm:$0xf]
    %v4376 = vld [vmem:[%s4366 + $0x24] sm:$0xf]
    %v4377 = vld [vmem:[%s4366 + $0x28] sm:$0xf]
    %v4378 = vld [vmem:[%s4366 + $0x2c] sm:$0xf]
    %v4379 = vld [vmem:[%s4366 + $0x30] sm:$0xf]
    %v4380 = vld [vmem:[%s4366 + $0x34] sm:$0xf]
    %v4381 = vld [vmem:[%s4366 + $0x38] sm:$0xf]
    %v4382 = vld [vmem:[%s4366 + $0x3c] sm:$0xf]
    %v4383 = vunpack.c.l.b16 %v4361
    %v4384 = vunpack.c.l.b16 %v4365
    %v4385 = vpack.c.b16 %v4163, %v4162
    %v4386 = vpack.c.b16 %v4165, %v4164
    %v4387 = vpack.c.b16 %v4167, %v4166
    %v4388 = vpack.c.b16 %v4383, %v4168
    %v4389 = vpack.c.b16 %v4171, %v4170
    %v4390 = vpack.c.b16 %v4173, %v4172
    %v4391 = vpack.c.b16 %v4175, %v4174
    %v4392 = vpack.c.b16 %v4384, %v4176
    %v4417 = vunpack.c.l.b16 %v4367
    %v4418 = vunpack.c.l.b16 %v4368
    %v4419 = vunpack.c.l.b16 %v4369
    %v4420 = vunpack.c.l.b16 %v4370
    %v4421 = vunpack.c.l.b16 %v4371
    %v4422 = vunpack.c.l.b16 %v4372
    %v4423 = vunpack.c.l.b16 %v4373
    %v4424 = vunpack.c.l.b16 %v4374
    %v4425 = vunpack.c.l.b16 %v4375
    %v4426 = vunpack.c.l.b16 %v4376
    %v4427 = vunpack.c.l.b16 %v4377
    %v4428 = vunpack.c.l.b16 %v4378
    %v4429 = vunpack.c.l.b16 %v4379
    %v4430 = vunpack.c.l.b16 %v4380
    %v4431 = vunpack.c.l.b16 %v4381
    %v4432 = vunpack.c.l.b16 %v4382
    %v4433 = vpack.c.b16 %v4418, %v4417
    %v4434 = vpack.c.b16 %v4420, %v4419
    %v4435 = vpack.c.b16 %v4422, %v4421
    %v4436 = vpack.c.b16 %v4424, %v4423
    %v4437 = vpack.c.b16 %v4426, %v4425
    %v4438 = vpack.c.b16 %v4428, %v4427
    %v4439 = vpack.c.b16 %v4430, %v4429
    %v4440 = vpack.c.b16 %v4432, %v4431
    %4449 = vmatprep.subr.bf16.mxu0 0
    %4450 = vmatpush1.bf16.msra.mxu0 %v4433
    %4451 = vmatprep.subr.bf16.mxu0 0
    %4452 = vmatpush1.bf16.msra.mxu0 %v4434
    %4453 = vmatprep.subr.bf16.mxu0 0
    %4454 = vmatpush1.bf16.msra.mxu0 %v4435
    %4455 = vmatprep.subr.bf16.mxu0 0
    %4456 = vmatpush1.bf16.msra.mxu0 %v4436
    %4457 = vmatprep.subr.bf16.mxu0 0
    %4458 = vmatpush1.bf16.msra.mxu0 %v4437
    %4459 = vmatprep.subr.bf16.mxu0 0
    %4460 = vmatpush1.bf16.msra.mxu0 %v4438
    %4461 = vmatprep.subr.bf16.mxu0 0
    %4462 = vmatpush1.bf16.msra.mxu0 %v4439
    %4463 = vmatprep.subr.bf16.mxu0 0
    %4464 = vmatpush1.bf16.msra.mxu0 %v4440
    %4465 = vmatprep.subr.bf16.mxu0 0
    %4466 = vmatpush1.bf16.msra.mxu0 0
    %4467 = vmatprep.subr.bf16.mxu0 0
    %4468 = vmatpush1.bf16.msra.mxu0 0
    %4469 = vmatprep.subr.bf16.mxu0 0
    %4470 = vmatpush1.bf16.msra.mxu0 0
    %4471 = vmatprep.subr.bf16.mxu0 0
    %4472 = vmatpush1.bf16.msra.mxu0 0
    %4473 = vmatprep.subr.bf16.mxu0 0
    %4474 = vmatpush1.bf16.msra.mxu0 0
    %4475 = vmatprep.subr.bf16.mxu0 0
    %4476 = vmatpush1.bf16.msra.mxu0 0
    %4477 = vmatprep.subr.bf16.mxu0 0
    %4478 = vmatpush1.bf16.msra.mxu0 0
    %4479 = vmatprep.subr.bf16.mxu0 0
    %4480 = vmatpush1.bf16.msra.mxu0 0
    %4481 = vmatprep.mubr.bf16.mxu0 0
    %4482 = vmatmul.mubr.bf16.gmra.mrb[0].mxu0 %v4385
    %v4483 = vpop.f32.mrb[0].mxu0
    %v4484 = vadd.f32 0.0, %v4483
    %v4485 = vpop.f32.mrb[0].mxu0
    %v4486 = vpop.f32.mrb[0].mxu0
    %v4487 = vadd.f32 0.0, %v4486
    %v4488 = vpop.f32.mrb[0].mxu0
    %4489 = vmatprep.mubr.bf16.mxu0 0
    %4490 = vmatmul.mubr.bf16.gmra.mrb[0].mxu0 %v4386
    %v4491 = vpop.f32.mrb[0].mxu0
    %v4492 = vadd.f32 0.0, %v4491
    %v4493 = vpop.f32.mrb[0].mxu0
    %v4494 = vpop.f32.mrb[0].mxu0
    %v4495 = vadd.f32 0.0, %v4494
    %v4496 = vpop.f32.mrb[0].mxu0
    %4497 = vmatprep.mubr.bf16.mxu0 0
    %4498 = vmatmul.mubr.bf16.gmra.mrb[0].mxu0 %v4387
    %v4499 = vpop.f32.mrb[0].mxu0
    %v4500 = vadd.f32 0.0, %v4499
    %v4501 = vpop.f32.mrb[0].mxu0
    %v4502 = vpop.f32.mrb[0].mxu0
    %v4503 = vadd.f32 0.0, %v4502
    %v4504 = vpop.f32.mrb[0].mxu0
    %4505 = vmatprep.mubr.bf16.mxu0 0
    %4506 = vmatmul.mubr.bf16.gmra.mrb[0].mxu0 %v4388
    %v4507 = vpop.f32.mrb[0].mxu0
    %v4508 = vadd.f32 0.0, %v4507
    %v4509 = vpop.f32.mrb[0].mxu0
    %v4510 = vpop.f32.mrb[0].mxu0
    %v4511 = vadd.f32 0.0, %v4510
    %v4512 = vpop.f32.mrb[0].mxu0
    %4513 = vmatprep.mubr.bf16.mxu0 0
    %4514 = vmatmul.mubr.bf16.gmra.mrb[0].mxu0 %v4389
    %v4515 = vpop.f32.mrb[0].mxu0
    %v4516 = vadd.f32 0.0, %v4515
    %v4517 = vpop.f32.mrb[0].mxu0
    %v4518 = vpop.f32.mrb[0].mxu0
    %v4519 = vadd.f32 0.0, %v4518
    %v4520 = vpop.f32.mrb[0].mxu0
    %4521 = vmatprep.mubr.bf16.mxu0 0
    %4522 = vmatmul.mubr.bf16.gmra.mrb[0].mxu0 %v4390
    %v4523 = vpop.f32.mrb[0].mxu0
    %v4524 = vadd.f32 0.0, %v4523
    %v4525 = vpop.f32.mrb[0].mxu0
    %v4526 = vpop.f32.mrb[0].mxu0
    %v4527 = vadd.f32 0.0, %v4526
    %v4528 = vpop.f32.mrb[0].mxu0
    %4529 = vmatprep.mubr.bf16.mxu0 0
    %4530 = vmatmul.mubr.bf16.gmra.mrb[0].mxu0 %v4391
    %v4531 = vpop.f32.mrb[0].mxu0
    %v4532 = vadd.f32 0.0, %v4531
    %v4533 = vpop.f32.mrb[0].mxu0
    %v4534 = vpop.f32.mrb[0].mxu0
    %v4535 = vadd.f32 0.0, %v4534
    %v4536 = vpop.f32.mrb[0].mxu0
    %4537 = vmatprep.mubr.bf16.mxu0 0
    %4538 = vmatmul.mubr.bf16.gmra.mrb[0].mxu0 %v4392
    %v4539 = vpop.f32.mrb[0].mxu0
    %v4540 = vadd.f32 0.0, %v4539
    %v4541 = vpop.f32.mrb[0].mxu0
    %v4542 = vpop.f32.mrb[0].mxu0
    %v4543 = vadd.f32 0.0, %v4542
    %v4544 = vpop.f32.mrb[0].mxu0
    %4545 = vdwg.mxu0
    %v4546 = vadd.f32 %v4338, %v4484
    %v4547 = vadd.f32 %v4339, %v4487
    %v4548 = vadd.f32 %v4340, %v4492
    %v4549 = vadd.f32 %v4341, %v4495
    %v4550 = vadd.f32 %v4342, %v4500
    %v4551 = vadd.f32 %v4343, %v4503
    %v4552 = vadd.f32 %v4344, %v4508
    %v4553 = vadd.f32 %v4345, %v4511
    %v4554 = vadd.f32 %v4346, %v4516
    %v4555 = vadd.f32 %v4347, %v4519
    %v4556 = vadd.f32 %v4348, %v4524
    %v4557 = vadd.f32 %v4349, %v4527
    %v4558 = vadd.f32 %v4350, %v4532
    %v4559 = vadd.f32 %v4351, %v4535
    %v4560 = vadd.f32 %v4352, %v4540
    %v4561 = vadd.f32 %v4353, %v4543
    %v4566 = vrot.slane %v4037, 5
    %v4567 = vrot.slane %v4566, 4
    %v4568 = vrot.slane %v3170, 5
    %v4569 = vsel %vm1277, %v4567, %v4568
    %v4570 = vrot.slane %v4047, 5
    %v4571 = vrot.slane %v4570, 4
    %v4572 = vrot.slane %v3190, 5
    %v4573 = vsel %vm1277, %v4571, %v4572
    %s4574 = scalar_lea.vmem [#allocation8], 448
    %v4575 = vld [vmem:[%s4574] sm:$0xf]
    %v4576 = vld [vmem:[%s4574 + $0x4] sm:$0xf]
    %v4577 = vld [vmem:[%s4574 + $0x8] sm:$0xf]
    %v4578 = vld [vmem:[%s4574 + $0xc] sm:$0xf]
    %v4579 = vld [vmem:[%s4574 + $0x10] sm:$0xf]
    %v4580 = vld [vmem:[%s4574 + $0x14] sm:$0xf]
    %v4581 = vld [vmem:[%s4574 + $0x18] sm:$0xf]
    %v4582 = vld [vmem:[%s4574 + $0x1c] sm:$0xf]
    %v4583 = vld [vmem:[%s4574 + $0x20] sm:$0xf]
    %v4584 = vld [vmem:[%s4574 + $0x24] sm:$0xf]
    %v4585 = vld [vmem:[%s4574 + $0x28] sm:$0xf]
    %v4586 = vld [vmem:[%s4574 + $0x2c] sm:$0xf]
    %v4587 = vld [vmem:[%s4574 + $0x30] sm:$0xf]
    %v4588 = vld [vmem:[%s4574 + $0x34] sm:$0xf]
    %v4589 = vld [vmem:[%s4574 + $0x38] sm:$0xf]
    %v4590 = vld [vmem:[%s4574 + $0x3c] sm:$0xf]
    %v4591 = vunpack.c.l.b16 %v4569
    %v4592 = vunpack.c.l.b16 %v4573
    %v4593 = vpack.c.b16 %v4591, %v4383
    %v4594 = vpack.c.b16 %v4592, %v4384
    %v4613 = vunpack.c.l.b16 %v4575
    %v4614 = vunpack.c.l.b16 %v4576
    %v4615 = vunpack.c.l.b16 %v4577
    %v4616 = vunpack.c.l.b16 %v4578
    %v4617 = vunpack.c.l.b16 %v4579
    %v4618 = vunpack.c.l.b16 %v4580
    %v4619 = vunpack.c.l.b16 %v4581
    %v4620 = vunpack.c.l.b16 %v4582
    %v4621 = vunpack.c.l.b16 %v4583
    %v4622 = vunpack.c.l.b16 %v4584
    %v4623 = vunpack.c.l.b16 %v4585
    %v4624 = vunpack.c.l.b16 %v4586
    %v4625 = vunpack.c.l.b16 %v4587
    %v4626 = vunpack.c.l.b16 %v4588
    %v4627 = vunpack.c.l.b16 %v4589
    %v4628 = vunpack.c.l.b16 %v4590
    %v4629 = vpack.c.b16 %v4614, %v4613
    %v4630 = vpack.c.b16 %v4616, %v4615
    %v4631 = vpack.c.b16 %v4618, %v4617
    %v4632 = vpack.c.b16 %v4620, %v4619
    %v4633 = vpack.c.b16 %v4622, %v4621
    %v4634 = vpack.c.b16 %v4624, %v4623
    %v4635 = vpack.c.b16 %v4626, %v4625
    %v4636 = vpack.c.b16 %v4628, %v4627
    %4645 = vmatprep.subr.bf16.mxu0 0
    %4646 = vmatpush1.bf16.msra.mxu0 %v4629
    %4647 = vmatprep.subr.bf16.mxu0 0
    %4648 = vmatpush1.bf16.msra.mxu0 %v4630
    %4649 = vmatprep.subr.bf16.mxu0 0
    %4650 = vmatpush1.bf16.msra.mxu0 %v4631
    %4651 = vmatprep.subr.bf16.mxu0 0
    %4652 = vmatpush1.bf16.msra.mxu0 %v4632
    %4653 = vmatprep.subr.bf16.mxu0 0
    %4654 = vmatpush1.bf16.msra.mxu0 %v4633
    %4655 = vmatprep.subr.bf16.mxu0 0
    %4656 = vmatpush1.bf16.msra.mxu0 %v4634
    %4657 = vmatprep.subr.bf16.mxu0 0
    %4658 = vmatpush1.bf16.msra.mxu0 %v4635
    %4659 = vmatprep.subr.bf16.mxu0 0
    %4660 = vmatpush1.bf16.msra.mxu0 %v4636
    %4661 = vmatprep.subr.bf16.mxu0 0
    %4662 = vmatpush1.bf16.msra.mxu0 0
    %4663 = vmatprep.subr.bf16.mxu0 0
    %4664 = vmatpush1.bf16.msra.mxu0 0
    %4665 = vmatprep.subr.bf16.mxu0 0
    %4666 = vmatpush1.bf16.msra.mxu0 0
    %4667 = vmatprep.subr.bf16.mxu0 0
    %4668 = vmatpush1.bf16.msra.mxu0 0
    %4669 = vmatprep.subr.bf16.mxu0 0
    %4670 = vmatpush1.bf16.msra.mxu0 0
    %4671 = vmatprep.subr.bf16.mxu0 0
    %4672 = vmatpush1.bf16.msra.mxu0 0
    %4673 = vmatprep.subr.bf16.mxu0 0
    %4674 = vmatpush1.bf16.msra.mxu0 0
    %4675 = vmatprep.subr.bf16.mxu0 0
    %4676 = vmatpush1.bf16.msra.mxu0 0
    %4677 = vmatprep.mubr.bf16.mxu0 0
    %4678 = vmatmul.mubr.bf16.gmra.mrb[0].mxu0 %v4178
    %v4679 = vpop.f32.mrb[0].mxu0
    %v4680 = vadd.f32 0.0, %v4679
    %v4681 = vpop.f32.mrb[0].mxu0
    %v4682 = vpop.f32.mrb[0].mxu0
    %v4683 = vadd.f32 0.0, %v4682
    %v4684 = vpop.f32.mrb[0].mxu0
    %4685 = vmatprep.mubr.bf16.mxu0 0
    %4686 = vmatmul.mubr.bf16.gmra.mrb[0].mxu0 %v4179
    %v4687 = vpop.f32.mrb[0].mxu0
    %v4688 = vadd.f32 0.0, %v4687
    %v4689 = vpop.f32.mrb[0].mxu0
    %v4690 = vpop.f32.mrb[0].mxu0
    %v4691 = vadd.f32 0.0, %v4690
    %v4692 = vpop.f32.mrb[0].mxu0
    %4693 = vmatprep.mubr.bf16.mxu0 0
    %4694 = vmatmul.mubr.bf16.gmra.mrb[0].mxu0 %v4180
    %v4695 = vpop.f32.mrb[0].mxu0
    %v4696 = vadd.f32 0.0, %v4695
    %v4697 = vpop.f32.mrb[0].mxu0
    %v4698 = vpop.f32.mrb[0].mxu0
    %v4699 = vadd.f32 0.0, %v4698
    %v4700 = vpop.f32.mrb[0].mxu0
    %4701 = vmatprep.mubr.bf16.mxu0 0
    %4702 = vmatmul.mubr.bf16.gmra.mrb[0].mxu0 %v4593
    %v4703 = vpop.f32.mrb[0].mxu0
    %v4704 = vadd.f32 0.0, %v4703
    %v4705 = vpop.f32.mrb[0].mxu0
    %v4706 = vpop.f32.mrb[0].mxu0
    %v4707 = vadd.f32 0.0, %v4706
    %v4708 = vpop.f32.mrb[0].mxu0
    %4709 = vmatprep.mubr.bf16.mxu0 0
    %4710 = vmatmul.mubr.bf16.gmra.mrb[0].mxu0 %v4182
    %v4711 = vpop.f32.mrb[0].mxu0
    %v4712 = vadd.f32 0.0, %v4711
    %v4713 = vpop.f32.mrb[0].mxu0
    %v4714 = vpop.f32.mrb[0].mxu0
    %v4715 = vadd.f32 0.0, %v4714
    %v4716 = vpop.f32.mrb[0].mxu0
    %4717 = vmatprep.mubr.bf16.mxu0 0
    %4718 = vmatmul.mubr.bf16.gmra.mrb[0].mxu0 %v4183
    %v4719 = vpop.f32.mrb[0].mxu0
    %v4720 = vadd.f32 0.0, %v4719
    %v4721 = vpop.f32.mrb[0].mxu0
    %v4722 = vpop.f32.mrb[0].mxu0
    %v4723 = vadd.f32 0.0, %v4722
    %v4724 = vpop.f32.mrb[0].mxu0
    %4725 = vmatprep.mubr.bf16.mxu0 0
    %4726 = vmatmul.mubr.bf16.gmra.mrb[0].mxu0 %v4184
    %v4727 = vpop.f32.mrb[0].mxu0
    %v4728 = vadd.f32 0.0, %v4727
    %v4729 = vpop.f32.mrb[0].mxu0
    %v4730 = vpop.f32.mrb[0].mxu0
    %v4731 = vadd.f32 0.0, %v4730
    %v4732 = vpop.f32.mrb[0].mxu0
    %4733 = vmatprep.mubr.bf16.mxu0 0
    %4734 = vmatmul.mubr.bf16.gmra.mrb[0].mxu0 %v4594
    %v4735 = vpop.f32.mrb[0].mxu0
    %v4736 = vadd.f32 0.0, %v4735
    %v4737 = vpop.f32.mrb[0].mxu0
    %v4738 = vpop.f32.mrb[0].mxu0
    %v4739 = vadd.f32 0.0, %v4738
    %v4740 = vpop.f32.mrb[0].mxu0
    %4741 = vdwg.mxu0
    %v4742 = vadd.f32 %v4546, %v4680
    %v4743 = vadd.f32 %v4547, %v4683
    %v4744 = vadd.f32 %v4548, %v4688
    %v4745 = vadd.f32 %v4549, %v4691
    %v4746 = vadd.f32 %v4550, %v4696
    %v4747 = vadd.f32 %v4551, %v4699
    %v4748 = vadd.f32 %v4552, %v4704
    %v4749 = vadd.f32 %v4553, %v4707
    %v4750 = vadd.f32 %v4554, %v4712
    %v4751 = vadd.f32 %v4555, %v4715
    %v4752 = vadd.f32 %v4556, %v4720
    %v4753 = vadd.f32 %v4557, %v4723
    %v4754 = vadd.f32 %v4558, %v4728
    %v4755 = vadd.f32 %v4559, %v4731
    %v4756 = vadd.f32 %v4560, %v4736
    %v4757 = vadd.f32 %v4561, %v4739
    %v4758 = vld [vmem:[#allocation2 + $0xc] sm:$0x3]
    %v4759 = vld [vmem:[#allocation2 + $0x14] sm:$0x3]
    %v4760 = vld [vmem:[#allocation2 + $0x1c] sm:$0x3]
    %v4761 = vld [vmem:[#allocation2 + $0x24] sm:$0x3]
    %v4762 = vld [vmem:[#allocation2 + $0x2c] sm:$0x3]
    %v4763 = vld [vmem:[#allocation2 + $0x34] sm:$0x3]
    %v4764 = vld [vmem:[#allocation2 + $0x3c] sm:$0x3]
    %v4765 = vld [vmem:[#allocation2 + $0x44] sm:$0x3]
    %v4766 = vld [vmem:[#allocation2 + $0x4c] sm:$0x3]
    %v4767 = vld [vmem:[#allocation2 + $0x54] sm:$0x3]
    %v4768 = vld [vmem:[#allocation2 + $0x64] sm:$0x3]
    %v4769 = vld [vmem:[#allocation2 + $0x6c] sm:$0x3]
    %v4770 = vld [vmem:[#allocation2 + $0x74] sm:$0x3]
    %v4771 = vld [vmem:[#allocation2 + $0x7c] sm:$0x3]
    %v4772 = vld [vmem:[#allocation2 + $0x84] sm:$0x3]
    %v4773 = vld [vmem:[#allocation2 + $0x8c] sm:$0x3]
    %v4774 = vld [vmem:[#allocation2 + $0x94] sm:$0x3]
    %v4775 = vld [vmem:[#allocation2 + $0x9c] sm:$0x3]
    %v4776 = vld [vmem:[#allocation2 + $0xa4] sm:$0x3]
    %v4777 = vld [vmem:[#allocation2 + $0xac] sm:$0x3]
    %v4779 = vshrl.u32 %v4028, 16
    %v4781 = vrot.slane %v4779, 5
    %v4782 = vshll.u32 %v4028, 16
    %v4784 = vrot.slane %v4782, 6
    %v4785 = vor.u32 %v4781, %v4784
    %v4786 = vrot.slane %v4785, 4
    %v4788 = vshrl.u32 %v4758, 16
    %v4790 = vrot.slane %v4788, 5
    %v4791 = vshll.u32 %v4758, 16
    %v4793 = vrot.slane %v4791, 6
    %v4794 = vor.u32 %v4790, %v4793
    %v4795 = vsel %vm1978, %v4786, %v4794
    %v4797 = vshrl.u32 %v4029, 16
    %v4799 = vrot.slane %v4797, 5
    %v4800 = vshll.u32 %v4029, 16
    %v4802 = vrot.slane %v4800, 6
    %v4803 = vor.u32 %v4799, %v4802
    %v4804 = vrot.slane %v4803, 4
    %v4806 = vshrl.u32 %v4759, 16
    %v4808 = vrot.slane %v4806, 5
    %v4809 = vshll.u32 %v4759, 16
    %v4811 = vrot.slane %v4809, 6
    %v4812 = vor.u32 %v4808, %v4811
    %v4813 = vsel %vm1978, %v4804, %v4812
    %v4815 = vshrl.u32 %v4030, 16
    %v4817 = vrot.slane %v4815, 5
    %v4818 = vshll.u32 %v4030, 16
    %v4820 = vrot.slane %v4818, 6
    %v4821 = vor.u32 %v4817, %v4820
    %v4822 = vrot.slane %v4821, 4
    %v4824 = vshrl.u32 %v4760, 16
    %v4826 = vrot.slane %v4824, 5
    %v4827 = vshll.u32 %v4760, 16
    %v4829 = vrot.slane %v4827, 6
    %v4830 = vor.u32 %v4826, %v4829
    %v4831 = vsel %vm1978, %v4822, %v4830
    %v4833 = vshrl.u32 %v4031, 16
    %v4835 = vrot.slane %v4833, 5
    %v4836 = vshll.u32 %v4031, 16
    %v4838 = vrot.slane %v4836, 6
    %v4839 = vor.u32 %v4835, %v4838
    %v4840 = vrot.slane %v4839, 4
    %v4842 = vshrl.u32 %v4761, 16
    %v4844 = vrot.slane %v4842, 5
    %v4845 = vshll.u32 %v4761, 16
    %v4847 = vrot.slane %v4845, 6
    %v4848 = vor.u32 %v4844, %v4847
    %v4849 = vsel %vm1978, %v4840, %v4848
    %v4851 = vshrl.u32 %v4032, 16
    %v4853 = vrot.slane %v4851, 5
    %v4854 = vshll.u32 %v4032, 16
    %v4856 = vrot.slane %v4854, 6
    %v4857 = vor.u32 %v4853, %v4856
    %v4858 = vrot.slane %v4857, 4
    %v4860 = vshrl.u32 %v4762, 16
    %v4862 = vrot.slane %v4860, 5
    %v4863 = vshll.u32 %v4762, 16
    %v4865 = vrot.slane %v4863, 6
    %v4866 = vor.u32 %v4862, %v4865
    %v4867 = vsel %vm1978, %v4858, %v4866
    %v4869 = vshrl.u32 %v4033, 16
    %v4871 = vrot.slane %v4869, 5
    %v4872 = vshll.u32 %v4033, 16
    %v4874 = vrot.slane %v4872, 6
    %v4875 = vor.u32 %v4871, %v4874
    %v4876 = vrot.slane %v4875, 4
    %v4878 = vshrl.u32 %v4763, 16
    %v4880 = vrot.slane %v4878, 5
    %v4881 = vshll.u32 %v4763, 16
    %v4883 = vrot.slane %v4881, 6
    %v4884 = vor.u32 %v4880, %v4883
    %v4885 = vsel %vm1978, %v4876, %v4884
    %v4887 = vshrl.u32 %v4034, 16
    %v4889 = vrot.slane %v4887, 5
    %v4890 = vshll.u32 %v4034, 16
    %v4892 = vrot.slane %v4890, 6
    %v4893 = vor.u32 %v4889, %v4892
    %v4894 = vrot.slane %v4893, 4
    %v4896 = vshrl.u32 %v4764, 16
    %v4898 = vrot.slane %v4896, 5
    %v4899 = vshll.u32 %v4764, 16
    %v4901 = vrot.slane %v4899, 6
    %v4902 = vor.u32 %v4898, %v4901
    %v4903 = vsel %vm1978, %v4894, %v4902
    %v4905 = vshrl.u32 %v4035, 16
    %v4907 = vrot.slane %v4905, 5
    %v4908 = vshll.u32 %v4035, 16
    %v4910 = vrot.slane %v4908, 6
    %v4911 = vor.u32 %v4907, %v4910
    %v4912 = vrot.slane %v4911, 4
    %v4914 = vshrl.u32 %v4765, 16
    %v4916 = vrot.slane %v4914, 5
    %v4917 = vshll.u32 %v4765, 16
    %v4919 = vrot.slane %v4917, 6
    %v4920 = vor.u32 %v4916, %v4919
    %v4921 = vsel %vm1978, %v4912, %v4920
    %v4923 = vshrl.u32 %v4038, 16
    %v4925 = vrot.slane %v4923, 5
    %v4926 = vshll.u32 %v4038, 16
    %v4928 = vrot.slane %v4926, 6
    %v4929 = vor.u32 %v4925, %v4928
    %v4930 = vrot.slane %v4929, 4
    %v4932 = vshrl.u32 %v4768, 16
    %v4934 = vrot.slane %v4932, 5
    %v4935 = vshll.u32 %v4768, 16
    %v4937 = vrot.slane %v4935, 6
    %v4938 = vor.u32 %v4934, %v4937
    %v4939 = vsel %vm1978, %v4930, %v4938
    %v4941 = vshrl.u32 %v4039, 16
    %v4943 = vrot.slane %v4941, 5
    %v4944 = vshll.u32 %v4039, 16
    %v4946 = vrot.slane %v4944, 6
    %v4947 = vor.u32 %v4943, %v4946
    %v4948 = vrot.slane %v4947, 4
    %v4950 = vshrl.u32 %v4769, 16
    %v4952 = vrot.slane %v4950, 5
    %v4953 = vshll.u32 %v4769, 16
    %v4955 = vrot.slane %v4953, 6
    %v4956 = vor.u32 %v4952, %v4955
    %v4957 = vsel %vm1978, %v4948, %v4956
    %v4959 = vshrl.u32 %v4040, 16
    %v4961 = vrot.slane %v4959, 5
    %v4962 = vshll.u32 %v4040, 16
    %v4964 = vrot.slane %v4962, 6
    %v4965 = vor.u32 %v4961, %v4964
    %v4966 = vrot.slane %v4965, 4
    %v4968 = vshrl.u32 %v4770, 16
    %v4970 = vrot.slane %v4968, 5
    %v4971 = vshll.u32 %v4770, 16
    %v4973 = vrot.slane %v4971, 6
    %v4974 = vor.u32 %v4970, %v4973
    %v4975 = vsel %vm1978, %v4966, %v4974
    %v4977 = vshrl.u32 %v4041, 16
    %v4979 = vrot.slane %v4977, 5
    %v4980 = vshll.u32 %v4041, 16
    %v4982 = vrot.slane %v4980, 6
    %v4983 = vor.u32 %v4979, %v4982
    %v4984 = vrot.slane %v4983, 4
    %v4986 = vshrl.u32 %v4771, 16
    %v4988 = vrot.slane %v4986, 5
    %v4989 = vshll.u32 %v4771, 16
    %v4991 = vrot.slane %v4989, 6
    %v4992 = vor.u32 %v4988, %v4991
    %v4993 = vsel %vm1978, %v4984, %v4992
    %v4995 = vshrl.u32 %v4042, 16
    %v4997 = vrot.slane %v4995, 5
    %v4998 = vshll.u32 %v4042, 16
    %v5000 = vrot.slane %v4998, 6
    %v5001 = vor.u32 %v4997, %v5000
    %v5002 = vrot.slane %v5001, 4
    %v5004 = vshrl.u32 %v4772, 16
    %v5006 = vrot.slane %v5004, 5
    %v5007 = vshll.u32 %v4772, 16
    %v5009 = vrot.slane %v5007, 6
    %v5010 = vor.u32 %v5006, %v5009
    %v5011 = vsel %vm1978, %v5002, %v5010
    %v5013 = vshrl.u32 %v4043, 16
    %v5015 = vrot.slane %v5013, 5
    %v5016 = vshll.u32 %v4043, 16
    %v5018 = vrot.slane %v5016, 6
    %v5019 = vor.u32 %v5015, %v5018
    %v5020 = vrot.slane %v5019, 4
    %v5022 = vshrl.u32 %v4773, 16
    %v5024 = vrot.slane %v5022, 5
    %v5025 = vshll.u32 %v4773, 16
    %v5027 = vrot.slane %v5025, 6
    %v5028 = vor.u32 %v5024, %v5027
    %v5029 = vsel %vm1978, %v5020, %v5028
    %v5031 = vshrl.u32 %v4044, 16
    %v5033 = vrot.slane %v5031, 5
    %v5034 = vshll.u32 %v4044, 16
    %v5036 = vrot.slane %v5034, 6
    %v5037 = vor.u32 %v5033, %v5036
    %v5038 = vrot.slane %v5037, 4
    %v5040 = vshrl.u32 %v4774, 16
    %v5042 = vrot.slane %v5040, 5
    %v5043 = vshll.u32 %v4774, 16
    %v5045 = vrot.slane %v5043, 6
    %v5046 = vor.u32 %v5042, %v5045
    %v5047 = vsel %vm1978, %v5038, %v5046
    %v5049 = vshrl.u32 %v4045, 16
    %v5051 = vrot.slane %v5049, 5
    %v5052 = vshll.u32 %v4045, 16
    %v5054 = vrot.slane %v5052, 6
    %v5055 = vor.u32 %v5051, %v5054
    %v5056 = vrot.slane %v5055, 4
    %v5058 = vshrl.u32 %v4775, 16
    %v5060 = vrot.slane %v5058, 5
    %v5061 = vshll.u32 %v4775, 16
    %v5063 = vrot.slane %v5061, 6
    %v5064 = vor.u32 %v5060, %v5063
    %v5065 = vsel %vm1978, %v5056, %v5064
    %s5066 = scalar_lea.vmem [#allocation8], 128
    %v5067 = vld [vmem:[%s5066] sm:$0xf]
    %v5068 = vld [vmem:[%s5066 + $0x4] sm:$0xf]
    %v5069 = vld [vmem:[%s5066 + $0x8] sm:$0xf]
    %v5070 = vld [vmem:[%s5066 + $0xc] sm:$0xf]
    %v5071 = vld [vmem:[%s5066 + $0x10] sm:$0xf]
    %v5072 = vld [vmem:[%s5066 + $0x14] sm:$0xf]
    %v5073 = vld [vmem:[%s5066 + $0x18] sm:$0xf]
    %v5074 = vld [vmem:[%s5066 + $0x1c] sm:$0xf]
    %v5075 = vld [vmem:[%s5066 + $0x20] sm:$0xf]
    %v5076 = vld [vmem:[%s5066 + $0x24] sm:$0xf]
    %v5077 = vld [vmem:[%s5066 + $0x28] sm:$0xf]
    %v5078 = vld [vmem:[%s5066 + $0x2c] sm:$0xf]
    %v5079 = vld [vmem:[%s5066 + $0x30] sm:$0xf]
    %v5080 = vld [vmem:[%s5066 + $0x34] sm:$0xf]
    %v5081 = vld [vmem:[%s5066 + $0x38] sm:$0xf]
    %v5082 = vld [vmem:[%s5066 + $0x3c] sm:$0xf]
    %v5083 = vunpack.c.l.b16 %v4795
    %v5084 = vunpack.c.l.b16 %v4813
    %v5085 = vunpack.c.l.b16 %v4831
    %v5086 = vunpack.c.l.b16 %v4849
    %v5087 = vunpack.c.l.b16 %v4867
    %v5088 = vunpack.c.l.b16 %v4885
    %v5089 = vunpack.c.l.b16 %v4903
    %v5090 = vunpack.c.l.b16 %v4921
    %v5091 = vunpack.c.l.b16 %v4939
    %v5092 = vunpack.c.l.b16 %v4957
    %v5093 = vunpack.c.l.b16 %v4975
    %v5094 = vunpack.c.l.b16 %v4993
    %v5095 = vunpack.c.l.b16 %v5011
    %v5096 = vunpack.c.l.b16 %v5029
    %v5097 = vunpack.c.l.b16 %v5047
    %v5098 = vunpack.c.l.b16 %v5065
    %v5099 = vpack.c.b16 %v5084, %v5083
    %v5100 = vpack.c.b16 %v5086, %v5085
    %v5101 = vpack.c.b16 %v5088, %v5087
    %v5102 = vpack.c.b16 %v5090, %v5089
    %v5103 = vpack.c.b16 %v5092, %v5091
    %v5104 = vpack.c.b16 %v5094, %v5093
    %v5105 = vpack.c.b16 %v5096, %v5095
    %v5106 = vpack.c.b16 %v5098, %v5097
    %v5131 = vunpack.c.l.b16 %v5067
    %v5132 = vunpack.c.l.b16 %v5068
    %v5133 = vunpack.c.l.b16 %v5069
    %v5134 = vunpack.c.l.b16 %v5070
    %v5135 = vunpack.c.l.b16 %v5071
    %v5136 = vunpack.c.l.b16 %v5072
    %v5137 = vunpack.c.l.b16 %v5073
    %v5138 = vunpack.c.l.b16 %v5074
    %v5139 = vunpack.c.l.b16 %v5075
    %v5140 = vunpack.c.l.b16 %v5076
    %v5141 = vunpack.c.l.b16 %v5077
    %v5142 = vunpack.c.l.b16 %v5078
    %v5143 = vunpack.c.l.b16 %v5079
    %v5144 = vunpack.c.l.b16 %v5080
    %v5145 = vunpack.c.l.b16 %v5081
    %v5146 = vunpack.c.l.b16 %v5082
    %v5147 = vpack.c.b16 %v5132, %v5131
    %v5148 = vpack.c.b16 %v5134, %v5133
    %v5149 = vpack.c.b16 %v5136, %v5135
    %v5150 = vpack.c.b16 %v5138, %v5137
    %v5151 = vpack.c.b16 %v5140, %v5139
    %v5152 = vpack.c.b16 %v5142, %v5141
    %v5153 = vpack.c.b16 %v5144, %v5143
    %v5154 = vpack.c.b16 %v5146, %v5145
    %5163 = vmatprep.subr.bf16.mxu0 0
    %5164 = vmatpush1.bf16.msra.mxu0 %v5147
    %5165 = vmatprep.subr.bf16.mxu0 0
    %5166 = vmatpush1.bf16.msra.mxu0 %v5148
    %5167 = vmatprep.subr.bf16.mxu0 0
    %5168 = vmatpush1.bf16.msra.mxu0 %v5149
    %5169 = vmatprep.subr.bf16.mxu0 0
    %5170 = vmatpush1.bf16.msra.mxu0 %v5150
    %5171 = vmatprep.subr.bf16.mxu0 0
    %5172 = vmatpush1.bf16.msra.mxu0 %v5151
    %5173 = vmatprep.subr.bf16.mxu0 0
    %5174 = vmatpush1.bf16.msra.mxu0 %v5152
    %5175 = vmatprep.subr.bf16.mxu0 0
    %5176 = vmatpush1.bf16.msra.mxu0 %v5153
    %5177 = vmatprep.subr.bf16.mxu0 0
    %5178 = vmatpush1.bf16.msra.mxu0 %v5154
    %5179 = vmatprep.subr.bf16.mxu0 0
    %5180 = vmatpush1.bf16.msra.mxu0 0
    %5181 = vmatprep.subr.bf16.mxu0 0
    %5182 = vmatpush1.bf16.msra.mxu0 0
    %5183 = vmatprep.subr.bf16.mxu0 0
    %5184 = vmatpush1.bf16.msra.mxu0 0
    %5185 = vmatprep.subr.bf16.mxu0 0
    %5186 = vmatpush1.bf16.msra.mxu0 0
    %5187 = vmatprep.subr.bf16.mxu0 0
    %5188 = vmatpush1.bf16.msra.mxu0 0
    %5189 = vmatprep.subr.bf16.mxu0 0
    %5190 = vmatpush1.bf16.msra.mxu0 0
    %5191 = vmatprep.subr.bf16.mxu0 0
    %5192 = vmatpush1.bf16.msra.mxu0 0
    %5193 = vmatprep.subr.bf16.mxu0 0
    %5194 = vmatpush1.bf16.msra.mxu0 0
    %5195 = vmatprep.mubr.bf16.mxu0 0
    %5196 = vmatmul.mubr.bf16.gmra.mrb[0].mxu0 %v5099
    %v5197 = vpop.f32.mrb[0].mxu0
    %v5198 = vadd.f32 0.0, %v5197
    %v5199 = vpop.f32.mrb[0].mxu0
    %v5200 = vpop.f32.mrb[0].mxu0
    %v5201 = vadd.f32 0.0, %v5200
    %v5202 = vpop.f32.mrb[0].mxu0
    %5203 = vmatprep.mubr.bf16.mxu0 0
    %5204 = vmatmul.mubr.bf16.gmra.mrb[0].mxu0 %v5100
    %v5205 = vpop.f32.mrb[0].mxu0
    %v5206 = vadd.f32 0.0, %v5205
    %v5207 = vpop.f32.mrb[0].mxu0
    %v5208 = vpop.f32.mrb[0].mxu0
    %v5209 = vadd.f32 0.0, %v5208
    %v5210 = vpop.f32.mrb[0].mxu0
    %5211 = vmatprep.mubr.bf16.mxu0 0
    %5212 = vmatmul.mubr.bf16.gmra.mrb[0].mxu0 %v5101
    %v5213 = vpop.f32.mrb[0].mxu0
    %v5214 = vadd.f32 0.0, %v5213
    %v5215 = vpop.f32.mrb[0].mxu0
    %v5216 = vpop.f32.mrb[0].mxu0
    %v5217 = vadd.f32 0.0, %v5216
    %v5218 = vpop.f32.mrb[0].mxu0
    %5219 = vmatprep.mubr.bf16.mxu0 0
    %5220 = vmatmul.mubr.bf16.gmra.mrb[0].mxu0 %v5102
    %v5221 = vpop.f32.mrb[0].mxu0
    %v5222 = vadd.f32 0.0, %v5221
    %v5223 = vpop.f32.mrb[0].mxu0
    %v5224 = vpop.f32.mrb[0].mxu0
    %v5225 = vadd.f32 0.0, %v5224
    %v5226 = vpop.f32.mrb[0].mxu0
    %5227 = vmatprep.mubr.bf16.mxu0 0
    %5228 = vmatmul.mubr.bf16.gmra.mrb[0].mxu0 %v5103
    %v5229 = vpop.f32.mrb[0].mxu0
    %v5230 = vadd.f32 0.0, %v5229
    %v5231 = vpop.f32.mrb[0].mxu0
    %v5232 = vpop.f32.mrb[0].mxu0
    %v5233 = vadd.f32 0.0, %v5232
    %v5234 = vpop.f32.mrb[0].mxu0
    %5235 = vmatprep.mubr.bf16.mxu0 0
    %5236 = vmatmul.mubr.bf16.gmra.mrb[0].mxu0 %v5104
    %v5237 = vpop.f32.mrb[0].mxu0
    %v5238 = vadd.f32 0.0, %v5237
    %v5239 = vpop.f32.mrb[0].mxu0
    %v5240 = vpop.f32.mrb[0].mxu0
    %v5241 = vadd.f32 0.0, %v5240
    %v5242 = vpop.f32.mrb[0].mxu0
    %5243 = vmatprep.mubr.bf16.mxu0 0
    %5244 = vmatmul.mubr.bf16.gmra.mrb[0].mxu0 %v5105
    %v5245 = vpop.f32.mrb[0].mxu0
    %v5246 = vadd.f32 0.0, %v5245
    %v5247 = vpop.f32.mrb[0].mxu0
    %v5248 = vpop.f32.mrb[0].mxu0
    %v5249 = vadd.f32 0.0, %v5248
    %v5250 = vpop.f32.mrb[0].mxu0
    %5251 = vmatprep.mubr.bf16.mxu0 0
    %5252 = vmatmul.mubr.bf16.gmra.mrb[0].mxu0 %v5106
    %v5253 = vpop.f32.mrb[0].mxu0
    %v5254 = vadd.f32 0.0, %v5253
    %v5255 = vpop.f32.mrb[0].mxu0
    %v5256 = vpop.f32.mrb[0].mxu0
    %v5257 = vadd.f32 0.0, %v5256
    %v5258 = vpop.f32.mrb[0].mxu0
    %5259 = vdwg.mxu0
    %v5260 = vadd.f32 %v4742, %v5198
    %v5261 = vadd.f32 %v4743, %v5201
    %v5262 = vadd.f32 %v4744, %v5206
    %v5263 = vadd.f32 %v4745, %v5209
    %v5264 = vadd.f32 %v4746, %v5214
    %v5265 = vadd.f32 %v4747, %v5217
    %v5266 = vadd.f32 %v4748, %v5222
    %v5267 = vadd.f32 %v4749, %v5225
    %v5268 = vadd.f32 %v4750, %v5230
    %v5269 = vadd.f32 %v4751, %v5233
    %v5270 = vadd.f32 %v4752, %v5238
    %v5271 = vadd.f32 %v4753, %v5241
    %v5272 = vadd.f32 %v4754, %v5246
    %v5273 = vadd.f32 %v4755, %v5249
    %v5274 = vadd.f32 %v4756, %v5254
    %v5275 = vadd.f32 %v4757, %v5257
    %v5277 = vshrl.u32 %v4036, 16
    %v5279 = vrot.slane %v5277, 5
    %v5280 = vshll.u32 %v4036, 16
    %v5282 = vrot.slane %v5280, 6
    %v5283 = vor.u32 %v5279, %v5282
    %v5284 = vrot.slane %v5283, 4
    %v5286 = vshrl.u32 %v4766, 16
    %v5288 = vrot.slane %v5286, 5
    %v5289 = vshll.u32 %v4766, 16
    %v5291 = vrot.slane %v5289, 6
    %v5292 = vor.u32 %v5288, %v5291
    %v5293 = vsel %vm1978, %v5284, %v5292
    %v5295 = vshrl.u32 %v4046, 16
    %v5297 = vrot.slane %v5295, 5
    %v5298 = vshll.u32 %v4046, 16
    %v5300 = vrot.slane %v5298, 6
    %v5301 = vor.u32 %v5297, %v5300
    %v5302 = vrot.slane %v5301, 4
    %v5304 = vshrl.u32 %v4776, 16
    %v5306 = vrot.slane %v5304, 5
    %v5307 = vshll.u32 %v4776, 16
    %v5309 = vrot.slane %v5307, 6
    %v5310 = vor.u32 %v5306, %v5309
    %v5311 = vsel %vm1978, %v5302, %v5310
    %s5312 = scalar_lea.vmem [#allocation8], 320
    %v5313 = vld [vmem:[%s5312] sm:$0xf]
    %v5314 = vld [vmem:[%s5312 + $0x4] sm:$0xf]
    %v5315 = vld [vmem:[%s5312 + $0x8] sm:$0xf]
    %v5316 = vld [vmem:[%s5312 + $0xc] sm:$0xf]
    %v5317 = vld [vmem:[%s5312 + $0x10] sm:$0xf]
    %v5318 = vld [vmem:[%s5312 + $0x14] sm:$0xf]
    %v5319 = vld [vmem:[%s5312 + $0x18] sm:$0xf]
    %v5320 = vld [vmem:[%s5312 + $0x1c] sm:$0xf]
    %v5321 = vld [vmem:[%s5312 + $0x20] sm:$0xf]
    %v5322 = vld [vmem:[%s5312 + $0x24] sm:$0xf]
    %v5323 = vld [vmem:[%s5312 + $0x28] sm:$0xf]
    %v5324 = vld [vmem:[%s5312 + $0x2c] sm:$0xf]
    %v5325 = vld [vmem:[%s5312 + $0x30] sm:$0xf]
    %v5326 = vld [vmem:[%s5312 + $0x34] sm:$0xf]
    %v5327 = vld [vmem:[%s5312 + $0x38] sm:$0xf]
    %v5328 = vld [vmem:[%s5312 + $0x3c] sm:$0xf]
    %v5329 = vunpack.c.l.b16 %v5293
    %v5330 = vunpack.c.l.b16 %v5311
    %v5331 = vpack.c.b16 %v5085, %v5084
    %v5332 = vpack.c.b16 %v5087, %v5086
    %v5333 = vpack.c.b16 %v5089, %v5088
    %v5334 = vpack.c.b16 %v5329, %v5090
    %v5335 = vpack.c.b16 %v5093, %v5092
    %v5336 = vpack.c.b16 %v5095, %v5094
    %v5337 = vpack.c.b16 %v5097, %v5096
    %v5338 = vpack.c.b16 %v5330, %v5098
    %v5363 = vunpack.c.l.b16 %v5313
    %v5364 = vunpack.c.l.b16 %v5314
    %v5365 = vunpack.c.l.b16 %v5315
    %v5366 = vunpack.c.l.b16 %v5316
    %v5367 = vunpack.c.l.b16 %v5317
    %v5368 = vunpack.c.l.b16 %v5318
    %v5369 = vunpack.c.l.b16 %v5319
    %v5370 = vunpack.c.l.b16 %v5320
    %v5371 = vunpack.c.l.b16 %v5321
    %v5372 = vunpack.c.l.b16 %v5322
    %v5373 = vunpack.c.l.b16 %v5323
    %v5374 = vunpack.c.l.b16 %v5324
    %v5375 = vunpack.c.l.b16 %v5325
    %v5376 = vunpack.c.l.b16 %v5326
    %v5377 = vunpack.c.l.b16 %v5327
    %v5378 = vunpack.c.l.b16 %v5328
    %v5379 = vpack.c.b16 %v5364, %v5363
    %v5380 = vpack.c.b16 %v5366, %v5365
    %v5381 = vpack.c.b16 %v5368, %v5367
    %v5382 = vpack.c.b16 %v5370, %v5369
    %v5383 = vpack.c.b16 %v5372, %v5371
    %v5384 = vpack.c.b16 %v5374, %v5373
    %v5385 = vpack.c.b16 %v5376, %v5375
    %v5386 = vpack.c.b16 %v5378, %v5377
    %5395 = vmatprep.subr.bf16.mxu0 0
    %5396 = vmatpush1.bf16.msra.mxu0 %v5379
    %5397 = vmatprep.subr.bf16.mxu0 0
    %5398 = vmatpush1.bf16.msra.mxu0 %v5380
    %5399 = vmatprep.subr.bf16.mxu0 0
    %5400 = vmatpush1.bf16.msra.mxu0 %v5381
    %5401 = vmatprep.subr.bf16.mxu0 0
    %5402 = vmatpush1.bf16.msra.mxu0 %v5382
    %5403 = vmatprep.subr.bf16.mxu0 0
    %5404 = vmatpush1.bf16.msra.mxu0 %v5383
    %5405 = vmatprep.subr.bf16.mxu0 0
    %5406 = vmatpush1.bf16.msra.mxu0 %v5384
    %5407 = vmatprep.subr.bf16.mxu0 0
    %5408 = vmatpush1.bf16.msra.mxu0 %v5385
    %5409 = vmatprep.subr.bf16.mxu0 0
    %5410 = vmatpush1.bf16.msra.mxu0 %v5386
    %5411 = vmatprep.subr.bf16.mxu0 0
    %5412 = vmatpush1.bf16.msra.mxu0 0
    %5413 = vmatprep.subr.bf16.mxu0 0
    %5414 = vmatpush1.bf16.msra.mxu0 0
    %5415 = vmatprep.subr.bf16.mxu0 0
    %5416 = vmatpush1.bf16.msra.mxu0 0
    %5417 = vmatprep.subr.bf16.mxu0 0
    %5418 = vmatpush1.bf16.msra.mxu0 0
    %5419 = vmatprep.subr.bf16.mxu0 0
    %5420 = vmatpush1.bf16.msra.mxu0 0
    %5421 = vmatprep.subr.bf16.mxu0 0
    %5422 = vmatpush1.bf16.msra.mxu0 0
    %5423 = vmatprep.subr.bf16.mxu0 0
    %5424 = vmatpush1.bf16.msra.mxu0 0
    %5425 = vmatprep.subr.bf16.mxu0 0
    %5426 = vmatpush1.bf16.msra.mxu0 0
    %5427 = vmatprep.mubr.bf16.mxu0 0
    %5428 = vmatmul.mubr.bf16.gmra.mrb[0].mxu0 %v5331
    %v5429 = vpop.f32.mrb[0].mxu0
    %v5430 = vadd.f32 0.0, %v5429
    %v5431 = vpop.f32.mrb[0].mxu0
    %v5432 = vpop.f32.mrb[0].mxu0
    %v5433 = vadd.f32 0.0, %v5432
    %v5434 = vpop.f32.mrb[0].mxu0
    %5435 = vmatprep.mubr.bf16.mxu0 0
    %5436 = vmatmul.mubr.bf16.gmra.mrb[0].mxu0 %v5332
    %v5437 = vpop.f32.mrb[0].mxu0
    %v5438 = vadd.f32 0.0, %v5437
    %v5439 = vpop.f32.mrb[0].mxu0
    %v5440 = vpop.f32.mrb[0].mxu0
    %v5441 = vadd.f32 0.0, %v5440
    %v5442 = vpop.f32.mrb[0].mxu0
    %5443 = vmatprep.mubr.bf16.mxu0 0
    %5444 = vmatmul.mubr.bf16.gmra.mrb[0].mxu0 %v5333
    %v5445 = vpop.f32.mrb[0].mxu0
    %v5446 = vadd.f32 0.0, %v5445
    %v5447 = vpop.f32.mrb[0].mxu0
    %v5448 = vpop.f32.mrb[0].mxu0
    %v5449 = vadd.f32 0.0, %v5448
    %v5450 = vpop.f32.mrb[0].mxu0
    %5451 = vmatprep.mubr.bf16.mxu0 0
    %5452 = vmatmul.mubr.bf16.gmra.mrb[0].mxu0 %v5334
    %v5453 = vpop.f32.mrb[0].mxu0
    %v5454 = vadd.f32 0.0, %v5453
    %v5455 = vpop.f32.mrb[0].mxu0
    %v5456 = vpop.f32.mrb[0].mxu0
    %v5457 = vadd.f32 0.0, %v5456
    %v5458 = vpop.f32.mrb[0].mxu0
    %5459 = vmatprep.mubr.bf16.mxu0 0
    %5460 = vmatmul.mubr.bf16.gmra.mrb[0].mxu0 %v5335
    %v5461 = vpop.f32.mrb[0].mxu0
    %v5462 = vadd.f32 0.0, %v5461
    %v5463 = vpop.f32.mrb[0].mxu0
    %v5464 = vpop.f32.mrb[0].mxu0
    %v5465 = vadd.f32 0.0, %v5464
    %v5466 = vpop.f32.mrb[0].mxu0
    %5467 = vmatprep.mubr.bf16.mxu0 0
    %5468 = vmatmul.mubr.bf16.gmra.mrb[0].mxu0 %v5336
    %v5469 = vpop.f32.mrb[0].mxu0
    %v5470 = vadd.f32 0.0, %v5469
    %v5471 = vpop.f32.mrb[0].mxu0
    %v5472 = vpop.f32.mrb[0].mxu0
    %v5473 = vadd.f32 0.0, %v5472
    %v5474 = vpop.f32.mrb[0].mxu0
    %5475 = vmatprep.mubr.bf16.mxu0 0
    %5476 = vmatmul.mubr.bf16.gmra.mrb[0].mxu0 %v5337
    %v5477 = vpop.f32.mrb[0].mxu0
    %v5478 = vadd.f32 0.0, %v5477
    %v5479 = vpop.f32.mrb[0].mxu0
    %v5480 = vpop.f32.mrb[0].mxu0
    %v5481 = vadd.f32 0.0, %v5480
    %v5482 = vpop.f32.mrb[0].mxu0
    %5483 = vmatprep.mubr.bf16.mxu0 0
    %5484 = vmatmul.mubr.bf16.gmra.mrb[0].mxu0 %v5338
    %v5485 = vpop.f32.mrb[0].mxu0
    %v5486 = vadd.f32 0.0, %v5485
    %v5487 = vpop.f32.mrb[0].mxu0
    %v5488 = vpop.f32.mrb[0].mxu0
    %v5489 = vadd.f32 0.0, %v5488
    %v5490 = vpop.f32.mrb[0].mxu0
    %5491 = vdwg.mxu0
    %v5492 = vadd.f32 %v5260, %v5430
    %v5493 = vadd.f32 %v5261, %v5433
    %v5494 = vadd.f32 %v5262, %v5438
    %v5495 = vadd.f32 %v5263, %v5441
    %v5496 = vadd.f32 %v5264, %v5446
    %v5497 = vadd.f32 %v5265, %v5449
    %v5498 = vadd.f32 %v5266, %v5454
    %v5499 = vadd.f32 %v5267, %v5457
    %v5500 = vadd.f32 %v5268, %v5462
    %v5501 = vadd.f32 %v5269, %v5465
    %v5502 = vadd.f32 %v5270, %v5470
    %v5503 = vadd.f32 %v5271, %v5473
    %v5504 = vadd.f32 %v5272, %v5478
    %v5505 = vadd.f32 %v5273, %v5481
    %v5506 = vadd.f32 %v5274, %v5486
    %v5507 = vadd.f32 %v5275, %v5489
    %v5509 = vshrl.u32 %v4037, 16
    %v5511 = vrot.slane %v5509, 5
    %v5512 = vshll.u32 %v4037, 16
    %v5514 = vrot.slane %v5512, 6
    %v5515 = vor.u32 %v5511, %v5514
    %v5516 = vrot.slane %v5515, 4
    %v5518 = vshrl.u32 %v4767, 16
    %v5520 = vrot.slane %v5518, 5
    %v5521 = vshll.u32 %v4767, 16
    %v5523 = vrot.slane %v5521, 6
    %v5524 = vor.u32 %v5520, %v5523
    %v5525 = vsel %vm1978, %v5516, %v5524
    %v5527 = vshrl.u32 %v4047, 16
    %v5529 = vrot.slane %v5527, 5
    %v5530 = vshll.u32 %v4047, 16
    %v5532 = vrot.slane %v5530, 6
    %v5533 = vor.u32 %v5529, %v5532
    %v5534 = vrot.slane %v5533, 4
    %v5536 = vshrl.u32 %v4777, 16
    %v5538 = vrot.slane %v5536, 5
    %v5539 = vshll.u32 %v4777, 16
    %v5541 = vrot.slane %v5539, 6
    %v5542 = vor.u32 %v5538, %v5541
    %v5543 = vsel %vm1978, %v5534, %v5542
    %s5544 = scalar_lea.vmem [#allocation8], 512
    %v5545 = vld [vmem:[%s5544] sm:$0xf]
    %v5546 = vld [vmem:[%s5544 + $0x4] sm:$0xf]
    %v5547 = vld [vmem:[%s5544 + $0x8] sm:$0xf]
    %v5548 = vld [vmem:[%s5544 + $0xc] sm:$0xf]
    %v5549 = vld [vmem:[%s5544 + $0x10] sm:$0xf]
    %v5550 = vld [vmem:[%s5544 + $0x14] sm:$0xf]
    %v5551 = vld [vmem:[%s5544 + $0x18] sm:$0xf]
    %v5552 = vld [vmem:[%s5544 + $0x1c] sm:$0xf]
    %v5553 = vld [vmem:[%s5544 + $0x20] sm:$0xf]
    %v5554 = vld [vmem:[%s5544 + $0x24] sm:$0xf]
    %v5555 = vld [vmem:[%s5544 + $0x28] sm:$0xf]
    %v5556 = vld [vmem:[%s5544 + $0x2c] sm:$0xf]
    %v5557 = vld [vmem:[%s5544 + $0x30] sm:$0xf]
    %v5558 = vld [vmem:[%s5544 + $0x34] sm:$0xf]
    %v5559 = vld [vmem:[%s5544 + $0x38] sm:$0xf]
    %v5560 = vld [vmem:[%s5544 + $0x3c] sm:$0xf]
    %v5561 = vunpack.c.l.b16 %v5525
    %v5562 = vunpack.c.l.b16 %v5543
    %v5563 = vpack.c.b16 %v5561, %v5329
    %v5564 = vpack.c.b16 %v5562, %v5330
    %v5583 = vunpack.c.l.b16 %v5545
    %v5584 = vunpack.c.l.b16 %v5546
    %v5585 = vunpack.c.l.b16 %v5547
    %v5586 = vunpack.c.l.b16 %v5548
    %v5587 = vunpack.c.l.b16 %v5549
    %v5588 = vunpack.c.l.b16 %v5550
    %v5589 = vunpack.c.l.b16 %v5551
    %v5590 = vunpack.c.l.b16 %v5552
    %v5591 = vunpack.c.l.b16 %v5553
    %v5592 = vunpack.c.l.b16 %v5554
    %v5593 = vunpack.c.l.b16 %v5555
    %v5594 = vunpack.c.l.b16 %v5556
    %v5595 = vunpack.c.l.b16 %v5557
    %v5596 = vunpack.c.l.b16 %v5558
    %v5597 = vunpack.c.l.b16 %v5559
    %v5598 = vunpack.c.l.b16 %v5560
    %v5599 = vpack.c.b16 %v5584, %v5583
    %v5600 = vpack.c.b16 %v5586, %v5585
    %v5601 = vpack.c.b16 %v5588, %v5587
    %v5602 = vpack.c.b16 %v5590, %v5589
    %v5603 = vpack.c.b16 %v5592, %v5591
    %v5604 = vpack.c.b16 %v5594, %v5593
    %v5605 = vpack.c.b16 %v5596, %v5595
    %v5606 = vpack.c.b16 %v5598, %v5597
    %5615 = vmatprep.subr.bf16.mxu0 0
    %5616 = vmatpush1.bf16.msra.mxu0 %v5599
    %5617 = vmatprep.subr.bf16.mxu0 0
    %5618 = vmatpush1.bf16.msra.mxu0 %v5600
    %5619 = vmatprep.subr.bf16.mxu0 0
    %5620 = vmatpush1.bf16.msra.mxu0 %v5601
    %5621 = vmatprep.subr.bf16.mxu0 0
    %5622 = vmatpush1.bf16.msra.mxu0 %v5602
    %5623 = vmatprep.subr.bf16.mxu0 0
    %5624 = vmatpush1.bf16.msra.mxu0 %v5603
    %5625 = vmatprep.subr.bf16.mxu0 0
    %5626 = vmatpush1.bf16.msra.mxu0 %v5604
    %5627 = vmatprep.subr.bf16.mxu0 0
    %5628 = vmatpush1.bf16.msra.mxu0 %v5605
    %5629 = vmatprep.subr.bf16.mxu0 0
    %5630 = vmatpush1.bf16.msra.mxu0 %v5606
    %5631 = vmatprep.subr.bf16.mxu0 0
    %5632 = vmatpush1.bf16.msra.mxu0 0
    %5633 = vmatprep.subr.bf16.mxu0 0
    %5634 = vmatpush1.bf16.msra.mxu0 0
    %5635 = vmatprep.subr.bf16.mxu0 0
    %5636 = vmatpush1.bf16.msra.mxu0 0
    %5637 = vmatprep.subr.bf16.mxu0 0
    %5638 = vmatpush1.bf16.msra.mxu0 0
    %5639 = vmatprep.subr.bf16.mxu0 0
    %5640 = vmatpush1.bf16.msra.mxu0 0
    %5641 = vmatprep.subr.bf16.mxu0 0
    %5642 = vmatpush1.bf16.msra.mxu0 0
    %5643 = vmatprep.subr.bf16.mxu0 0
    %5644 = vmatpush1.bf16.msra.mxu0 0
    %5645 = vmatprep.subr.bf16.mxu0 0
    %5646 = vmatpush1.bf16.msra.mxu0 0
    %5647 = vmatprep.mubr.bf16.mxu0 0
    %5648 = vmatmul.mubr.bf16.gmra.mrb[0].mxu0 %v5100
    %v5649 = vpop.f32.mrb[0].mxu0
    %v5650 = vadd.f32 0.0, %v5649
    %v5651 = vpop.f32.mrb[0].mxu0
    %v5652 = vpop.f32.mrb[0].mxu0
    %v5653 = vadd.f32 0.0, %v5652
    %v5654 = vpop.f32.mrb[0].mxu0
    %5655 = vmatprep.mubr.bf16.mxu0 0
    %5656 = vmatmul.mubr.bf16.gmra.mrb[0].mxu0 %v5101
    %v5657 = vpop.f32.mrb[0].mxu0
    %v5658 = vadd.f32 0.0, %v5657
    %v5659 = vpop.f32.mrb[0].mxu0
    %v5660 = vpop.f32.mrb[0].mxu0
    %v5661 = vadd.f32 0.0, %v5660
    %v5662 = vpop.f32.mrb[0].mxu0
    %5663 = vmatprep.mubr.bf16.mxu0 0
    %5664 = vmatmul.mubr.bf16.gmra.mrb[0].mxu0 %v5102
    %v5665 = vpop.f32.mrb[0].mxu0
    %v5666 = vadd.f32 0.0, %v5665
    %v5667 = vpop.f32.mrb[0].mxu0
    %v5668 = vpop.f32.mrb[0].mxu0
    %v5669 = vadd.f32 0.0, %v5668
    %v5670 = vpop.f32.mrb[0].mxu0
    %5671 = vmatprep.mubr.bf16.mxu0 0
    %5672 = vmatmul.mubr.bf16.gmra.mrb[0].mxu0 %v5563
    %v5673 = vpop.f32.mrb[0].mxu0
    %v5674 = vadd.f32 0.0, %v5673
    %v5675 = vpop.f32.mrb[0].mxu0
    %v5676 = vpop.f32.mrb[0].mxu0
    %v5677 = vadd.f32 0.0, %v5676
    %v5678 = vpop.f32.mrb[0].mxu0
    %5679 = vmatprep.mubr.bf16.mxu0 0
    %5680 = vmatmul.mubr.bf16.gmra.mrb[0].mxu0 %v5104
    %v5681 = vpop.f32.mrb[0].mxu0
    %v5682 = vadd.f32 0.0, %v5681
    %v5683 = vpop.f32.mrb[0].mxu0
    %v5684 = vpop.f32.mrb[0].mxu0
    %v5685 = vadd.f32 0.0, %v5684
    %v5686 = vpop.f32.mrb[0].mxu0
    %5687 = vmatprep.mubr.bf16.mxu0 0
    %5688 = vmatmul.mubr.bf16.gmra.mrb[0].mxu0 %v5105
    %v5689 = vpop.f32.mrb[0].mxu0
    %v5690 = vadd.f32 0.0, %v5689
    %v5691 = vpop.f32.mrb[0].mxu0
    %v5692 = vpop.f32.mrb[0].mxu0
    %v5693 = vadd.f32 0.0, %v5692
    %v5694 = vpop.f32.mrb[0].mxu0
    %5695 = vmatprep.mubr.bf16.mxu0 0
    %5696 = vmatmul.mubr.bf16.gmra.mrb[0].mxu0 %v5106
    %v5697 = vpop.f32.mrb[0].mxu0
    %v5698 = vadd.f32 0.0, %v5697
    %v5699 = vpop.f32.mrb[0].mxu0
    %v5700 = vpop.f32.mrb[0].mxu0
    %v5701 = vadd.f32 0.0, %v5700
    %v5702 = vpop.f32.mrb[0].mxu0
    %5703 = vmatprep.mubr.bf16.mxu0 0
    %5704 = vmatmul.mubr.bf16.gmra.mrb[0].mxu0 %v5564
    %v5705 = vpop.f32.mrb[0].mxu0
    %v5706 = vadd.f32 0.0, %v5705
    %v5707 = vpop.f32.mrb[0].mxu0
    %v5708 = vpop.f32.mrb[0].mxu0
    %v5709 = vadd.f32 0.0, %v5708
    %v5710 = vpop.f32.mrb[0].mxu0
    %5711 = vdwg.mxu0
    %v5712 = vadd.f32 %v5492, %v5650
    %v5713 = vadd.f32 %v5493, %v5653
    %v5714 = vadd.f32 %v5494, %v5658
    %v5715 = vadd.f32 %v5495, %v5661
    %v5716 = vadd.f32 %v5496, %v5666
    %v5717 = vadd.f32 %v5497, %v5669
    %v5718 = vadd.f32 %v5498, %v5674
    %v5719 = vadd.f32 %v5499, %v5677
    %v5720 = vadd.f32 %v5500, %v5682
    %v5721 = vadd.f32 %v5501, %v5685
    %v5722 = vadd.f32 %v5502, %v5690
    %v5723 = vadd.f32 %v5503, %v5693
    %v5724 = vadd.f32 %v5504, %v5698
    %v5725 = vadd.f32 %v5505, %v5701
    %v5726 = vadd.f32 %v5506, %v5706
    %v5727 = vadd.f32 %v5507, %v5709
    %v5728 = vld [vmem:[%s5] sm:$0x1]
    %v5730 = vlaneseq
    %v5731 = vshrl.u32 %v5730, 7
    %v5732 = vsub.s32 0, %v5731
    %v5733 = vrot.slane %v5728, %v5732
    %v5735 = vmul.f32 %v5712, %v5733
    %v5736 = vmul.f32 %v5713, %v5733
    %v5737 = vmul.f32 %v5714, %v5733
    %v5738 = vmul.f32 %v5715, %v5733
    %v5739 = vmul.f32 %v5716, %v5733
    %v5740 = vmul.f32 %v5717, %v5733
    %v5741 = vmul.f32 %v5718, %v5733
    %v5742 = vmul.f32 %v5719, %v5733
    %v5743 = vmul.f32 %v5720, %v5733
    %v5744 = vmul.f32 %v5721, %v5733
    %v5745 = vmul.f32 %v5722, %v5733
    %v5746 = vmul.f32 %v5723, %v5733
    %v5747 = vmul.f32 %v5724, %v5733
    %v5748 = vmul.f32 %v5725, %v5733
    %v5749 = vmul.f32 %v5726, %v5733
    %v5750 = vmul.f32 %v5727, %v5733
    %v5751 = vld [vmem:[%s6] sm:$0x1]
    %v5753 = vlaneseq
    %v5754 = vshrl.u32 %v5753, 7
    %v5755 = vsub.s32 0, %v5754
    %v5756 = vrot.slane %v5751, %v5755
    %v5758 = vadd.f32 %v5735, %v5756
    %v5759 = vadd.f32 %v5736, %v5756
    %v5760 = vadd.f32 %v5737, %v5756
    %v5761 = vadd.f32 %v5738, %v5756
    %v5762 = vadd.f32 %v5739, %v5756
    %v5763 = vadd.f32 %v5740, %v5756
    %v5764 = vadd.f32 %v5741, %v5756
    %v5765 = vadd.f32 %v5742, %v5756
    %v5766 = vadd.f32 %v5743, %v5756
    %v5767 = vadd.f32 %v5744, %v5756
    %v5768 = vadd.f32 %v5745, %v5756
    %v5769 = vadd.f32 %v5746, %v5756
    %v5770 = vadd.f32 %v5747, %v5756
    %v5771 = vadd.f32 %v5748, %v5756
    %v5772 = vadd.f32 %v5749, %v5756
    %v5773 = vadd.f32 %v5750, %v5756
    %v5774 = vadd.f32 %v5758, %v5759
    %v5775 = vadd.f32 %v5774, %v5760
    %v5776 = vadd.f32 %v5775, %v5761
    %v5777 = vadd.f32 %v5776, %v5762
    %v5778 = vadd.f32 %v5777, %v5763
    %v5779 = vadd.f32 %v5778, %v5764
    %v5780 = vadd.f32 %v5779, %v5765
    %v5781 = vrot.slane %v5780, 4
    %v5782 = vadd.f32 %v5780, %v5781
    %v5783 = vrot.slane %v5782, 2
    %v5784 = vadd.f32 %v5782, %v5783
    %v5785 = vrot.slane %v5784, 1
    %v5786 = vadd.f32 %v5784, %v5785
    %v5787 = vadd.f32 %v5766, %v5767
    %v5788 = vadd.f32 %v5787, %v5768
    %v5789 = vadd.f32 %v5788, %v5769
    %v5790 = vadd.f32 %v5789, %v5770
    %v5791 = vadd.f32 %v5790, %v5771
    %v5792 = vadd.f32 %v5791, %v5772
    %v5793 = vadd.f32 %v5792, %v5773
    %v5794 = vrot.slane %v5793, 4
    %v5795 = vadd.f32 %v5793, %v5794
    %v5796 = vrot.slane %v5795, 2
    %v5797 = vadd.f32 %v5795, %v5796
    %v5798 = vrot.slane %v5797, 1
    %v5799 = vadd.f32 %v5797, %v5798
    %vm5802 = vcmask 1041409
    %v5803 = vsel %vm5802, %v5799, %v5786
    %5805 = vrot.lane.b32.xlu0 %v5803, 64
    %v5806 = vpop.permute.xlu0 %5805
    %v5808 = vrot.slane %v5806, 1
    %v5811 = vadd.f32 %v5786, %v5806
    %v5812 = vadd.f32 %v5799, %v5808
    %v5815 = vrot.slane %v5812, 7
    %v5816 = vsel %vm5802, %v5815, %v5811
    %5818 = vrot.lane.b32.xlu0 %v5816, 32
    %v5819 = vpop.permute.xlu0 %5818
    %v5821 = vrot.slane %v5819, 1
    %v5824 = vadd.f32 %v5811, %v5819
    %v5825 = vadd.f32 %v5812, %v5821
    %v5828 = vrot.slane %v5825, 7
    %v5829 = vsel %vm5802, %v5828, %v5824
    %5831 = vrot.lane.b32.xlu0 %v5829, 16
    %v5832 = vpop.permute.xlu0 %5831
    %v5834 = vrot.slane %v5832, 1
    %v5837 = vadd.f32 %v5824, %v5832
    %v5838 = vadd.f32 %v5825, %v5834
    %v5839 = vld [vmem:[%s7] sm:$0x1]
    %v5841 = vlaneseq
    %v5842 = vshrl.u32 %v5841, 7
    %v5843 = vsub.s32 0, %v5842
    %v5844 = vrot.slane %v5839, %v5843
    %v5846 = vmul.f32 %v5837, %v5844
    %v5847 = vmul.f32 %v5838, %v5844
    %v5850 = vrot.slane %v5847, 7
    %v5851 = vsel %vm5802, %v5850, %v5846
    %vm5853 = vcmask 1041408
    %v5854 = vsel %vm5853, %v5851, 0.0
    %5855 = vadd.xlane.f32.xlu0 %v5854
    %v5856 = vpop.xlane.xlu0 %5855
    %v5857 = vmax.f32 %v5856, 0.0
    %v5858 = vld [vmem:[%s8] sm:$0x1]
    %v5860 = vlaneseq
    %v5861 = vshrl.u32 %v5860, 7
    %v5862 = vsub.s32 0, %v5861
    %v5863 = vrot.slane %v5858, %v5862
    %v5865 = vmul.f32 %v5857, %v5863
    %v5866 = vadd.f32 %v5865, 0.0
    %v5867 = vxor.u32 %v5866, 2147483648
    %v5868 = vmul.f32 %v5867, 1.442695
    %v5869 = vpow.pop %v5868
    %v5870 = vadd.f32 %v5869, 1.0
    %v5871 = vrcp.pop %v5870
    %v5872 = vmul.f32 1.0, %v5871
    %v5873 = vld [vmem:[#allocation3] sm:$0xff]
    %v5874 = vld [vmem:[#allocation3 + $0x8] sm:$0xff]
    %v5875 = vld [vmem:[#allocation3 + $0x10] sm:$0xff]
    %v5876 = vld [vmem:[#allocation3 + $0x18] sm:$0xff]
    %v5877 = vld [vmem:[#allocation3 + $0x20] sm:$0xff]
    %v5878 = vld [vmem:[#allocation3 + $0x28] sm:$0xff]
    %v5879 = vld [vmem:[#allocation3 + $0x30] sm:$0xff]
    %v5880 = vld [vmem:[#allocation3 + $0x38] sm:$0xff]
    %v5881 = vld [vmem:[#allocation3 + $0x40] sm:$0xff]
    %v5882 = vld [vmem:[#allocation3 + $0x48] sm:$0xff]
    %v5883 = vld [vmem:[#allocation3 + $0x50] sm:$0xff]
    %v5884 = vld [vmem:[#allocation3 + $0x58] sm:$0xff]
    %v5885 = vld [vmem:[#allocation3 + $0x60] sm:$0xff]
    %v5886 = vld [vmem:[#allocation3 + $0x68] sm:$0xff]
    %v5887 = vld [vmem:[#allocation3 + $0x70] sm:$0xff]
    %v5888 = vld [vmem:[#allocation3 + $0x78] sm:$0xff]
    %v5891 = vunpack.c.l.s4 1966171168
    %v5892 = vunpack.c.0.s8 %v5891
    %v5893 = vlaneseq
    %v5894 = vshrl.u32 %v5893, 7
    %v5895 = vsub.s32 %v5892, %v5894
    %v5896 = vrot.slane %v5872, %v5895
    %v5897 = vcombine.high %v5896, %v5896
    %v5899 = vunpack.c.l.s4 1966171168
    %v5900 = vunpack.c.0.s8 %v5899
    %v5901 = vlaneseq
    %v5902 = vshrl.u32 %v5901, 7
    %v5903 = vsub.s32 %v5900, %v5902
    %v5904 = vrot.slane %v5896, %v5903
    %v5906 = vunpack.c.l.s4 1966171168
    %v5907 = vunpack.c.0.s8 %v5906
    %v5908 = vlaneseq
    %v5909 = vshrl.u32 %v5908, 7
    %v5910 = vsub.s32 %v5907, %v5909
    %v5911 = vrot.slane %v5897, %v5910
    %v5912 = vlaneseq
    %v5913 = vshrl.u32 %v5912, 7
    %v5914 = vsub.s32 0, %v5913
    %v5915 = vrot.slane %v5904, %v5914
    %v5916 = vlaneseq
    %v5917 = vshrl.u32 %v5916, 7
    %v5918 = vsub.s32 0, %v5917
    %v5919 = vrot.slane %v5911, %v5918
    %v5922 = vmul.f32 %v5758, %v5915
    %v5923 = vmul.f32 %v5759, %v5915
    %v5924 = vmul.f32 %v5760, %v5915
    %v5925 = vmul.f32 %v5761, %v5915
    %v5926 = vmul.f32 %v5762, %v5915
    %v5927 = vmul.f32 %v5763, %v5915
    %v5928 = vmul.f32 %v5764, %v5915
    %v5929 = vmul.f32 %v5765, %v5915
    %v5930 = vmul.f32 %v5766, %v5919
    %v5931 = vmul.f32 %v5767, %v5919
    %v5932 = vmul.f32 %v5768, %v5919
    %v5933 = vmul.f32 %v5769, %v5919
    %v5934 = vmul.f32 %v5770, %v5919
    %v5935 = vmul.f32 %v5771, %v5919
    %v5936 = vmul.f32 %v5772, %v5919
    %v5937 = vmul.f32 %v5773, %v5919
    %v5938 = vadd.f32 %v5922, %v5873
    %v5939 = vadd.f32 %v5923, %v5874
    %v5940 = vadd.f32 %v5924, %v5875
    %v5941 = vadd.f32 %v5925, %v5876
    %v5942 = vadd.f32 %v5926, %v5877
    %v5943 = vadd.f32 %v5927, %v5878
    %v5944 = vadd.f32 %v5928, %v5879
    %v5945 = vadd.f32 %v5929, %v5880
    %v5946 = vadd.f32 %v5930, %v5881
    %v5947 = vadd.f32 %v5931, %v5882
    %v5948 = vadd.f32 %v5932, %v5883
    %v5949 = vadd.f32 %v5933, %v5884
    %v5950 = vadd.f32 %v5934, %v5885
    %v5951 = vadd.f32 %v5935, %v5886
    %v5952 = vadd.f32 %v5936, %v5887
    %v5953 = vadd.f32 %v5937, %v5888
    %v5954 = vmax.f32 %v5938, 0.0
    %v5955 = vmax.f32 %v5939, 0.0
    %v5956 = vmax.f32 %v5940, 0.0
    %v5957 = vmax.f32 %v5941, 0.0
    %v5958 = vmax.f32 %v5942, 0.0
    %v5959 = vmax.f32 %v5943, 0.0
    %v5960 = vmax.f32 %v5944, 0.0
    %v5961 = vmax.f32 %v5945, 0.0
    %v5962 = vmax.f32 %v5946, 0.0
    %v5963 = vmax.f32 %v5947, 0.0
    %v5964 = vmax.f32 %v5948, 0.0
    %v5965 = vmax.f32 %v5949, 0.0
    %v5966 = vmax.f32 %v5950, 0.0
    %v5967 = vmax.f32 %v5951, 0.0
    %v5968 = vmax.f32 %v5952, 0.0
    %v5969 = vmax.f32 %v5953, 0.0
    %5970 = vst [vmem:[#allocation9] sm:$0xff] %v5954
    %5971 = vst [vmem:[#allocation9 + $0x8] sm:$0xff] %v5955
    %5972 = vst [vmem:[#allocation9 + $0x10] sm:$0xff] %v5956
    %5973 = vst [vmem:[#allocation9 + $0x18] sm:$0xff] %v5957
    %5974 = vst [vmem:[#allocation9 + $0x20] sm:$0xff] %v5958
    %5975 = vst [vmem:[#allocation9 + $0x28] sm:$0xff] %v5959
    %5976 = vst [vmem:[#allocation9 + $0x30] sm:$0xff] %v5960
    %5977 = vst [vmem:[#allocation9 + $0x38] sm:$0xff] %v5961
    %5978 = vst [vmem:[#allocation9 + $0x40] sm:$0xff] %v5962
    %5979 = vst [vmem:[#allocation9 + $0x48] sm:$0xff] %v5963
    %5980 = vst [vmem:[#allocation9 + $0x50] sm:$0xff] %v5964
    %5981 = vst [vmem:[#allocation9 + $0x58] sm:$0xff] %v5965
    %5982 = vst [vmem:[#allocation9 + $0x60] sm:$0xff] %v5966
    %5983 = vst [vmem:[#allocation9 + $0x68] sm:$0xff] %v5967
    %5984 = vst [vmem:[#allocation9 + $0x70] sm:$0xff] %v5968
    %5985 = vst [vmem:[#allocation9 + $0x78] sm:$0xff] %v5969
    // Predicated region
    $region50: #{tpu_custom_call.1} parent=1 // pred_check
      _
    $region51: #{tpu_custom_call.1} parent=1 // pred_check_branch
      %5987 = sbr.rel (0) target = $region53
    $region52: #{tpu_custom_call.1} parent=1 // pred_region
      %s5989 = ssub.s32 2048, 2048
      %5990 = vsyncadd [#allocation5], %s5989
      %s5991 = sshll.u32 [#allocation9], 4
      %s5992 = int_to_ptr.vmem [resolvable:$true] %s5991
      %5997 = dma.vmem_to_hbm [thread:$0]  %s5992, 2048, %s9, [#allocation5], 128, 128, 8
    $region53: #{tpu_custom_call.1} parent=1 // pred_fallthru
      _
    // Predicated region
    $region54: #{tpu_custom_call.1} parent=1 // pred_check
      _
    $region55: #{tpu_custom_call.1} parent=1 // pred_check_branch
      %5999 = sbr.rel (0) target = $region57
    $region56: #{tpu_custom_call.1} parent=1 // pred_region
      %6000 = dma.done [#allocation5], 2048
    $region57: #{tpu_custom_call.1} parent=1 // pred_fallthru
      _
    %6001 = vsyncpa [#allocation4], 1
    %6002 = vsyncpa [#allocation7], 1
    %6003 = vsyncpa [#allocation5], 1

</llo_original>
